<compile_context>
chip_gen: v7x
topology: tpu7x:2x2x1
jax: 0.10.0
libtpu: 0.0.40
codegen_flags: <defaults>
</compile_context>

<pallas_src>
import jax
import jax.numpy as jnp
import numpy as np
from jax.experimental import pallas as pl
from jax.experimental.pallas import tpu as pltpu

L = 1000       # feature dim produced by pre_trained_net (module spec)
LP = 1024      # L zero-padded to a multiple of 128 lanes
D = 128        # attention hidden dim
K = 1          # number of attention heads (hardcoded to 1 in the module)
NCLS = 16      # classifier output dim
NCLS_P = 128   # classifier output padded to one full lane width
NEG = -1e30    # bias value for padded logit columns (vanishes under softmax)


def attention_kernel(xf_ref, w0_ref, b0_ref, w12_ref, b12_ref,
                     w3_ref, b3_ref, wc_ref, bc_ref, y_ref):
    f32 = jnp.float32
    bf16 = jnp.bfloat16

    # ---- pre_trained_net: H = xf @ W0 + b0 ------------------------ (B, LP)
    # bf16 x bf16 operands, f32 accumulate: native MXU path, no weight copy.
    H = jnp.dot(xf_ref[...], w0_ref[...],
                preferred_element_type=f32) + b0_ref[...]

    # ---- gated attention: fused (LP, 2D) matmul for l1 and l2 -------------
    G = jnp.dot(H.astype(bf16), w12_ref[...],
                preferred_element_type=f32) + b12_ref[...]          # (B, 2D)
    A_V = jnp.tanh(G[:, :D])
    A_U = jax.nn.sigmoid(G[:, D:])
    gated = A_V * A_U                                               # (B, D)

    # l3: Linear(D -> K=1).  D == one lane width, so this is a single
    # cross-lane (XLU) reduce per row — kept as a reduce, NOT an N=1 matmul.
    scores = jnp.sum(gated * w3_ref[...], axis=1, keepdims=True) + b3_ref[...]

    # softmax over the bag dimension B  (== F.softmax(A.T, dim=1))
    s_max = jnp.max(scores, axis=0, keepdims=True)
    e = jnp.exp(scores - s_max)
    a_sm = e * pl.reciprocal(jnp.sum(e, axis=0, keepdims=True),
                             approx=True)                           # (B, 1)

    # M = A @ H : with K=1 this is a weighted sum over the bag       (1, LP)
    M = jnp.sum(a_sm * H, axis=0, keepdims=True)

    # ---- classifier: Linear(LP -> 128-padded) + softmax --------------------
    # padded bias columns hold -1e30 (f32!), so exp() of those lanes is 0.
    logits = jnp.dot(M.astype(bf16), wc_ref[...],
                     preferred_element_type=f32) + bc_ref[...]      # (1, 128)
    l_max = jnp.max(logits, axis=1, keepdims=True)
    el = jnp.exp(logits - l_max)
    y_ref[...] = el * pl.reciprocal(jnp.sum(el, axis=1, keepdims=True),
                                    approx=True)                    # (1, 128)


def attention_forward(x, params):
    B = x.shape[0]
    # glue: NCHW -> (B, C*H*W); bf16 so the backbone matmul is a native
    # bf16 MXU dot (the reference sees the same bf16-rounded values).
    xf = x.reshape(B, -1).astype(jnp.bfloat16)
    fin = xf.shape[1]
    args = (xf,
            params["w0"], params["b0"],
            params["w12"], params["b12"],
            params["w3"], params["b3"],
            params["wc"], params["bc"])

    bytes_accessed = sum(int(np.prod(a.shape)) * a.dtype.itemsize for a in args)
    bytes_accessed += K * NCLS_P * 4
    flops = (2 * B * fin * LP          # backbone
             + 2 * B * LP * 2 * D      # fused l1|l2
             + 2 * B * D               # l3 reduce
             + 2 * LP * NCLS_P)        # classifier
    transcendentals = 2 * B * D + B + NCLS_P

    y_pad = pl.pallas_call(
        attention_kernel,
        out_shape=jax.ShapeDtypeStruct((K, NCLS_P), jnp.float32),
        in_specs=[pl.BlockSpec(memory_space=pltpu.MemorySpace.VMEM)] * len(args),
        out_specs=pl.BlockSpec(memory_space=pltpu.MemorySpace.VMEM),
        compiler_params=pltpu.CompilerParams(
            # ~2.5 MiB resident (bf16 weights + activations); explicit limit
            # leaves ample headroom even on v5e's default scoped VMEM.
            vmem_limit_bytes=32 * 1024 * 1024),
        cost_estimate=pl.CostEstimate(flops=flops,
                                      transcendentals=transcendentals,
                                      bytes_accessed=bytes_accessed),
    )(*args)
    return y_pad[:, :NCLS]                            # lane-dense store, slice out


def init_params(key, fin):
    """Deterministic torch-Linear-style uniform init.

    Returns (kernel_params, ref_params): kernel-facing weights are (in, out),
    zero-padded L->LP, and cast to bf16; the reference gets the same
    bf16-rounded weights upcast to f32 so both paths see identical parameters.
    Biases stay f32 (the -1e30 classifier-bias padding must stay f32).
    """
    def torch_linear(k, fan_in, fan_out):
        kw, kb = jax.random.split(k)
        bound = 1.0 / np.sqrt(fan_in)
        w = jax.random.uniform(kw, (fan_out, fan_in), jnp.float32, -bound, bound)
        b = jax.random.uniform(kb, (fan_out,), jnp.float32, -bound, bound)
        return w, b

    k0, k1, k2, k3, kc = jax.random.split(key, 5)
    w0, b0 = torch_linear(k0, fin, L)        # pre_trained_net (synthetic Linear)
    w1, b1 = torch_linear(k1, L, D)          # l1
    w2, b2 = torch_linear(k2, L, D)          # l2
    w3, b3 = torch_linear(k3, D, K)          # l3
    wc, bc = torch_linear(kc, L * K, NCLS)   # classifier

    pad_L = LP - L
    pad_C = NCLS_P - NCLS

    w0_k = jnp.pad(w0.T, ((0, 0), (0, pad_L))).astype(jnp.bfloat16)   # (fin, LP)
    b0_k = jnp.pad(b0[None, :], ((0, 0), (0, pad_L)))                 # (1, LP)  f32
    w12 = jnp.concatenate([w1.T, w2.T], axis=1)                       # (L, 2D)
    w12_k = jnp.pad(w12, ((0, pad_L), (0, 0))).astype(jnp.bfloat16)   # (LP, 2D)
    b12_k = jnp.concatenate([b1, b2])[None, :]                        # (1, 2D)  f32
    w3_k = w3                                                         # (1, D)   f32
    b3_k = b3[None, :]                                                # (1, 1)   f32
    wc_k = jnp.pad(wc.T, ((0, pad_L), (0, pad_C))).astype(jnp.bfloat16)  # (LP, 128)
    bc_k = jnp.pad(bc[None, :], ((0, 0), (0, pad_C)),
                   constant_values=NEG)                               # (1, 128) f32

    kernel_params = dict(w0=w0_k, b0=b0_k, w12=w12_k, b12=b12_k,
                         w3=w3_k, b3=b3_k, wc=wc_k, bc=bc_k)
    ref_params = dict(
        w0=w0_k[:, :L].astype(jnp.float32), b0=b0,
        w1=w12_k[:L, :D].astype(jnp.float32), b1=b1,
        w2=w12_k[:L, D:].astype(jnp.float32), b2=b2,
        w3=w3, b3=b3,
        wc=wc_k[:L, :NCLS].astype(jnp.float32), bc=bc)
    return kernel_params, ref_params


def reference_forward(x, p):
    """Pure-JAX f32 reference mirroring the PyTorch forward exactly
    (same bf16-rounded parameters / input as the kernel, math in f32)."""
    B = x.shape[0]
    xf = x.reshape(B, -1).astype(jnp.bfloat16).astype(jnp.float32)
    H = xf @ p["w0"] + p["b0"]
    A_V = jnp.tanh(H @ p["w1"] + p["b1"])
    A_U = jax.nn.sigmoid(H @ p["w2"] + p["b2"])
    A = (A_V * A_U) @ p["w3"].T + p["b3"]        # (B, K)
    A = A.T                                      # (K, B)
    A = jax.nn.softmax(A, axis=1)
    M = A @ H                                    # (K, L)
    logits = M @ p["wc"] + p["bc"]
    return jax.nn.softmax(logits, axis=1)        # (K, 16)


if __name__ == "__main__":
    key = jax.random.PRNGKey(0)
    kx, kp = jax.random.split(key)

    # small shapes consistent with the module: a bag of 8 NCHW images
    B, C, Hs, Ws = 8, 3, 16, 16
    x = jax.random.uniform(kx, (B, C, Hs, Ws), jnp.float32)
    kernel_params, ref_params = init_params(kp, C * Hs * Ws)

    y = attention_forward(x, kernel_params)
    y = jax.block_until_ready(y)

    y_ref = reference_forward(x, ref_params)
    # Tolerance covers bf16 MXU operands (H/M rounded to bf16 in-kernel) and
    # the approx EUP reciprocals; output is a 16-way softmax (~0.06/class).
    np.testing.assert_allclose(np.asarray(y), np.asarray(y_ref),
                               rtol=2e-3, atol=1e-3)
    assert y.shape == (K, NCLS)
    print("KERNEL_OK")
</pallas_src>

<mosaic_0001>
module attributes {stable_mosaic.version = 11 : i64} {
  func.func @attention_kernel(%arg0: memref<8x768xbf16, #tpu.memory_space<vmem>>, %arg1: memref<768x1024xbf16, #tpu.memory_space<vmem>>, %arg2: memref<1x1024xf32, #tpu.memory_space<vmem>>, %arg3: memref<1024x256xbf16, #tpu.memory_space<vmem>>, %arg4: memref<1x256xf32, #tpu.memory_space<vmem>>, %arg5: memref<1x128xf32, #tpu.memory_space<vmem>>, %arg6: memref<1x1xf32, #tpu.memory_space<vmem>>, %arg7: memref<1024x128xbf16, #tpu.memory_space<vmem>>, %arg8: memref<1x128xf32, #tpu.memory_space<vmem>>, %arg9: memref<1x128xf32, #tpu.memory_space<vmem>>) attributes {dimension_semantics = [], scalar_prefetch = 0 : i64, scratch_operands = 0 : i64, tpu.core_type = #tpu.core_type<tc>} {
    %c0 = arith.constant 0 : index
    %c0_0 = arith.constant 0 : index
    %0 = vector.load %arg0[%c0, %c0_0] : memref<8x768xbf16, #tpu.memory_space<vmem>>, vector<8x768xbf16>
    %c0_1 = arith.constant 0 : index
    %c0_2 = arith.constant 0 : index
    %1 = vector.load %arg1[%c0_1, %c0_2] : memref<768x1024xbf16, #tpu.memory_space<vmem>>, vector<768x1024xbf16>
    %cst = arith.constant dense<0.000000e+00> : vector<8x1024xf32>
    %2 = tpu.matmul %0, %1, %cst {dimension_numbers = #tpu.dot_dimension_numbers<[1], [0], [0], [1], [0, 0, 1, 1], [], []>} : vector<8x768xbf16>, vector<768x1024xbf16>, vector<8x1024xf32> -> vector<8x1024xf32>
    %c0_3 = arith.constant 0 : index
    %c0_4 = arith.constant 0 : index
    %3 = vector.load %arg2[%c0_3, %c0_4] : memref<1x1024xf32, #tpu.memory_space<vmem>>, vector<1x1024xf32>
    %4 = vector.broadcast %3 : vector<1x1024xf32> to vector<8x1024xf32>
    %5 = arith.addf %2, %4 : vector<8x1024xf32>
    %6 = arith.truncf %5 : vector<8x1024xf32> to vector<8x1024xbf16>
    %c0_5 = arith.constant 0 : index
    %c0_6 = arith.constant 0 : index
    %7 = vector.load %arg3[%c0_5, %c0_6] : memref<1024x256xbf16, #tpu.memory_space<vmem>>, vector<1024x256xbf16>
    %cst_7 = arith.constant dense<0.000000e+00> : vector<8x256xf32>
    %8 = tpu.matmul %6, %7, %cst_7 {dimension_numbers = #tpu.dot_dimension_numbers<[1], [0], [0], [1], [0, 0, 1, 1], [], []>} : vector<8x1024xbf16>, vector<1024x256xbf16>, vector<8x256xf32> -> vector<8x256xf32>
    %c0_8 = arith.constant 0 : index
    %c0_9 = arith.constant 0 : index
    %9 = vector.load %arg4[%c0_8, %c0_9] : memref<1x256xf32, #tpu.memory_space<vmem>>, vector<1x256xf32>
    %10 = vector.broadcast %9 : vector<1x256xf32> to vector<8x256xf32>
    %11 = arith.addf %8, %10 : vector<8x256xf32>
    %12 = vector.extract_strided_slice %11 {offsets = [0, 0], sizes = [8, 128], strides = [1, 1]} : vector<8x256xf32> to vector<8x128xf32>
    %13 = math.tanh %12 : vector<8x128xf32>
    %14 = vector.extract_strided_slice %11 {offsets = [0, 128], sizes = [8, 128], strides = [1, 1]} : vector<8x256xf32> to vector<8x128xf32>
    %15 = arith.negf %14 : vector<8x128xf32>
    %16 = math.exp %15 : vector<8x128xf32>
    %cst_10 = arith.constant 1.000000e+00 : f32
    %17 = vector.broadcast %cst_10 : f32 to vector<8x128xf32>
    %18 = arith.addf %17, %16 : vector<8x128xf32>
    %19 = arith.divf %17, %18 : vector<8x128xf32>
    %20 = arith.mulf %13, %19 : vector<8x128xf32>
    %c0_11 = arith.constant 0 : index
    %c0_12 = arith.constant 0 : index
    %21 = vector.load %arg5[%c0_11, %c0_12] : memref<1x128xf32, #tpu.memory_space<vmem>>, vector<1x128xf32>
    %22 = vector.broadcast %21 : vector<1x128xf32> to vector<8x128xf32>
    %23 = arith.mulf %20, %22 : vector<8x128xf32>
    %cst_13 = arith.constant dense<0.000000e+00> : vector<8xf32>
    %24 = vector.multi_reduction <add>, %23, %cst_13 [1] : vector<8x128xf32> to vector<8xf32>
    %25 = vector.shape_cast %24 : vector<8xf32> to vector<8x1xf32>
    %c0_14 = arith.constant 0 : index
    %c0_15 = arith.constant 0 : index
    %26 = vector.load %arg6[%c0_14, %c0_15] : memref<1x1xf32, #tpu.memory_space<vmem>>, vector<1x1xf32>
    %27 = vector.broadcast %26 : vector<1x1xf32> to vector<8x1xf32>
    %28 = arith.addf %25, %27 : vector<8x1xf32>
    %cst_16 = arith.constant dense<0xFF800000> : vector<1xf32>
    %29 = vector.multi_reduction <maximumf>, %28, %cst_16 [0] : vector<8x1xf32> to vector<1xf32>
    %30 = vector.shape_cast %29 : vector<1xf32> to vector<1x1xf32>
    %31 = vector.broadcast %30 : vector<1x1xf32> to vector<8x1xf32>
    %32 = arith.subf %28, %31 : vector<8x1xf32>
    %33 = math.exp %32 : vector<8x1xf32>
    %cst_17 = arith.constant dense<0.000000e+00> : vector<1xf32>
    %34 = vector.multi_reduction <add>, %33, %cst_17 [0] : vector<8x1xf32> to vector<1xf32>
    %35 = vector.shape_cast %34 : vector<1xf32> to vector<1x1xf32>
    %36 = tpu.reciprocal %35 {approx = true} : vector<1x1xf32> -> vector<1x1xf32>
    %37 = vector.broadcast %36 : vector<1x1xf32> to vector<8x1xf32>
    %38 = arith.mulf %33, %37 : vector<8x1xf32>
    %39 = vector.broadcast %38 : vector<8x1xf32> to vector<8x1024xf32>
    %40 = arith.mulf %39, %5 : vector<8x1024xf32>
    %cst_18 = arith.constant dense<0.000000e+00> : vector<1024xf32>
    %41 = vector.multi_reduction <add>, %40, %cst_18 [0] : vector<8x1024xf32> to vector<1024xf32>
    %42 = vector.shape_cast %41 : vector<1024xf32> to vector<1x1024xf32>
    %43 = arith.truncf %42 : vector<1x1024xf32> to vector<1x1024xbf16>
    %c0_19 = arith.constant 0 : index
    %c0_20 = arith.constant 0 : index
    %44 = vector.load %arg7[%c0_19, %c0_20] : memref<1024x128xbf16, #tpu.memory_space<vmem>>, vector<1024x128xbf16>
    %cst_21 = arith.constant dense<0.000000e+00> : vector<1x128xf32>
    %45 = tpu.matmul %43, %44, %cst_21 {dimension_numbers = #tpu.dot_dimension_numbers<[1], [0], [0], [1], [0, 0, 1, 1], [], []>} : vector<1x1024xbf16>, vector<1024x128xbf16>, vector<1x128xf32> -> vector<1x128xf32>
    %c0_22 = arith.constant 0 : index
    %c0_23 = arith.constant 0 : index
    %46 = vector.load %arg8[%c0_22, %c0_23] : memref<1x128xf32, #tpu.memory_space<vmem>>, vector<1x128xf32>
    %47 = arith.addf %45, %46 : vector<1x128xf32>
    %cst_24 = arith.constant dense<0xFF800000> : vector<1xf32>
    %48 = vector.multi_reduction <maximumf>, %47, %cst_24 [1] : vector<1x128xf32> to vector<1xf32>
    %49 = vector.shape_cast %48 : vector<1xf32> to vector<1x1xf32>
    %50 = vector.broadcast %49 : vector<1x1xf32> to vector<1x128xf32>
    %51 = arith.subf %47, %50 : vector<1x128xf32>
    %52 = math.exp %51 : vector<1x128xf32>
    %cst_25 = arith.constant dense<0.000000e+00> : vector<1xf32>
    %53 = vector.multi_reduction <add>, %52, %cst_25 [1] : vector<1x128xf32> to vector<1xf32>
    %54 = vector.shape_cast %53 : vector<1xf32> to vector<1x1xf32>
    %55 = tpu.reciprocal %54 {approx = true} : vector<1x1xf32> -> vector<1x1xf32>
    %56 = vector.broadcast %55 : vector<1x1xf32> to vector<1x128xf32>
    %57 = arith.mulf %52, %56 : vector<1x128xf32>
    %c0_26 = arith.constant 0 : index
    %c0_27 = arith.constant 0 : index
    %58 = vector.load %arg9[%c0_26, %c0_27] : memref<1x128xf32, #tpu.memory_space<vmem>>, vector<1x128xf32>
    tpu.vector_store %arg9[%c0_26, %c0_27], %57 {strides = array<i32>} : memref<1x128xf32, #tpu.memory_space<vmem>>, vector<1x128xf32>,
    return
  }
}

</mosaic_0001>

<llo_original>
// kernel: tpu_custom_call.1
$region0: #{tpu_custom_call.1}
  #allocation0 [shape = 'u32[]', space=smem, size = 0x4, offset = 0x4, fixed_abs, tag = 'smem constant byte address 0x4 - core index']
  #allocation1 [shape = 'u32[144,128]{1,0:T(1,128)}', space=vmem, size = 0x12000, scoped, tag = 'internal scratch']
  #allocation2 [shape = 'f32[1,1]{1,0:T(1,128)S(1)}', space=vmem, size = 0x200, scoped, tag = 'scoped memory for tpu_custom_call.1']
  %s0 = inlined_call_operand.hbm [shape: bf16[8,768], index: 0, kind: input, shape index: {}]
  %s1 = inlined_call_operand.hbm [shape: bf16[768,1024], index: 1, kind: input, shape index: {}]
  %s2 = inlined_call_operand.hbm [shape: f32[1,1024], index: 2, kind: input, shape index: {}]
  %s3 = inlined_call_operand.hbm [shape: bf16[1024,256], index: 3, kind: input, shape index: {}]
  %s4 = inlined_call_operand.hbm [shape: f32[1,256], index: 4, kind: input, shape index: {}]
  %s5 = inlined_call_operand.hbm [shape: f32[1,128], index: 5, kind: input, shape index: {}]
  %s6 = inlined_call_operand.<no memory space> [shape: f32[1,1], index: 6, kind: input, shape index: {}]
  %s7 = inlined_call_operand.hbm [shape: bf16[1024,128], index: 7, kind: input, shape index: {}]
  %s8 = inlined_call_operand.hbm [shape: f32[1,128], index: 8, kind: input, shape index: {}]
  %s9 = inlined_call_operand.hbm [shape: f32[1,128], index: 9, kind: output, shape index: {}]
  %s10 = sld [smem:[#allocation0]]
  $region78: #{tpu_custom_call.1} parent=0
    _
  %s12 = ssub.s32 1, %s10
  %s13 = scalar_select 0, %s12, %s10
  %v14 = vstv %s6
  %15 = vst [vmem:[#allocation2] sm:$0x1] %v14
  $region1: #{tpu_custom_call.1} parent=0
    #allocation3 [shape = 'u8[12288]{0}', space=vmem, size = 0x3000, scoped, tag = 'input window, operand 0, single buffered']
    #allocation4 [shape = 's32[1]{0}', space=sflag, size = 0x4, scoped, tag = 'scoped memory for tpu_custom_call.1']
    #allocation5 [shape = 's32[1]{0}', space=sflag, size = 0x4, scoped, tag = 'scoped memory for tpu_custom_call.1']
    #allocation6 [shape = 'u8[1572864]{0}', space=vmem, size = 0x180000, scoped, tag = 'input window, operand 1, single buffered']
    #allocation7 [shape = 's32[1]{0}', space=sflag, size = 0x4, scoped, tag = 'scoped memory for tpu_custom_call.1']
    #allocation8 [shape = 'u8[4096]{0}', space=vmem, size = 0x1000, scoped, tag = 'input window, operand 2, single buffered']
    #allocation9 [shape = 'u8[524288]{0}', space=vmem, size = 0x80000, scoped, tag = 'input window, operand 3, single buffered']
    #allocation10 [shape = 's32[1]{0}', space=sflag, size = 0x4, scoped, tag = 'scoped memory for tpu_custom_call.1']
    #allocation11 [shape = 'u8[1024]{0}', space=vmem, size = 0x400, scoped, tag = 'input window, operand 4, single buffered']
    #allocation12 [shape = 'u8[512]{0}', space=vmem, size = 0x400, scoped, tag = 'input window, operand 5, single buffered']
    #allocation13 [shape = 's32[1]{0}', space=sflag, size = 0x4, scoped, tag = 'scoped memory for tpu_custom_call.1']
    #allocation14 [shape = 'u8[262144]{0}', space=vmem, size = 0x40000, scoped, tag = 'input window, operand 7, single buffered']
    #allocation15 [shape = 'u8[512]{0}', space=vmem, size = 0x400, scoped, tag = 'input window, operand 8, single buffered']
    #allocation16 [shape = 's32[1]{0}', space=sflag, size = 0x4, scoped, tag = 'scoped memory for tpu_custom_call.1']
    #allocation17 [shape = 'u8[512]{0}', space=vmem, size = 0x400, scoped, tag = 'output window, operand 0, single buffered']
    %16 = vsyncpa [#allocation4], 0
    %17 = vsyncpa [#allocation7], 0
    %18 = vsyncpa [#allocation10], 0
    %19 = vsyncpa [#allocation13], 0
    %20 = vsyncpa [#allocation16], 0
    %21 = vsyncpa [#allocation5], 0
    // Predicated region
    $region2: #{tpu_custom_call.1} parent=1 // pred_check
      _
    $region3: #{tpu_custom_call.1} parent=1 // pred_check_branch
      %23 = sbr.rel (0) target = $region5
    $region4: #{tpu_custom_call.1} parent=1 // pred_region
      %s25 = ssub.s32 384, 384
      %26 = vsyncadd [#allocation4], %s25
      %s28 = sshll.u32 [#allocation3], 4
      %s29 = int_to_ptr.vmem [resolvable:$true] %s28
      %31 = dma.hbm_to_vmem [thread:$0]  %s0, 384, %s29, [#allocation4]
    $region5: #{tpu_custom_call.1} parent=1 // pred_fallthru
      _
    // Predicated region
    $region6: #{tpu_custom_call.1} parent=1 // pred_check
      _
    $region7: #{tpu_custom_call.1} parent=1 // pred_check_branch
      %33 = sbr.rel (0) target = $region9
    $region8: #{tpu_custom_call.1} parent=1 // pred_region
      %s35 = ssub.s32 49152, 49152
      %36 = vsyncadd [#allocation7], %s35
      %s37 = sshll.u32 [#allocation6], 4
      %s38 = int_to_ptr.vmem [resolvable:$true] %s37
      %43 = dma.hbm_to_vmem [thread:$0]  %s1, 49152, %s38, [#allocation7], 512, 512, 32
    $region9: #{tpu_custom_call.1} parent=1 // pred_fallthru
      _
    // Predicated region
    $region10: #{tpu_custom_call.1} parent=1 // pred_check
      _
    $region11: #{tpu_custom_call.1} parent=1 // pred_check_branch
      %45 = sbr.rel (0) target = $region13
    $region12: #{tpu_custom_call.1} parent=1 // pred_region
      %s47 = ssub.s32 128, 128
      %48 = vsyncadd [#allocation7], %s47
      %s50 = sshll.u32 [#allocation8], 4
      %s51 = int_to_ptr.vmem [resolvable:$true] %s50
      %53 = dma.hbm_to_vmem [thread:$0]  %s2, 128, %s51, [#allocation7]
    $region13: #{tpu_custom_call.1} parent=1 // pred_fallthru
      _
    // Predicated region
    $region14: #{tpu_custom_call.1} parent=1 // pred_check
      _
    $region15: #{tpu_custom_call.1} parent=1 // pred_check_branch
      %55 = sbr.rel (0) target = $region17
    $region16: #{tpu_custom_call.1} parent=1 // pred_region
      %s57 = ssub.s32 16384, 16384
      %58 = vsyncadd [#allocation10], %s57
      %s59 = sshll.u32 [#allocation9], 4
      %s60 = int_to_ptr.vmem [resolvable:$true] %s59
      %65 = dma.hbm_to_vmem [thread:$0]  %s3, 16384, %s60, [#allocation10], 128, 128, 8
    $region17: #{tpu_custom_call.1} parent=1 // pred_fallthru
      _
    // Predicated region
    $region18: #{tpu_custom_call.1} parent=1 // pred_check
      _
    $region19: #{tpu_custom_call.1} parent=1 // pred_check_branch
      %67 = sbr.rel (0) target = $region21
    $region20: #{tpu_custom_call.1} parent=1 // pred_region
      %s69 = ssub.s32 32, 32
      %70 = vsyncadd [#allocation10], %s69
      %s72 = sshll.u32 [#allocation11], 4
      %s73 = int_to_ptr.vmem [resolvable:$true] %s72
      %75 = dma.hbm_to_vmem [thread:$0]  %s4, 32, %s73, [#allocation10]
    $region21: #{tpu_custom_call.1} parent=1 // pred_fallthru
      _
    // Predicated region
    $region22: #{tpu_custom_call.1} parent=1 // pred_check
      _
    $region23: #{tpu_custom_call.1} parent=1 // pred_check_branch
      %77 = sbr.rel (0) target = $region25
    $region24: #{tpu_custom_call.1} parent=1 // pred_region
      %s79 = ssub.s32 16, 16
      %80 = vsyncadd [#allocation13], %s79
      %s82 = sshll.u32 [#allocation12], 4
      %s83 = int_to_ptr.vmem [resolvable:$true] %s82
      %85 = dma.hbm_to_vmem [thread:$0]  %s5, 16, %s83, [#allocation13]
    $region25: #{tpu_custom_call.1} parent=1 // pred_fallthru
      _
    // Predicated region
    $region26: #{tpu_custom_call.1} parent=1 // pred_check
      _
    $region27: #{tpu_custom_call.1} parent=1 // pred_check_branch
      %87 = sbr.rel (0) target = $region29
    $region28: #{tpu_custom_call.1} parent=1 // pred_region
      _
    $region29: #{tpu_custom_call.1} parent=1 // pred_fallthru
      _
    // Predicated region
    $region30: #{tpu_custom_call.1} parent=1 // pred_check
      _
    $region31: #{tpu_custom_call.1} parent=1 // pred_check_branch
      %89 = sbr.rel (0) target = $region33
    $region32: #{tpu_custom_call.1} parent=1 // pred_region
      %s91 = ssub.s32 8192, 8192
      %92 = vsyncadd [#allocation13], %s91
      %s93 = sshll.u32 [#allocation14], 4
      %s94 = int_to_ptr.vmem [resolvable:$true] %s93
      %99 = dma.hbm_to_vmem [thread:$0]  %s7, 8192, %s94, [#allocation13], 64, 64, 4
    $region33: #{tpu_custom_call.1} parent=1 // pred_fallthru
      _
    // Predicated region
    $region34: #{tpu_custom_call.1} parent=1 // pred_check
      _
    $region35: #{tpu_custom_call.1} parent=1 // pred_check_branch
      %101 = sbr.rel (0) target = $region37
    $region36: #{tpu_custom_call.1} parent=1 // pred_region
      %s103 = ssub.s32 16, 16
      %104 = vsyncadd [#allocation16], %s103
      %s106 = sshll.u32 [#allocation15], 4
      %s107 = int_to_ptr.vmem [resolvable:$true] %s106
      %109 = dma.hbm_to_vmem [thread:$0]  %s8, 16, %s107, [#allocation16]
    $region37: #{tpu_custom_call.1} parent=1 // pred_fallthru
      _
    // Predicated region
    $region38: #{tpu_custom_call.1} parent=1 // pred_check
      _
    $region39: #{tpu_custom_call.1} parent=1 // pred_check_branch
      %111 = sbr.rel (0) target = $region41
    $region40: #{tpu_custom_call.1} parent=1 // pred_region
      %112 = dma.done [#allocation4], 384
    $region41: #{tpu_custom_call.1} parent=1 // pred_fallthru
      _
    // Predicated region
    $region42: #{tpu_custom_call.1} parent=1 // pred_check
      _
    $region43: #{tpu_custom_call.1} parent=1 // pred_check_branch
      %114 = sbr.rel (0) target = $region45
    $region44: #{tpu_custom_call.1} parent=1 // pred_region
      %115 = dma.done [#allocation7], 49152
    $region45: #{tpu_custom_call.1} parent=1 // pred_fallthru
      _
    // Predicated region
    $region46: #{tpu_custom_call.1} parent=1 // pred_check
      _
    $region47: #{tpu_custom_call.1} parent=1 // pred_check_branch
      %117 = sbr.rel (0) target = $region49
    $region48: #{tpu_custom_call.1} parent=1 // pred_region
      %118 = dma.done [#allocation7], 128
    $region49: #{tpu_custom_call.1} parent=1 // pred_fallthru
      _
    // Predicated region
    $region50: #{tpu_custom_call.1} parent=1 // pred_check
      _
    $region51: #{tpu_custom_call.1} parent=1 // pred_check_branch
      %120 = sbr.rel (0) target = $region53
    $region52: #{tpu_custom_call.1} parent=1 // pred_region
      %121 = dma.done [#allocation10], 16384
    $region53: #{tpu_custom_call.1} parent=1 // pred_fallthru
      _
    // Predicated region
    $region54: #{tpu_custom_call.1} parent=1 // pred_check
      _
    $region55: #{tpu_custom_call.1} parent=1 // pred_check_branch
      %123 = sbr.rel (0) target = $region57
    $region56: #{tpu_custom_call.1} parent=1 // pred_region
      %124 = dma.done [#allocation10], 32
    $region57: #{tpu_custom_call.1} parent=1 // pred_fallthru
      _
    // Predicated region
    $region58: #{tpu_custom_call.1} parent=1 // pred_check
      _
    $region59: #{tpu_custom_call.1} parent=1 // pred_check_branch
      %126 = sbr.rel (0) target = $region61
    $region60: #{tpu_custom_call.1} parent=1 // pred_region
      %127 = dma.done [#allocation13], 16
    $region61: #{tpu_custom_call.1} parent=1 // pred_fallthru
      _
    // Predicated region
    $region62: #{tpu_custom_call.1} parent=1 // pred_check
      _
    $region63: #{tpu_custom_call.1} parent=1 // pred_check_branch
      %129 = sbr.rel (0) target = $region65
    $region64: #{tpu_custom_call.1} parent=1 // pred_region
      %130 = dma.done [#allocation13], 8192
    $region65: #{tpu_custom_call.1} parent=1 // pred_fallthru
      _
    // Predicated region
    $region66: #{tpu_custom_call.1} parent=1 // pred_check
      _
    $region67: #{tpu_custom_call.1} parent=1 // pred_check_branch
      %132 = sbr.rel (0) target = $region69
    $region68: #{tpu_custom_call.1} parent=1 // pred_region
      %133 = dma.done [#allocation16], 16
    $region69: #{tpu_custom_call.1} parent=1 // pred_fallthru
      _
    %v135 = vld [vmem:[#allocation3] sm:$0xff]
    %v136 = vld [vmem:[#allocation3 + $0x8] sm:$0xff]
    %v137 = vld [vmem:[#allocation3 + $0x10] sm:$0xff]
    %v138 = vld [vmem:[#allocation6] sm:$0xff]
    %v139 = vld [vmem:[#allocation6 + $0x8] sm:$0xff]
    %v140 = vld [vmem:[#allocation6 + $0x10] sm:$0xff]
    %v141 = vld [vmem:[#allocation6 + $0x18] sm:$0xff]
    %v142 = vld [vmem:[#allocation6 + $0x20] sm:$0xff]
    %v143 = vld [vmem:[#allocation6 + $0x28] sm:$0xff]
    %v144 = vld [vmem:[#allocation6 + $0x30] sm:$0xff]
    %v145 = vld [vmem:[#allocation6 + $0x38] sm:$0xff]
    %v146 = vld [vmem:[#allocation6 + $0x40] sm:$0xff]
    %v147 = vld [vmem:[#allocation6 + $0x48] sm:$0xff]
    %v148 = vld [vmem:[#allocation6 + $0x50] sm:$0xff]
    %v149 = vld [vmem:[#allocation6 + $0x58] sm:$0xff]
    %v150 = vld [vmem:[#allocation6 + $0x60] sm:$0xff]
    %v151 = vld [vmem:[#allocation6 + $0x68] sm:$0xff]
    %v152 = vld [vmem:[#allocation6 + $0x70] sm:$0xff]
    %v153 = vld [vmem:[#allocation6 + $0x78] sm:$0xff]
    %v154 = vld [vmem:[#allocation6 + $0x80] sm:$0xff]
    %v155 = vld [vmem:[#allocation6 + $0x88] sm:$0xff]
    %v156 = vld [vmem:[#allocation6 + $0x90] sm:$0xff]
    %v157 = vld [vmem:[#allocation6 + $0x98] sm:$0xff]
    %v158 = vld [vmem:[#allocation6 + $0xa0] sm:$0xff]
    %v159 = vld [vmem:[#allocation6 + $0xa8] sm:$0xff]
    %v160 = vld [vmem:[#allocation6 + $0xb0] sm:$0xff]
    %v161 = vld [vmem:[#allocation6 + $0xb8] sm:$0xff]
    %v162 = vld [vmem:[#allocation6 + $0xc0] sm:$0xff]
    %v163 = vld [vmem:[#allocation6 + $0xc8] sm:$0xff]
    %v164 = vld [vmem:[#allocation6 + $0xd0] sm:$0xff]
    %v165 = vld [vmem:[#allocation6 + $0xd8] sm:$0xff]
    %v166 = vld [vmem:[#allocation6 + $0xe0] sm:$0xff]
    %v167 = vld [vmem:[#allocation6 + $0xe8] sm:$0xff]
    %v168 = vld [vmem:[#allocation6 + $0xf0] sm:$0xff]
    %v169 = vld [vmem:[#allocation6 + $0xf8] sm:$0xff]
    %v170 = vld [vmem:[#allocation6 + $0x100] sm:$0xff]
    %v171 = vld [vmem:[#allocation6 + $0x108] sm:$0xff]
    %v172 = vld [vmem:[#allocation6 + $0x110] sm:$0xff]
    %v173 = vld [vmem:[#allocation6 + $0x118] sm:$0xff]
    %v174 = vld [vmem:[#allocation6 + $0x120] sm:$0xff]
    %v175 = vld [vmem:[#allocation6 + $0x128] sm:$0xff]
    %v176 = vld [vmem:[#allocation6 + $0x130] sm:$0xff]
    %v177 = vld [vmem:[#allocation6 + $0x138] sm:$0xff]
    %v178 = vld [vmem:[#allocation6 + $0x140] sm:$0xff]
    %v179 = vld [vmem:[#allocation6 + $0x148] sm:$0xff]
    %v180 = vld [vmem:[#allocation6 + $0x150] sm:$0xff]
    %v181 = vld [vmem:[#allocation6 + $0x158] sm:$0xff]
    %v182 = vld [vmem:[#allocation6 + $0x160] sm:$0xff]
    %v183 = vld [vmem:[#allocation6 + $0x168] sm:$0xff]
    %v184 = vld [vmem:[#allocation6 + $0x170] sm:$0xff]
    %v185 = vld [vmem:[#allocation6 + $0x178] sm:$0xff]
    %v186 = vld [vmem:[#allocation6 + $0x180] sm:$0xff]
    %v187 = vld [vmem:[#allocation6 + $0x188] sm:$0xff]
    %v188 = vld [vmem:[#allocation6 + $0x190] sm:$0xff]
    %v189 = vld [vmem:[#allocation6 + $0x198] sm:$0xff]
    %v190 = vld [vmem:[#allocation6 + $0x1a0] sm:$0xff]
    %v191 = vld [vmem:[#allocation6 + $0x1a8] sm:$0xff]
    %v192 = vld [vmem:[#allocation6 + $0x1b0] sm:$0xff]
    %v193 = vld [vmem:[#allocation6 + $0x1b8] sm:$0xff]
    %v194 = vld [vmem:[#allocation6 + $0x1c0] sm:$0xff]
    %v195 = vld [vmem:[#allocation6 + $0x1c8] sm:$0xff]
    %v196 = vld [vmem:[#allocation6 + $0x1d0] sm:$0xff]
    %v197 = vld [vmem:[#allocation6 + $0x1d8] sm:$0xff]
    %v198 = vld [vmem:[#allocation6 + $0x1e0] sm:$0xff]
    %v199 = vld [vmem:[#allocation6 + $0x1e8] sm:$0xff]
    %v200 = vld [vmem:[#allocation6 + $0x1f0] sm:$0xff]
    %v201 = vld [vmem:[#allocation6 + $0x1f8] sm:$0xff]
    %v202 = vld [vmem:[#allocation6 + $0x200] sm:$0xff]
    %v203 = vld [vmem:[#allocation6 + $0x208] sm:$0xff]
    %v204 = vld [vmem:[#allocation6 + $0x210] sm:$0xff]
    %v205 = vld [vmem:[#allocation6 + $0x218] sm:$0xff]
    %v206 = vld [vmem:[#allocation6 + $0x220] sm:$0xff]
    %v207 = vld [vmem:[#allocation6 + $0x228] sm:$0xff]
    %v208 = vld [vmem:[#allocation6 + $0x230] sm:$0xff]
    %v209 = vld [vmem:[#allocation6 + $0x238] sm:$0xff]
    %v210 = vld [vmem:[#allocation6 + $0x240] sm:$0xff]
    %v211 = vld [vmem:[#allocation6 + $0x248] sm:$0xff]
    %v212 = vld [vmem:[#allocation6 + $0x250] sm:$0xff]
    %v213 = vld [vmem:[#allocation6 + $0x258] sm:$0xff]
    %v214 = vld [vmem:[#allocation6 + $0x260] sm:$0xff]
    %v215 = vld [vmem:[#allocation6 + $0x268] sm:$0xff]
    %v216 = vld [vmem:[#allocation6 + $0x270] sm:$0xff]
    %v217 = vld [vmem:[#allocation6 + $0x278] sm:$0xff]
    %v218 = vld [vmem:[#allocation6 + $0x280] sm:$0xff]
    %v219 = vld [vmem:[#allocation6 + $0x288] sm:$0xff]
    %v220 = vld [vmem:[#allocation6 + $0x290] sm:$0xff]
    %v221 = vld [vmem:[#allocation6 + $0x298] sm:$0xff]
    %v222 = vld [vmem:[#allocation6 + $0x2a0] sm:$0xff]
    %v223 = vld [vmem:[#allocation6 + $0x2a8] sm:$0xff]
    %v224 = vld [vmem:[#allocation6 + $0x2b0] sm:$0xff]
    %v225 = vld [vmem:[#allocation6 + $0x2b8] sm:$0xff]
    %v226 = vld [vmem:[#allocation6 + $0x2c0] sm:$0xff]
    %v227 = vld [vmem:[#allocation6 + $0x2c8] sm:$0xff]
    %v228 = vld [vmem:[#allocation6 + $0x2d0] sm:$0xff]
    %v229 = vld [vmem:[#allocation6 + $0x2d8] sm:$0xff]
    %v230 = vld [vmem:[#allocation6 + $0x2e0] sm:$0xff]
    %v231 = vld [vmem:[#allocation6 + $0x2e8] sm:$0xff]
    %v232 = vld [vmem:[#allocation6 + $0x2f0] sm:$0xff]
    %v233 = vld [vmem:[#allocation6 + $0x2f8] sm:$0xff]
    %v234 = vld [vmem:[#allocation6 + $0x300] sm:$0xff]
    %v235 = vld [vmem:[#allocation6 + $0x308] sm:$0xff]
    %v236 = vld [vmem:[#allocation6 + $0x310] sm:$0xff]
    %v237 = vld [vmem:[#allocation6 + $0x318] sm:$0xff]
    %v238 = vld [vmem:[#allocation6 + $0x320] sm:$0xff]
    %v239 = vld [vmem:[#allocation6 + $0x328] sm:$0xff]
    %v240 = vld [vmem:[#allocation6 + $0x330] sm:$0xff]
    %v241 = vld [vmem:[#allocation6 + $0x338] sm:$0xff]
    %v242 = vld [vmem:[#allocation6 + $0x340] sm:$0xff]
    %v243 = vld [vmem:[#allocation6 + $0x348] sm:$0xff]
    %v244 = vld [vmem:[#allocation6 + $0x350] sm:$0xff]
    %v245 = vld [vmem:[#allocation6 + $0x358] sm:$0xff]
    %v246 = vld [vmem:[#allocation6 + $0x360] sm:$0xff]
    %v247 = vld [vmem:[#allocation6 + $0x368] sm:$0xff]
    %v248 = vld [vmem:[#allocation6 + $0x370] sm:$0xff]
    %v249 = vld [vmem:[#allocation6 + $0x378] sm:$0xff]
    %v250 = vld [vmem:[#allocation6 + $0x380] sm:$0xff]
    %v251 = vld [vmem:[#allocation6 + $0x388] sm:$0xff]
    %v252 = vld [vmem:[#allocation6 + $0x390] sm:$0xff]
    %v253 = vld [vmem:[#allocation6 + $0x398] sm:$0xff]
    %v254 = vld [vmem:[#allocation6 + $0x3a0] sm:$0xff]
    %v255 = vld [vmem:[#allocation6 + $0x3a8] sm:$0xff]
    %v256 = vld [vmem:[#allocation6 + $0x3b0] sm:$0xff]
    %v257 = vld [vmem:[#allocation6 + $0x3b8] sm:$0xff]
    %v258 = vld [vmem:[#allocation6 + $0x3c0] sm:$0xff]
    %v259 = vld [vmem:[#allocation6 + $0x3c8] sm:$0xff]
    %v260 = vld [vmem:[#allocation6 + $0x3d0] sm:$0xff]
    %v261 = vld [vmem:[#allocation6 + $0x3d8] sm:$0xff]
    %v262 = vld [vmem:[#allocation6 + $0x3e0] sm:$0xff]
    %v263 = vld [vmem:[#allocation6 + $0x3e8] sm:$0xff]
    %v264 = vld [vmem:[#allocation6 + $0x3f0] sm:$0xff]
    %v265 = vld [vmem:[#allocation6 + $0x3f8] sm:$0xff]
    %v266 = vld [vmem:[#allocation6 + $0x400] sm:$0xff]
    %v267 = vld [vmem:[#allocation6 + $0x408] sm:$0xff]
    %v268 = vld [vmem:[#allocation6 + $0x410] sm:$0xff]
    %v269 = vld [vmem:[#allocation6 + $0x418] sm:$0xff]
    %v270 = vld [vmem:[#allocation6 + $0x420] sm:$0xff]
    %v271 = vld [vmem:[#allocation6 + $0x428] sm:$0xff]
    %v272 = vld [vmem:[#allocation6 + $0x430] sm:$0xff]
    %v273 = vld [vmem:[#allocation6 + $0x438] sm:$0xff]
    %v274 = vld [vmem:[#allocation6 + $0x440] sm:$0xff]
    %v275 = vld [vmem:[#allocation6 + $0x448] sm:$0xff]
    %v276 = vld [vmem:[#allocation6 + $0x450] sm:$0xff]
    %v277 = vld [vmem:[#allocation6 + $0x458] sm:$0xff]
    %v278 = vld [vmem:[#allocation6 + $0x460] sm:$0xff]
    %v279 = vld [vmem:[#allocation6 + $0x468] sm:$0xff]
    %v280 = vld [vmem:[#allocation6 + $0x470] sm:$0xff]
    %v281 = vld [vmem:[#allocation6 + $0x478] sm:$0xff]
    %v282 = vld [vmem:[#allocation6 + $0x480] sm:$0xff]
    %v283 = vld [vmem:[#allocation6 + $0x488] sm:$0xff]
    %v284 = vld [vmem:[#allocation6 + $0x490] sm:$0xff]
    %v285 = vld [vmem:[#allocation6 + $0x498] sm:$0xff]
    %v286 = vld [vmem:[#allocation6 + $0x4a0] sm:$0xff]
    %v287 = vld [vmem:[#allocation6 + $0x4a8] sm:$0xff]
    %v288 = vld [vmem:[#allocation6 + $0x4b0] sm:$0xff]
    %v289 = vld [vmem:[#allocation6 + $0x4b8] sm:$0xff]
    %v290 = vld [vmem:[#allocation6 + $0x4c0] sm:$0xff]
    %v291 = vld [vmem:[#allocation6 + $0x4c8] sm:$0xff]
    %v292 = vld [vmem:[#allocation6 + $0x4d0] sm:$0xff]
    %v293 = vld [vmem:[#allocation6 + $0x4d8] sm:$0xff]
    %v294 = vld [vmem:[#allocation6 + $0x4e0] sm:$0xff]
    %v295 = vld [vmem:[#allocation6 + $0x4e8] sm:$0xff]
    %v296 = vld [vmem:[#allocation6 + $0x4f0] sm:$0xff]
    %v297 = vld [vmem:[#allocation6 + $0x4f8] sm:$0xff]
    %v298 = vld [vmem:[#allocation6 + $0x500] sm:$0xff]
    %v299 = vld [vmem:[#allocation6 + $0x508] sm:$0xff]
    %v300 = vld [vmem:[#allocation6 + $0x510] sm:$0xff]
    %v301 = vld [vmem:[#allocation6 + $0x518] sm:$0xff]
    %v302 = vld [vmem:[#allocation6 + $0x520] sm:$0xff]
    %v303 = vld [vmem:[#allocation6 + $0x528] sm:$0xff]
    %v304 = vld [vmem:[#allocation6 + $0x530] sm:$0xff]
    %v305 = vld [vmem:[#allocation6 + $0x538] sm:$0xff]
    %v306 = vld [vmem:[#allocation6 + $0x540] sm:$0xff]
    %v307 = vld [vmem:[#allocation6 + $0x548] sm:$0xff]
    %v308 = vld [vmem:[#allocation6 + $0x550] sm:$0xff]
    %v309 = vld [vmem:[#allocation6 + $0x558] sm:$0xff]
    %v310 = vld [vmem:[#allocation6 + $0x560] sm:$0xff]
    %v311 = vld [vmem:[#allocation6 + $0x568] sm:$0xff]
    %v312 = vld [vmem:[#allocation6 + $0x570] sm:$0xff]
    %v313 = vld [vmem:[#allocation6 + $0x578] sm:$0xff]
    %v314 = vld [vmem:[#allocation6 + $0x580] sm:$0xff]
    %v315 = vld [vmem:[#allocation6 + $0x588] sm:$0xff]
    %v316 = vld [vmem:[#allocation6 + $0x590] sm:$0xff]
    %v317 = vld [vmem:[#allocation6 + $0x598] sm:$0xff]
    %v318 = vld [vmem:[#allocation6 + $0x5a0] sm:$0xff]
    %v319 = vld [vmem:[#allocation6 + $0x5a8] sm:$0xff]
    %v320 = vld [vmem:[#allocation6 + $0x5b0] sm:$0xff]
    %v321 = vld [vmem:[#allocation6 + $0x5b8] sm:$0xff]
    %v322 = vld [vmem:[#allocation6 + $0x5c0] sm:$0xff]
    %v323 = vld [vmem:[#allocation6 + $0x5c8] sm:$0xff]
    %v324 = vld [vmem:[#allocation6 + $0x5d0] sm:$0xff]
    %v325 = vld [vmem:[#allocation6 + $0x5d8] sm:$0xff]
    %v326 = vld [vmem:[#allocation6 + $0x5e0] sm:$0xff]
    %v327 = vld [vmem:[#allocation6 + $0x5e8] sm:$0xff]
    %v328 = vld [vmem:[#allocation6 + $0x5f0] sm:$0xff]
    %v329 = vld [vmem:[#allocation6 + $0x5f8] sm:$0xff]
    %v330 = vld [vmem:[#allocation6 + $0x600] sm:$0xff]
    %v331 = vld [vmem:[#allocation6 + $0x608] sm:$0xff]
    %v332 = vld [vmem:[#allocation6 + $0x610] sm:$0xff]
    %v333 = vld [vmem:[#allocation6 + $0x618] sm:$0xff]
    %v334 = vld [vmem:[#allocation6 + $0x620] sm:$0xff]
    %v335 = vld [vmem:[#allocation6 + $0x628] sm:$0xff]
    %v336 = vld [vmem:[#allocation6 + $0x630] sm:$0xff]
    %v337 = vld [vmem:[#allocation6 + $0x638] sm:$0xff]
    %v338 = vld [vmem:[#allocation6 + $0x640] sm:$0xff]
    %v339 = vld [vmem:[#allocation6 + $0x648] sm:$0xff]
    %v340 = vld [vmem:[#allocation6 + $0x650] sm:$0xff]
    %v341 = vld [vmem:[#allocation6 + $0x658] sm:$0xff]
    %v342 = vld [vmem:[#allocation6 + $0x660] sm:$0xff]
    %v343 = vld [vmem:[#allocation6 + $0x668] sm:$0xff]
    %v344 = vld [vmem:[#allocation6 + $0x670] sm:$0xff]
    %v345 = vld [vmem:[#allocation6 + $0x678] sm:$0xff]
    %v346 = vld [vmem:[#allocation6 + $0x680] sm:$0xff]
    %v347 = vld [vmem:[#allocation6 + $0x688] sm:$0xff]
    %v348 = vld [vmem:[#allocation6 + $0x690] sm:$0xff]
    %v349 = vld [vmem:[#allocation6 + $0x698] sm:$0xff]
    %v350 = vld [vmem:[#allocation6 + $0x6a0] sm:$0xff]
    %v351 = vld [vmem:[#allocation6 + $0x6a8] sm:$0xff]
    %v352 = vld [vmem:[#allocation6 + $0x6b0] sm:$0xff]
    %v353 = vld [vmem:[#allocation6 + $0x6b8] sm:$0xff]
    %v354 = vld [vmem:[#allocation6 + $0x6c0] sm:$0xff]
    %v355 = vld [vmem:[#allocation6 + $0x6c8] sm:$0xff]
    %v356 = vld [vmem:[#allocation6 + $0x6d0] sm:$0xff]
    %v357 = vld [vmem:[#allocation6 + $0x6d8] sm:$0xff]
    %v358 = vld [vmem:[#allocation6 + $0x6e0] sm:$0xff]
    %v359 = vld [vmem:[#allocation6 + $0x6e8] sm:$0xff]
    %v360 = vld [vmem:[#allocation6 + $0x6f0] sm:$0xff]
    %v361 = vld [vmem:[#allocation6 + $0x6f8] sm:$0xff]
    %v362 = vld [vmem:[#allocation6 + $0x700] sm:$0xff]
    %v363 = vld [vmem:[#allocation6 + $0x708] sm:$0xff]
    %v364 = vld [vmem:[#allocation6 + $0x710] sm:$0xff]
    %v365 = vld [vmem:[#allocation6 + $0x718] sm:$0xff]
    %v366 = vld [vmem:[#allocation6 + $0x720] sm:$0xff]
    %v367 = vld [vmem:[#allocation6 + $0x728] sm:$0xff]
    %v368 = vld [vmem:[#allocation6 + $0x730] sm:$0xff]
    %v369 = vld [vmem:[#allocation6 + $0x738] sm:$0xff]
    %v370 = vld [vmem:[#allocation6 + $0x740] sm:$0xff]
    %v371 = vld [vmem:[#allocation6 + $0x748] sm:$0xff]
    %v372 = vld [vmem:[#allocation6 + $0x750] sm:$0xff]
    %v373 = vld [vmem:[#allocation6 + $0x758] sm:$0xff]
    %v374 = vld [vmem:[#allocation6 + $0x760] sm:$0xff]
    %v375 = vld [vmem:[#allocation6 + $0x768] sm:$0xff]
    %v376 = vld [vmem:[#allocation6 + $0x770] sm:$0xff]
    %v377 = vld [vmem:[#allocation6 + $0x778] sm:$0xff]
    %v378 = vld [vmem:[#allocation6 + $0x780] sm:$0xff]
    %v379 = vld [vmem:[#allocation6 + $0x788] sm:$0xff]
    %v380 = vld [vmem:[#allocation6 + $0x790] sm:$0xff]
    %v381 = vld [vmem:[#allocation6 + $0x798] sm:$0xff]
    %v382 = vld [vmem:[#allocation6 + $0x7a0] sm:$0xff]
    %v383 = vld [vmem:[#allocation6 + $0x7a8] sm:$0xff]
    %v384 = vld [vmem:[#allocation6 + $0x7b0] sm:$0xff]
    %v385 = vld [vmem:[#allocation6 + $0x7b8] sm:$0xff]
    %v386 = vld [vmem:[#allocation6 + $0x7c0] sm:$0xff]
    %v387 = vld [vmem:[#allocation6 + $0x7c8] sm:$0xff]
    %v388 = vld [vmem:[#allocation6 + $0x7d0] sm:$0xff]
    %v389 = vld [vmem:[#allocation6 + $0x7d8] sm:$0xff]
    %v390 = vld [vmem:[#allocation6 + $0x7e0] sm:$0xff]
    %v391 = vld [vmem:[#allocation6 + $0x7e8] sm:$0xff]
    %v392 = vld [vmem:[#allocation6 + $0x7f0] sm:$0xff]
    %v393 = vld [vmem:[#allocation6 + $0x7f8] sm:$0xff]
    %v394 = vld [vmem:[#allocation6 + $0x800] sm:$0xff]
    %v395 = vld [vmem:[#allocation6 + $0x808] sm:$0xff]
    %v396 = vld [vmem:[#allocation6 + $0x810] sm:$0xff]
    %v397 = vld [vmem:[#allocation6 + $0x818] sm:$0xff]
    %v398 = vld [vmem:[#allocation6 + $0x820] sm:$0xff]
    %v399 = vld [vmem:[#allocation6 + $0x828] sm:$0xff]
    %v400 = vld [vmem:[#allocation6 + $0x830] sm:$0xff]
    %v401 = vld [vmem:[#allocation6 + $0x838] sm:$0xff]
    %v402 = vld [vmem:[#allocation6 + $0x840] sm:$0xff]
    %v403 = vld [vmem:[#allocation6 + $0x848] sm:$0xff]
    %v404 = vld [vmem:[#allocation6 + $0x850] sm:$0xff]
    %v405 = vld [vmem:[#allocation6 + $0x858] sm:$0xff]
    %v406 = vld [vmem:[#allocation6 + $0x860] sm:$0xff]
    %v407 = vld [vmem:[#allocation6 + $0x868] sm:$0xff]
    %v408 = vld [vmem:[#allocation6 + $0x870] sm:$0xff]
    %v409 = vld [vmem:[#allocation6 + $0x878] sm:$0xff]
    %v410 = vld [vmem:[#allocation6 + $0x880] sm:$0xff]
    %v411 = vld [vmem:[#allocation6 + $0x888] sm:$0xff]
    %v412 = vld [vmem:[#allocation6 + $0x890] sm:$0xff]
    %v413 = vld [vmem:[#allocation6 + $0x898] sm:$0xff]
    %v414 = vld [vmem:[#allocation6 + $0x8a0] sm:$0xff]
    %v415 = vld [vmem:[#allocation6 + $0x8a8] sm:$0xff]
    %v416 = vld [vmem:[#allocation6 + $0x8b0] sm:$0xff]
    %v417 = vld [vmem:[#allocation6 + $0x8b8] sm:$0xff]
    %v418 = vld [vmem:[#allocation6 + $0x8c0] sm:$0xff]
    %v419 = vld [vmem:[#allocation6 + $0x8c8] sm:$0xff]
    %v420 = vld [vmem:[#allocation6 + $0x8d0] sm:$0xff]
    %v421 = vld [vmem:[#allocation6 + $0x8d8] sm:$0xff]
    %v422 = vld [vmem:[#allocation6 + $0x8e0] sm:$0xff]
    %v423 = vld [vmem:[#allocation6 + $0x8e8] sm:$0xff]
    %v424 = vld [vmem:[#allocation6 + $0x8f0] sm:$0xff]
    %v425 = vld [vmem:[#allocation6 + $0x8f8] sm:$0xff]
    %v426 = vld [vmem:[#allocation6 + $0x900] sm:$0xff]
    %v427 = vld [vmem:[#allocation6 + $0x908] sm:$0xff]
    %v428 = vld [vmem:[#allocation6 + $0x910] sm:$0xff]
    %v429 = vld [vmem:[#allocation6 + $0x918] sm:$0xff]
    %v430 = vld [vmem:[#allocation6 + $0x920] sm:$0xff]
    %v431 = vld [vmem:[#allocation6 + $0x928] sm:$0xff]
    %v432 = vld [vmem:[#allocation6 + $0x930] sm:$0xff]
    %v433 = vld [vmem:[#allocation6 + $0x938] sm:$0xff]
    %v434 = vld [vmem:[#allocation6 + $0x940] sm:$0xff]
    %v435 = vld [vmem:[#allocation6 + $0x948] sm:$0xff]
    %v436 = vld [vmem:[#allocation6 + $0x950] sm:$0xff]
    %v437 = vld [vmem:[#allocation6 + $0x958] sm:$0xff]
    %v438 = vld [vmem:[#allocation6 + $0x960] sm:$0xff]
    %v439 = vld [vmem:[#allocation6 + $0x968] sm:$0xff]
    %v440 = vld [vmem:[#allocation6 + $0x970] sm:$0xff]
    %v441 = vld [vmem:[#allocation6 + $0x978] sm:$0xff]
    %v442 = vld [vmem:[#allocation6 + $0x980] sm:$0xff]
    %v443 = vld [vmem:[#allocation6 + $0x988] sm:$0xff]
    %v444 = vld [vmem:[#allocation6 + $0x990] sm:$0xff]
    %v445 = vld [vmem:[#allocation6 + $0x998] sm:$0xff]
    %v446 = vld [vmem:[#allocation6 + $0x9a0] sm:$0xff]
    %v447 = vld [vmem:[#allocation6 + $0x9a8] sm:$0xff]
    %v448 = vld [vmem:[#allocation6 + $0x9b0] sm:$0xff]
    %v449 = vld [vmem:[#allocation6 + $0x9b8] sm:$0xff]
    %v450 = vld [vmem:[#allocation6 + $0x9c0] sm:$0xff]
    %v451 = vld [vmem:[#allocation6 + $0x9c8] sm:$0xff]
    %v452 = vld [vmem:[#allocation6 + $0x9d0] sm:$0xff]
    %v453 = vld [vmem:[#allocation6 + $0x9d8] sm:$0xff]
    %v454 = vld [vmem:[#allocation6 + $0x9e0] sm:$0xff]
    %v455 = vld [vmem:[#allocation6 + $0x9e8] sm:$0xff]
    %v456 = vld [vmem:[#allocation6 + $0x9f0] sm:$0xff]
    %v457 = vld [vmem:[#allocation6 + $0x9f8] sm:$0xff]
    %v458 = vld [vmem:[#allocation6 + $0xa00] sm:$0xff]
    %v459 = vld [vmem:[#allocation6 + $0xa08] sm:$0xff]
    %v460 = vld [vmem:[#allocation6 + $0xa10] sm:$0xff]
    %v461 = vld [vmem:[#allocation6 + $0xa18] sm:$0xff]
    %v462 = vld [vmem:[#allocation6 + $0xa20] sm:$0xff]
    %v463 = vld [vmem:[#allocation6 + $0xa28] sm:$0xff]
    %v464 = vld [vmem:[#allocation6 + $0xa30] sm:$0xff]
    %v465 = vld [vmem:[#allocation6 + $0xa38] sm:$0xff]
    %v466 = vld [vmem:[#allocation6 + $0xa40] sm:$0xff]
    %v467 = vld [vmem:[#allocation6 + $0xa48] sm:$0xff]
    %v468 = vld [vmem:[#allocation6 + $0xa50] sm:$0xff]
    %v469 = vld [vmem:[#allocation6 + $0xa58] sm:$0xff]
    %v470 = vld [vmem:[#allocation6 + $0xa60] sm:$0xff]
    %v471 = vld [vmem:[#allocation6 + $0xa68] sm:$0xff]
    %v472 = vld [vmem:[#allocation6 + $0xa70] sm:$0xff]
    %v473 = vld [vmem:[#allocation6 + $0xa78] sm:$0xff]
    %v474 = vld [vmem:[#allocation6 + $0xa80] sm:$0xff]
    %v475 = vld [vmem:[#allocation6 + $0xa88] sm:$0xff]
    %v476 = vld [vmem:[#allocation6 + $0xa90] sm:$0xff]
    %v477 = vld [vmem:[#allocation6 + $0xa98] sm:$0xff]
    %v478 = vld [vmem:[#allocation6 + $0xaa0] sm:$0xff]
    %v479 = vld [vmem:[#allocation6 + $0xaa8] sm:$0xff]
    %v480 = vld [vmem:[#allocation6 + $0xab0] sm:$0xff]
    %v481 = vld [vmem:[#allocation6 + $0xab8] sm:$0xff]
    %v482 = vld [vmem:[#allocation6 + $0xac0] sm:$0xff]
    %v483 = vld [vmem:[#allocation6 + $0xac8] sm:$0xff]
    %v484 = vld [vmem:[#allocation6 + $0xad0] sm:$0xff]
    %v485 = vld [vmem:[#allocation6 + $0xad8] sm:$0xff]
    %v486 = vld [vmem:[#allocation6 + $0xae0] sm:$0xff]
    %v487 = vld [vmem:[#allocation6 + $0xae8] sm:$0xff]
    %v488 = vld [vmem:[#allocation6 + $0xaf0] sm:$0xff]
    %v489 = vld [vmem:[#allocation6 + $0xaf8] sm:$0xff]
    %v490 = vld [vmem:[#allocation6 + $0xb00] sm:$0xff]
    %v491 = vld [vmem:[#allocation6 + $0xb08] sm:$0xff]
    %v492 = vld [vmem:[#allocation6 + $0xb10] sm:$0xff]
    %v493 = vld [vmem:[#allocation6 + $0xb18] sm:$0xff]
    %v494 = vld [vmem:[#allocation6 + $0xb20] sm:$0xff]
    %v495 = vld [vmem:[#allocation6 + $0xb28] sm:$0xff]
    %v496 = vld [vmem:[#allocation6 + $0xb30] sm:$0xff]
    %v497 = vld [vmem:[#allocation6 + $0xb38] sm:$0xff]
    %v498 = vld [vmem:[#allocation6 + $0xb40] sm:$0xff]
    %v499 = vld [vmem:[#allocation6 + $0xb48] sm:$0xff]
    %v500 = vld [vmem:[#allocation6 + $0xb50] sm:$0xff]
    %v501 = vld [vmem:[#allocation6 + $0xb58] sm:$0xff]
    %v502 = vld [vmem:[#allocation6 + $0xb60] sm:$0xff]
    %v503 = vld [vmem:[#allocation6 + $0xb68] sm:$0xff]
    %v504 = vld [vmem:[#allocation6 + $0xb70] sm:$0xff]
    %v505 = vld [vmem:[#allocation6 + $0xb78] sm:$0xff]
    %v506 = vld [vmem:[#allocation6 + $0xb80] sm:$0xff]
    %v507 = vld [vmem:[#allocation6 + $0xb88] sm:$0xff]
    %v508 = vld [vmem:[#allocation6 + $0xb90] sm:$0xff]
    %v509 = vld [vmem:[#allocation6 + $0xb98] sm:$0xff]
    %v510 = vld [vmem:[#allocation6 + $0xba0] sm:$0xff]
    %v511 = vld [vmem:[#allocation6 + $0xba8] sm:$0xff]
    %v512 = vld [vmem:[#allocation6 + $0xbb0] sm:$0xff]
    %v513 = vld [vmem:[#allocation6 + $0xbb8] sm:$0xff]
    %v514 = vld [vmem:[#allocation6 + $0xbc0] sm:$0xff]
    %v515 = vld [vmem:[#allocation6 + $0xbc8] sm:$0xff]
    %v516 = vld [vmem:[#allocation6 + $0xbd0] sm:$0xff]
    %v517 = vld [vmem:[#allocation6 + $0xbd8] sm:$0xff]
    %v518 = vld [vmem:[#allocation6 + $0xbe0] sm:$0xff]
    %v519 = vld [vmem:[#allocation6 + $0xbe8] sm:$0xff]
    %v520 = vld [vmem:[#allocation6 + $0xbf0] sm:$0xff]
    %v521 = vld [vmem:[#allocation6 + $0xbf8] sm:$0xff]
    %v522 = vld [vmem:[#allocation8] sm:$0xff]
    %v524 = vlaneseq
    %v525 = vshrl.u32 %v524, 7
    %v526 = vsub.s32 0, %v525
    %v527 = vrot.slane %v522, %v526
    %v528 = vlaneseq
    %v529 = vshrl.u32 %v528, 7
    %v530 = vsub.s32 1, %v529
    %v531 = vrot.slane %v522, %v530
    %v532 = vlaneseq
    %v533 = vshrl.u32 %v532, 7
    %v534 = vsub.s32 2, %v533
    %v535 = vrot.slane %v522, %v534
    %v536 = vlaneseq
    %v537 = vshrl.u32 %v536, 7
    %v538 = vsub.s32 3, %v537
    %v539 = vrot.slane %v522, %v538
    %v540 = vlaneseq
    %v541 = vshrl.u32 %v540, 7
    %v542 = vsub.s32 4, %v541
    %v543 = vrot.slane %v522, %v542
    %v544 = vlaneseq
    %v545 = vshrl.u32 %v544, 7
    %v546 = vsub.s32 5, %v545
    %v547 = vrot.slane %v522, %v546
    %v548 = vlaneseq
    %v549 = vshrl.u32 %v548, 7
    %v550 = vsub.s32 6, %v549
    %v551 = vrot.slane %v522, %v550
    %v552 = vlaneseq
    %v553 = vshrl.u32 %v552, 7
    %v554 = vsub.s32 7, %v553
    %v555 = vrot.slane %v522, %v554
    %v567 = vunpack.c.l.b16 %v135
    %v568 = vunpack.c.h.b16 %v135
    %v569 = vunpack.c.l.b16 %v136
    %v570 = vunpack.c.h.b16 %v136
    %v571 = vunpack.c.l.b16 %v137
    %v572 = vunpack.c.h.b16 %v137
    %v573 = vpack.c.b16 %v567, %v567
    %v574 = vpack.c.b16 %v568, %v568
    %v575 = vpack.c.b16 %v569, %v569
    %v576 = vpack.c.b16 %v570, %v570
    %v577 = vpack.c.b16 %v571, %v571
    %v578 = vpack.c.b16 %v572, %v572
    %v969 = vunpack.c.l.b16 %v138
    %v970 = vunpack.c.h.b16 %v138
    %v971 = vunpack.c.l.b16 %v139
    %v972 = vunpack.c.h.b16 %v139
    %v973 = vunpack.c.l.b16 %v140
    %v974 = vunpack.c.h.b16 %v140
    %v975 = vunpack.c.l.b16 %v141
    %v976 = vunpack.c.h.b16 %v141
    %v977 = vunpack.c.l.b16 %v142
    %v978 = vunpack.c.h.b16 %v142
    %v979 = vunpack.c.l.b16 %v143
    %v980 = vunpack.c.h.b16 %v143
    %v981 = vunpack.c.l.b16 %v144
    %v982 = vunpack.c.h.b16 %v144
    %v983 = vunpack.c.l.b16 %v145
    %v984 = vunpack.c.h.b16 %v145
    %v985 = vunpack.c.l.b16 %v146
    %v986 = vunpack.c.h.b16 %v146
    %v987 = vunpack.c.l.b16 %v147
    %v988 = vunpack.c.h.b16 %v147
    %v989 = vunpack.c.l.b16 %v148
    %v990 = vunpack.c.h.b16 %v148
    %v991 = vunpack.c.l.b16 %v149
    %v992 = vunpack.c.h.b16 %v149
    %v993 = vunpack.c.l.b16 %v150
    %v994 = vunpack.c.h.b16 %v150
    %v995 = vunpack.c.l.b16 %v151
    %v996 = vunpack.c.h.b16 %v151
    %v997 = vunpack.c.l.b16 %v152
    %v998 = vunpack.c.h.b16 %v152
    %v999 = vunpack.c.l.b16 %v153
    %v1000 = vunpack.c.h.b16 %v153
    %v1001 = vunpack.c.l.b16 %v154
    %v1002 = vunpack.c.h.b16 %v154
    %v1003 = vunpack.c.l.b16 %v155
    %v1004 = vunpack.c.h.b16 %v155
    %v1005 = vunpack.c.l.b16 %v156
    %v1006 = vunpack.c.h.b16 %v156
    %v1007 = vunpack.c.l.b16 %v157
    %v1008 = vunpack.c.h.b16 %v157
    %v1009 = vunpack.c.l.b16 %v158
    %v1010 = vunpack.c.h.b16 %v158
    %v1011 = vunpack.c.l.b16 %v159
    %v1012 = vunpack.c.h.b16 %v159
    %v1013 = vunpack.c.l.b16 %v160
    %v1014 = vunpack.c.h.b16 %v160
    %v1015 = vunpack.c.l.b16 %v161
    %v1016 = vunpack.c.h.b16 %v161
    %v1017 = vunpack.c.l.b16 %v162
    %v1018 = vunpack.c.h.b16 %v162
    %v1019 = vunpack.c.l.b16 %v163
    %v1020 = vunpack.c.h.b16 %v163
    %v1021 = vunpack.c.l.b16 %v164
    %v1022 = vunpack.c.h.b16 %v164
    %v1023 = vunpack.c.l.b16 %v165
    %v1024 = vunpack.c.h.b16 %v165
    %v1025 = vunpack.c.l.b16 %v166
    %v1026 = vunpack.c.h.b16 %v166
    %v1027 = vunpack.c.l.b16 %v167
    %v1028 = vunpack.c.h.b16 %v167
    %v1029 = vunpack.c.l.b16 %v168
    %v1030 = vunpack.c.h.b16 %v168
    %v1031 = vunpack.c.l.b16 %v169
    %v1032 = vunpack.c.h.b16 %v169
    %v1033 = vunpack.c.l.b16 %v170
    %v1034 = vunpack.c.h.b16 %v170
    %v1035 = vunpack.c.l.b16 %v171
    %v1036 = vunpack.c.h.b16 %v171
    %v1037 = vunpack.c.l.b16 %v172
    %v1038 = vunpack.c.h.b16 %v172
    %v1039 = vunpack.c.l.b16 %v173
    %v1040 = vunpack.c.h.b16 %v173
    %v1041 = vunpack.c.l.b16 %v174
    %v1042 = vunpack.c.h.b16 %v174
    %v1043 = vunpack.c.l.b16 %v175
    %v1044 = vunpack.c.h.b16 %v175
    %v1045 = vunpack.c.l.b16 %v176
    %v1046 = vunpack.c.h.b16 %v176
    %v1047 = vunpack.c.l.b16 %v177
    %v1048 = vunpack.c.h.b16 %v177
    %v1049 = vunpack.c.l.b16 %v178
    %v1050 = vunpack.c.h.b16 %v178
    %v1051 = vunpack.c.l.b16 %v179
    %v1052 = vunpack.c.h.b16 %v179
    %v1053 = vunpack.c.l.b16 %v180
    %v1054 = vunpack.c.h.b16 %v180
    %v1055 = vunpack.c.l.b16 %v181
    %v1056 = vunpack.c.h.b16 %v181
    %v1057 = vunpack.c.l.b16 %v182
    %v1058 = vunpack.c.h.b16 %v182
    %v1059 = vunpack.c.l.b16 %v183
    %v1060 = vunpack.c.h.b16 %v183
    %v1061 = vunpack.c.l.b16 %v184
    %v1062 = vunpack.c.h.b16 %v184
    %v1063 = vunpack.c.l.b16 %v185
    %v1064 = vunpack.c.h.b16 %v185
    %v1065 = vunpack.c.l.b16 %v186
    %v1066 = vunpack.c.h.b16 %v186
    %v1067 = vunpack.c.l.b16 %v187
    %v1068 = vunpack.c.h.b16 %v187
    %v1069 = vunpack.c.l.b16 %v188
    %v1070 = vunpack.c.h.b16 %v188
    %v1071 = vunpack.c.l.b16 %v189
    %v1072 = vunpack.c.h.b16 %v189
    %v1073 = vunpack.c.l.b16 %v190
    %v1074 = vunpack.c.h.b16 %v190
    %v1075 = vunpack.c.l.b16 %v191
    %v1076 = vunpack.c.h.b16 %v191
    %v1077 = vunpack.c.l.b16 %v192
    %v1078 = vunpack.c.h.b16 %v192
    %v1079 = vunpack.c.l.b16 %v193
    %v1080 = vunpack.c.h.b16 %v193
    %v1081 = vunpack.c.l.b16 %v194
    %v1082 = vunpack.c.h.b16 %v194
    %v1083 = vunpack.c.l.b16 %v195
    %v1084 = vunpack.c.h.b16 %v195
    %v1085 = vunpack.c.l.b16 %v196
    %v1086 = vunpack.c.h.b16 %v196
    %v1087 = vunpack.c.l.b16 %v197
    %v1088 = vunpack.c.h.b16 %v197
    %v1089 = vunpack.c.l.b16 %v198
    %v1090 = vunpack.c.h.b16 %v198
    %v1091 = vunpack.c.l.b16 %v199
    %v1092 = vunpack.c.h.b16 %v199
    %v1093 = vunpack.c.l.b16 %v200
    %v1094 = vunpack.c.h.b16 %v200
    %v1095 = vunpack.c.l.b16 %v201
    %v1096 = vunpack.c.h.b16 %v201
    %v1097 = vunpack.c.l.b16 %v202
    %v1098 = vunpack.c.h.b16 %v202
    %v1099 = vunpack.c.l.b16 %v203
    %v1100 = vunpack.c.h.b16 %v203
    %v1101 = vunpack.c.l.b16 %v204
    %v1102 = vunpack.c.h.b16 %v204
    %v1103 = vunpack.c.l.b16 %v205
    %v1104 = vunpack.c.h.b16 %v205
    %v1105 = vunpack.c.l.b16 %v206
    %v1106 = vunpack.c.h.b16 %v206
    %v1107 = vunpack.c.l.b16 %v207
    %v1108 = vunpack.c.h.b16 %v207
    %v1109 = vunpack.c.l.b16 %v208
    %v1110 = vunpack.c.h.b16 %v208
    %v1111 = vunpack.c.l.b16 %v209
    %v1112 = vunpack.c.h.b16 %v209
    %v1113 = vunpack.c.l.b16 %v210
    %v1114 = vunpack.c.h.b16 %v210
    %v1115 = vunpack.c.l.b16 %v211
    %v1116 = vunpack.c.h.b16 %v211
    %v1117 = vunpack.c.l.b16 %v212
    %v1118 = vunpack.c.h.b16 %v212
    %v1119 = vunpack.c.l.b16 %v213
    %v1120 = vunpack.c.h.b16 %v213
    %v1121 = vunpack.c.l.b16 %v214
    %v1122 = vunpack.c.h.b16 %v214
    %v1123 = vunpack.c.l.b16 %v215
    %v1124 = vunpack.c.h.b16 %v215
    %v1125 = vunpack.c.l.b16 %v216
    %v1126 = vunpack.c.h.b16 %v216
    %v1127 = vunpack.c.l.b16 %v217
    %v1128 = vunpack.c.h.b16 %v217
    %v1129 = vunpack.c.l.b16 %v218
    %v1130 = vunpack.c.h.b16 %v218
    %v1131 = vunpack.c.l.b16 %v219
    %v1132 = vunpack.c.h.b16 %v219
    %v1133 = vunpack.c.l.b16 %v220
    %v1134 = vunpack.c.h.b16 %v220
    %v1135 = vunpack.c.l.b16 %v221
    %v1136 = vunpack.c.h.b16 %v221
    %v1137 = vunpack.c.l.b16 %v222
    %v1138 = vunpack.c.h.b16 %v222
    %v1139 = vunpack.c.l.b16 %v223
    %v1140 = vunpack.c.h.b16 %v223
    %v1141 = vunpack.c.l.b16 %v224
    %v1142 = vunpack.c.h.b16 %v224
    %v1143 = vunpack.c.l.b16 %v225
    %v1144 = vunpack.c.h.b16 %v225
    %v1145 = vunpack.c.l.b16 %v226
    %v1146 = vunpack.c.h.b16 %v226
    %v1147 = vunpack.c.l.b16 %v227
    %v1148 = vunpack.c.h.b16 %v227
    %v1149 = vunpack.c.l.b16 %v228
    %v1150 = vunpack.c.h.b16 %v228
    %v1151 = vunpack.c.l.b16 %v229
    %v1152 = vunpack.c.h.b16 %v229
    %v1153 = vunpack.c.l.b16 %v230
    %v1154 = vunpack.c.h.b16 %v230
    %v1155 = vunpack.c.l.b16 %v231
    %v1156 = vunpack.c.h.b16 %v231
    %v1157 = vunpack.c.l.b16 %v232
    %v1158 = vunpack.c.h.b16 %v232
    %v1159 = vunpack.c.l.b16 %v233
    %v1160 = vunpack.c.h.b16 %v233
    %v1161 = vunpack.c.l.b16 %v234
    %v1162 = vunpack.c.h.b16 %v234
    %v1163 = vunpack.c.l.b16 %v235
    %v1164 = vunpack.c.h.b16 %v235
    %v1165 = vunpack.c.l.b16 %v236
    %v1166 = vunpack.c.h.b16 %v236
    %v1167 = vunpack.c.l.b16 %v237
    %v1168 = vunpack.c.h.b16 %v237
    %v1169 = vunpack.c.l.b16 %v238
    %v1170 = vunpack.c.h.b16 %v238
    %v1171 = vunpack.c.l.b16 %v239
    %v1172 = vunpack.c.h.b16 %v239
    %v1173 = vunpack.c.l.b16 %v240
    %v1174 = vunpack.c.h.b16 %v240
    %v1175 = vunpack.c.l.b16 %v241
    %v1176 = vunpack.c.h.b16 %v241
    %v1177 = vunpack.c.l.b16 %v242
    %v1178 = vunpack.c.h.b16 %v242
    %v1179 = vunpack.c.l.b16 %v243
    %v1180 = vunpack.c.h.b16 %v243
    %v1181 = vunpack.c.l.b16 %v244
    %v1182 = vunpack.c.h.b16 %v244
    %v1183 = vunpack.c.l.b16 %v245
    %v1184 = vunpack.c.h.b16 %v245
    %v1185 = vunpack.c.l.b16 %v246
    %v1186 = vunpack.c.h.b16 %v246
    %v1187 = vunpack.c.l.b16 %v247
    %v1188 = vunpack.c.h.b16 %v247
    %v1189 = vunpack.c.l.b16 %v248
    %v1190 = vunpack.c.h.b16 %v248
    %v1191 = vunpack.c.l.b16 %v249
    %v1192 = vunpack.c.h.b16 %v249
    %v1193 = vunpack.c.l.b16 %v250
    %v1194 = vunpack.c.h.b16 %v250
    %v1195 = vunpack.c.l.b16 %v251
    %v1196 = vunpack.c.h.b16 %v251
    %v1197 = vunpack.c.l.b16 %v252
    %v1198 = vunpack.c.h.b16 %v252
    %v1199 = vunpack.c.l.b16 %v253
    %v1200 = vunpack.c.h.b16 %v253
    %v1201 = vunpack.c.l.b16 %v254
    %v1202 = vunpack.c.h.b16 %v254
    %v1203 = vunpack.c.l.b16 %v255
    %v1204 = vunpack.c.h.b16 %v255
    %v1205 = vunpack.c.l.b16 %v256
    %v1206 = vunpack.c.h.b16 %v256
    %v1207 = vunpack.c.l.b16 %v257
    %v1208 = vunpack.c.h.b16 %v257
    %v1209 = vunpack.c.l.b16 %v258
    %v1210 = vunpack.c.h.b16 %v258
    %v1211 = vunpack.c.l.b16 %v259
    %v1212 = vunpack.c.h.b16 %v259
    %v1213 = vunpack.c.l.b16 %v260
    %v1214 = vunpack.c.h.b16 %v260
    %v1215 = vunpack.c.l.b16 %v261
    %v1216 = vunpack.c.h.b16 %v261
    %v1217 = vunpack.c.l.b16 %v262
    %v1218 = vunpack.c.h.b16 %v262
    %v1219 = vunpack.c.l.b16 %v263
    %v1220 = vunpack.c.h.b16 %v263
    %v1221 = vunpack.c.l.b16 %v264
    %v1222 = vunpack.c.h.b16 %v264
    %v1223 = vunpack.c.l.b16 %v265
    %v1224 = vunpack.c.h.b16 %v265
    %v1225 = vunpack.c.l.b16 %v266
    %v1226 = vunpack.c.h.b16 %v266
    %v1227 = vunpack.c.l.b16 %v267
    %v1228 = vunpack.c.h.b16 %v267
    %v1229 = vunpack.c.l.b16 %v268
    %v1230 = vunpack.c.h.b16 %v268
    %v1231 = vunpack.c.l.b16 %v269
    %v1232 = vunpack.c.h.b16 %v269
    %v1233 = vunpack.c.l.b16 %v270
    %v1234 = vunpack.c.h.b16 %v270
    %v1235 = vunpack.c.l.b16 %v271
    %v1236 = vunpack.c.h.b16 %v271
    %v1237 = vunpack.c.l.b16 %v272
    %v1238 = vunpack.c.h.b16 %v272
    %v1239 = vunpack.c.l.b16 %v273
    %v1240 = vunpack.c.h.b16 %v273
    %v1241 = vunpack.c.l.b16 %v274
    %v1242 = vunpack.c.h.b16 %v274
    %v1243 = vunpack.c.l.b16 %v275
    %v1244 = vunpack.c.h.b16 %v275
    %v1245 = vunpack.c.l.b16 %v276
    %v1246 = vunpack.c.h.b16 %v276
    %v1247 = vunpack.c.l.b16 %v277
    %v1248 = vunpack.c.h.b16 %v277
    %v1249 = vunpack.c.l.b16 %v278
    %v1250 = vunpack.c.h.b16 %v278
    %v1251 = vunpack.c.l.b16 %v279
    %v1252 = vunpack.c.h.b16 %v279
    %v1253 = vunpack.c.l.b16 %v280
    %v1254 = vunpack.c.h.b16 %v280
    %v1255 = vunpack.c.l.b16 %v281
    %v1256 = vunpack.c.h.b16 %v281
    %v1257 = vunpack.c.l.b16 %v282
    %v1258 = vunpack.c.h.b16 %v282
    %v1259 = vunpack.c.l.b16 %v283
    %v1260 = vunpack.c.h.b16 %v283
    %v1261 = vunpack.c.l.b16 %v284
    %v1262 = vunpack.c.h.b16 %v284
    %v1263 = vunpack.c.l.b16 %v285
    %v1264 = vunpack.c.h.b16 %v285
    %v1265 = vunpack.c.l.b16 %v286
    %v1266 = vunpack.c.h.b16 %v286
    %v1267 = vunpack.c.l.b16 %v287
    %v1268 = vunpack.c.h.b16 %v287
    %v1269 = vunpack.c.l.b16 %v288
    %v1270 = vunpack.c.h.b16 %v288
    %v1271 = vunpack.c.l.b16 %v289
    %v1272 = vunpack.c.h.b16 %v289
    %v1273 = vunpack.c.l.b16 %v290
    %v1274 = vunpack.c.h.b16 %v290
    %v1275 = vunpack.c.l.b16 %v291
    %v1276 = vunpack.c.h.b16 %v291
    %v1277 = vunpack.c.l.b16 %v292
    %v1278 = vunpack.c.h.b16 %v292
    %v1279 = vunpack.c.l.b16 %v293
    %v1280 = vunpack.c.h.b16 %v293
    %v1281 = vunpack.c.l.b16 %v294
    %v1282 = vunpack.c.h.b16 %v294
    %v1283 = vunpack.c.l.b16 %v295
    %v1284 = vunpack.c.h.b16 %v295
    %v1285 = vunpack.c.l.b16 %v296
    %v1286 = vunpack.c.h.b16 %v296
    %v1287 = vunpack.c.l.b16 %v297
    %v1288 = vunpack.c.h.b16 %v297
    %v1289 = vunpack.c.l.b16 %v298
    %v1290 = vunpack.c.h.b16 %v298
    %v1291 = vunpack.c.l.b16 %v299
    %v1292 = vunpack.c.h.b16 %v299
    %v1293 = vunpack.c.l.b16 %v300
    %v1294 = vunpack.c.h.b16 %v300
    %v1295 = vunpack.c.l.b16 %v301
    %v1296 = vunpack.c.h.b16 %v301
    %v1297 = vunpack.c.l.b16 %v302
    %v1298 = vunpack.c.h.b16 %v302
    %v1299 = vunpack.c.l.b16 %v303
    %v1300 = vunpack.c.h.b16 %v303
    %v1301 = vunpack.c.l.b16 %v304
    %v1302 = vunpack.c.h.b16 %v304
    %v1303 = vunpack.c.l.b16 %v305
    %v1304 = vunpack.c.h.b16 %v305
    %v1305 = vunpack.c.l.b16 %v306
    %v1306 = vunpack.c.h.b16 %v306
    %v1307 = vunpack.c.l.b16 %v307
    %v1308 = vunpack.c.h.b16 %v307
    %v1309 = vunpack.c.l.b16 %v308
    %v1310 = vunpack.c.h.b16 %v308
    %v1311 = vunpack.c.l.b16 %v309
    %v1312 = vunpack.c.h.b16 %v309
    %v1313 = vunpack.c.l.b16 %v310
    %v1314 = vunpack.c.h.b16 %v310
    %v1315 = vunpack.c.l.b16 %v311
    %v1316 = vunpack.c.h.b16 %v311
    %v1317 = vunpack.c.l.b16 %v312
    %v1318 = vunpack.c.h.b16 %v312
    %v1319 = vunpack.c.l.b16 %v313
    %v1320 = vunpack.c.h.b16 %v313
    %v1321 = vunpack.c.l.b16 %v314
    %v1322 = vunpack.c.h.b16 %v314
    %v1323 = vunpack.c.l.b16 %v315
    %v1324 = vunpack.c.h.b16 %v315
    %v1325 = vunpack.c.l.b16 %v316
    %v1326 = vunpack.c.h.b16 %v316
    %v1327 = vunpack.c.l.b16 %v317
    %v1328 = vunpack.c.h.b16 %v317
    %v1329 = vunpack.c.l.b16 %v318
    %v1330 = vunpack.c.h.b16 %v318
    %v1331 = vunpack.c.l.b16 %v319
    %v1332 = vunpack.c.h.b16 %v319
    %v1333 = vunpack.c.l.b16 %v320
    %v1334 = vunpack.c.h.b16 %v320
    %v1335 = vunpack.c.l.b16 %v321
    %v1336 = vunpack.c.h.b16 %v321
    %v1337 = vunpack.c.l.b16 %v322
    %v1338 = vunpack.c.h.b16 %v322
    %v1339 = vunpack.c.l.b16 %v323
    %v1340 = vunpack.c.h.b16 %v323
    %v1341 = vunpack.c.l.b16 %v324
    %v1342 = vunpack.c.h.b16 %v324
    %v1343 = vunpack.c.l.b16 %v325
    %v1344 = vunpack.c.h.b16 %v325
    %v1345 = vunpack.c.l.b16 %v326
    %v1346 = vunpack.c.h.b16 %v326
    %v1347 = vunpack.c.l.b16 %v327
    %v1348 = vunpack.c.h.b16 %v327
    %v1349 = vunpack.c.l.b16 %v328
    %v1350 = vunpack.c.h.b16 %v328
    %v1351 = vunpack.c.l.b16 %v329
    %v1352 = vunpack.c.h.b16 %v329
    %v1353 = vunpack.c.l.b16 %v330
    %v1354 = vunpack.c.h.b16 %v330
    %v1355 = vunpack.c.l.b16 %v331
    %v1356 = vunpack.c.h.b16 %v331
    %v1357 = vunpack.c.l.b16 %v332
    %v1358 = vunpack.c.h.b16 %v332
    %v1359 = vunpack.c.l.b16 %v333
    %v1360 = vunpack.c.h.b16 %v333
    %v1361 = vunpack.c.l.b16 %v334
    %v1362 = vunpack.c.h.b16 %v334
    %v1363 = vunpack.c.l.b16 %v335
    %v1364 = vunpack.c.h.b16 %v335
    %v1365 = vunpack.c.l.b16 %v336
    %v1366 = vunpack.c.h.b16 %v336
    %v1367 = vunpack.c.l.b16 %v337
    %v1368 = vunpack.c.h.b16 %v337
    %v1369 = vunpack.c.l.b16 %v338
    %v1370 = vunpack.c.h.b16 %v338
    %v1371 = vunpack.c.l.b16 %v339
    %v1372 = vunpack.c.h.b16 %v339
    %v1373 = vunpack.c.l.b16 %v340
    %v1374 = vunpack.c.h.b16 %v340
    %v1375 = vunpack.c.l.b16 %v341
    %v1376 = vunpack.c.h.b16 %v341
    %v1377 = vunpack.c.l.b16 %v342
    %v1378 = vunpack.c.h.b16 %v342
    %v1379 = vunpack.c.l.b16 %v343
    %v1380 = vunpack.c.h.b16 %v343
    %v1381 = vunpack.c.l.b16 %v344
    %v1382 = vunpack.c.h.b16 %v344
    %v1383 = vunpack.c.l.b16 %v345
    %v1384 = vunpack.c.h.b16 %v345
    %v1385 = vunpack.c.l.b16 %v346
    %v1386 = vunpack.c.h.b16 %v346
    %v1387 = vunpack.c.l.b16 %v347
    %v1388 = vunpack.c.h.b16 %v347
    %v1389 = vunpack.c.l.b16 %v348
    %v1390 = vunpack.c.h.b16 %v348
    %v1391 = vunpack.c.l.b16 %v349
    %v1392 = vunpack.c.h.b16 %v349
    %v1393 = vunpack.c.l.b16 %v350
    %v1394 = vunpack.c.h.b16 %v350
    %v1395 = vunpack.c.l.b16 %v351
    %v1396 = vunpack.c.h.b16 %v351
    %v1397 = vunpack.c.l.b16 %v352
    %v1398 = vunpack.c.h.b16 %v352
    %v1399 = vunpack.c.l.b16 %v353
    %v1400 = vunpack.c.h.b16 %v353
    %v1401 = vunpack.c.l.b16 %v354
    %v1402 = vunpack.c.h.b16 %v354
    %v1403 = vunpack.c.l.b16 %v355
    %v1404 = vunpack.c.h.b16 %v355
    %v1405 = vunpack.c.l.b16 %v356
    %v1406 = vunpack.c.h.b16 %v356
    %v1407 = vunpack.c.l.b16 %v357
    %v1408 = vunpack.c.h.b16 %v357
    %v1409 = vunpack.c.l.b16 %v358
    %v1410 = vunpack.c.h.b16 %v358
    %v1411 = vunpack.c.l.b16 %v359
    %v1412 = vunpack.c.h.b16 %v359
    %v1413 = vunpack.c.l.b16 %v360
    %v1414 = vunpack.c.h.b16 %v360
    %v1415 = vunpack.c.l.b16 %v361
    %v1416 = vunpack.c.h.b16 %v361
    %v1417 = vunpack.c.l.b16 %v362
    %v1418 = vunpack.c.h.b16 %v362
    %v1419 = vunpack.c.l.b16 %v363
    %v1420 = vunpack.c.h.b16 %v363
    %v1421 = vunpack.c.l.b16 %v364
    %v1422 = vunpack.c.h.b16 %v364
    %v1423 = vunpack.c.l.b16 %v365
    %v1424 = vunpack.c.h.b16 %v365
    %v1425 = vunpack.c.l.b16 %v366
    %v1426 = vunpack.c.h.b16 %v366
    %v1427 = vunpack.c.l.b16 %v367
    %v1428 = vunpack.c.h.b16 %v367
    %v1429 = vunpack.c.l.b16 %v368
    %v1430 = vunpack.c.h.b16 %v368
    %v1431 = vunpack.c.l.b16 %v369
    %v1432 = vunpack.c.h.b16 %v369
    %v1433 = vunpack.c.l.b16 %v370
    %v1434 = vunpack.c.h.b16 %v370
    %v1435 = vunpack.c.l.b16 %v371
    %v1436 = vunpack.c.h.b16 %v371
    %v1437 = vunpack.c.l.b16 %v372
    %v1438 = vunpack.c.h.b16 %v372
    %v1439 = vunpack.c.l.b16 %v373
    %v1440 = vunpack.c.h.b16 %v373
    %v1441 = vunpack.c.l.b16 %v374
    %v1442 = vunpack.c.h.b16 %v374
    %v1443 = vunpack.c.l.b16 %v375
    %v1444 = vunpack.c.h.b16 %v375
    %v1445 = vunpack.c.l.b16 %v376
    %v1446 = vunpack.c.h.b16 %v376
    %v1447 = vunpack.c.l.b16 %v377
    %v1448 = vunpack.c.h.b16 %v377
    %v1449 = vunpack.c.l.b16 %v378
    %v1450 = vunpack.c.h.b16 %v378
    %v1451 = vunpack.c.l.b16 %v379
    %v1452 = vunpack.c.h.b16 %v379
    %v1453 = vunpack.c.l.b16 %v380
    %v1454 = vunpack.c.h.b16 %v380
    %v1455 = vunpack.c.l.b16 %v381
    %v1456 = vunpack.c.h.b16 %v381
    %v1457 = vunpack.c.l.b16 %v382
    %v1458 = vunpack.c.h.b16 %v382
    %v1459 = vunpack.c.l.b16 %v383
    %v1460 = vunpack.c.h.b16 %v383
    %v1461 = vunpack.c.l.b16 %v384
    %v1462 = vunpack.c.h.b16 %v384
    %v1463 = vunpack.c.l.b16 %v385
    %v1464 = vunpack.c.h.b16 %v385
    %v1465 = vunpack.c.l.b16 %v386
    %v1466 = vunpack.c.h.b16 %v386
    %v1467 = vunpack.c.l.b16 %v387
    %v1468 = vunpack.c.h.b16 %v387
    %v1469 = vunpack.c.l.b16 %v388
    %v1470 = vunpack.c.h.b16 %v388
    %v1471 = vunpack.c.l.b16 %v389
    %v1472 = vunpack.c.h.b16 %v389
    %v1473 = vunpack.c.l.b16 %v390
    %v1474 = vunpack.c.h.b16 %v390
    %v1475 = vunpack.c.l.b16 %v391
    %v1476 = vunpack.c.h.b16 %v391
    %v1477 = vunpack.c.l.b16 %v392
    %v1478 = vunpack.c.h.b16 %v392
    %v1479 = vunpack.c.l.b16 %v393
    %v1480 = vunpack.c.h.b16 %v393
    %v1481 = vunpack.c.l.b16 %v394
    %v1482 = vunpack.c.h.b16 %v394
    %v1483 = vunpack.c.l.b16 %v395
    %v1484 = vunpack.c.h.b16 %v395
    %v1485 = vunpack.c.l.b16 %v396
    %v1486 = vunpack.c.h.b16 %v396
    %v1487 = vunpack.c.l.b16 %v397
    %v1488 = vunpack.c.h.b16 %v397
    %v1489 = vunpack.c.l.b16 %v398
    %v1490 = vunpack.c.h.b16 %v398
    %v1491 = vunpack.c.l.b16 %v399
    %v1492 = vunpack.c.h.b16 %v399
    %v1493 = vunpack.c.l.b16 %v400
    %v1494 = vunpack.c.h.b16 %v400
    %v1495 = vunpack.c.l.b16 %v401
    %v1496 = vunpack.c.h.b16 %v401
    %v1497 = vunpack.c.l.b16 %v402
    %v1498 = vunpack.c.h.b16 %v402
    %v1499 = vunpack.c.l.b16 %v403
    %v1500 = vunpack.c.h.b16 %v403
    %v1501 = vunpack.c.l.b16 %v404
    %v1502 = vunpack.c.h.b16 %v404
    %v1503 = vunpack.c.l.b16 %v405
    %v1504 = vunpack.c.h.b16 %v405
    %v1505 = vunpack.c.l.b16 %v406
    %v1506 = vunpack.c.h.b16 %v406
    %v1507 = vunpack.c.l.b16 %v407
    %v1508 = vunpack.c.h.b16 %v407
    %v1509 = vunpack.c.l.b16 %v408
    %v1510 = vunpack.c.h.b16 %v408
    %v1511 = vunpack.c.l.b16 %v409
    %v1512 = vunpack.c.h.b16 %v409
    %v1513 = vunpack.c.l.b16 %v410
    %v1514 = vunpack.c.h.b16 %v410
    %v1515 = vunpack.c.l.b16 %v411
    %v1516 = vunpack.c.h.b16 %v411
    %v1517 = vunpack.c.l.b16 %v412
    %v1518 = vunpack.c.h.b16 %v412
    %v1519 = vunpack.c.l.b16 %v413
    %v1520 = vunpack.c.h.b16 %v413
    %v1521 = vunpack.c.l.b16 %v414
    %v1522 = vunpack.c.h.b16 %v414
    %v1523 = vunpack.c.l.b16 %v415
    %v1524 = vunpack.c.h.b16 %v415
    %v1525 = vunpack.c.l.b16 %v416
    %v1526 = vunpack.c.h.b16 %v416
    %v1527 = vunpack.c.l.b16 %v417
    %v1528 = vunpack.c.h.b16 %v417
    %v1529 = vunpack.c.l.b16 %v418
    %v1530 = vunpack.c.h.b16 %v418
    %v1531 = vunpack.c.l.b16 %v419
    %v1532 = vunpack.c.h.b16 %v419
    %v1533 = vunpack.c.l.b16 %v420
    %v1534 = vunpack.c.h.b16 %v420
    %v1535 = vunpack.c.l.b16 %v421
    %v1536 = vunpack.c.h.b16 %v421
    %v1537 = vunpack.c.l.b16 %v422
    %v1538 = vunpack.c.h.b16 %v422
    %v1539 = vunpack.c.l.b16 %v423
    %v1540 = vunpack.c.h.b16 %v423
    %v1541 = vunpack.c.l.b16 %v424
    %v1542 = vunpack.c.h.b16 %v424
    %v1543 = vunpack.c.l.b16 %v425
    %v1544 = vunpack.c.h.b16 %v425
    %v1545 = vunpack.c.l.b16 %v426
    %v1546 = vunpack.c.h.b16 %v426
    %v1547 = vunpack.c.l.b16 %v427
    %v1548 = vunpack.c.h.b16 %v427
    %v1549 = vunpack.c.l.b16 %v428
    %v1550 = vunpack.c.h.b16 %v428
    %v1551 = vunpack.c.l.b16 %v429
    %v1552 = vunpack.c.h.b16 %v429
    %v1553 = vunpack.c.l.b16 %v430
    %v1554 = vunpack.c.h.b16 %v430
    %v1555 = vunpack.c.l.b16 %v431
    %v1556 = vunpack.c.h.b16 %v431
    %v1557 = vunpack.c.l.b16 %v432
    %v1558 = vunpack.c.h.b16 %v432
    %v1559 = vunpack.c.l.b16 %v433
    %v1560 = vunpack.c.h.b16 %v433
    %v1561 = vunpack.c.l.b16 %v434
    %v1562 = vunpack.c.h.b16 %v434
    %v1563 = vunpack.c.l.b16 %v435
    %v1564 = vunpack.c.h.b16 %v435
    %v1565 = vunpack.c.l.b16 %v436
    %v1566 = vunpack.c.h.b16 %v436
    %v1567 = vunpack.c.l.b16 %v437
    %v1568 = vunpack.c.h.b16 %v437
    %v1569 = vunpack.c.l.b16 %v438
    %v1570 = vunpack.c.h.b16 %v438
    %v1571 = vunpack.c.l.b16 %v439
    %v1572 = vunpack.c.h.b16 %v439
    %v1573 = vunpack.c.l.b16 %v440
    %v1574 = vunpack.c.h.b16 %v440
    %v1575 = vunpack.c.l.b16 %v441
    %v1576 = vunpack.c.h.b16 %v441
    %v1577 = vunpack.c.l.b16 %v442
    %v1578 = vunpack.c.h.b16 %v442
    %v1579 = vunpack.c.l.b16 %v443
    %v1580 = vunpack.c.h.b16 %v443
    %v1581 = vunpack.c.l.b16 %v444
    %v1582 = vunpack.c.h.b16 %v444
    %v1583 = vunpack.c.l.b16 %v445
    %v1584 = vunpack.c.h.b16 %v445
    %v1585 = vunpack.c.l.b16 %v446
    %v1586 = vunpack.c.h.b16 %v446
    %v1587 = vunpack.c.l.b16 %v447
    %v1588 = vunpack.c.h.b16 %v447
    %v1589 = vunpack.c.l.b16 %v448
    %v1590 = vunpack.c.h.b16 %v448
    %v1591 = vunpack.c.l.b16 %v449
    %v1592 = vunpack.c.h.b16 %v449
    %v1593 = vunpack.c.l.b16 %v450
    %v1594 = vunpack.c.h.b16 %v450
    %v1595 = vunpack.c.l.b16 %v451
    %v1596 = vunpack.c.h.b16 %v451
    %v1597 = vunpack.c.l.b16 %v452
    %v1598 = vunpack.c.h.b16 %v452
    %v1599 = vunpack.c.l.b16 %v453
    %v1600 = vunpack.c.h.b16 %v453
    %v1601 = vunpack.c.l.b16 %v454
    %v1602 = vunpack.c.h.b16 %v454
    %v1603 = vunpack.c.l.b16 %v455
    %v1604 = vunpack.c.h.b16 %v455
    %v1605 = vunpack.c.l.b16 %v456
    %v1606 = vunpack.c.h.b16 %v456
    %v1607 = vunpack.c.l.b16 %v457
    %v1608 = vunpack.c.h.b16 %v457
    %v1609 = vunpack.c.l.b16 %v458
    %v1610 = vunpack.c.h.b16 %v458
    %v1611 = vunpack.c.l.b16 %v459
    %v1612 = vunpack.c.h.b16 %v459
    %v1613 = vunpack.c.l.b16 %v460
    %v1614 = vunpack.c.h.b16 %v460
    %v1615 = vunpack.c.l.b16 %v461
    %v1616 = vunpack.c.h.b16 %v461
    %v1617 = vunpack.c.l.b16 %v462
    %v1618 = vunpack.c.h.b16 %v462
    %v1619 = vunpack.c.l.b16 %v463
    %v1620 = vunpack.c.h.b16 %v463
    %v1621 = vunpack.c.l.b16 %v464
    %v1622 = vunpack.c.h.b16 %v464
    %v1623 = vunpack.c.l.b16 %v465
    %v1624 = vunpack.c.h.b16 %v465
    %v1625 = vunpack.c.l.b16 %v466
    %v1626 = vunpack.c.h.b16 %v466
    %v1627 = vunpack.c.l.b16 %v467
    %v1628 = vunpack.c.h.b16 %v467
    %v1629 = vunpack.c.l.b16 %v468
    %v1630 = vunpack.c.h.b16 %v468
    %v1631 = vunpack.c.l.b16 %v469
    %v1632 = vunpack.c.h.b16 %v469
    %v1633 = vunpack.c.l.b16 %v470
    %v1634 = vunpack.c.h.b16 %v470
    %v1635 = vunpack.c.l.b16 %v471
    %v1636 = vunpack.c.h.b16 %v471
    %v1637 = vunpack.c.l.b16 %v472
    %v1638 = vunpack.c.h.b16 %v472
    %v1639 = vunpack.c.l.b16 %v473
    %v1640 = vunpack.c.h.b16 %v473
    %v1641 = vunpack.c.l.b16 %v474
    %v1642 = vunpack.c.h.b16 %v474
    %v1643 = vunpack.c.l.b16 %v475
    %v1644 = vunpack.c.h.b16 %v475
    %v1645 = vunpack.c.l.b16 %v476
    %v1646 = vunpack.c.h.b16 %v476
    %v1647 = vunpack.c.l.b16 %v477
    %v1648 = vunpack.c.h.b16 %v477
    %v1649 = vunpack.c.l.b16 %v478
    %v1650 = vunpack.c.h.b16 %v478
    %v1651 = vunpack.c.l.b16 %v479
    %v1652 = vunpack.c.h.b16 %v479
    %v1653 = vunpack.c.l.b16 %v480
    %v1654 = vunpack.c.h.b16 %v480
    %v1655 = vunpack.c.l.b16 %v481
    %v1656 = vunpack.c.h.b16 %v481
    %v1657 = vunpack.c.l.b16 %v482
    %v1658 = vunpack.c.h.b16 %v482
    %v1659 = vunpack.c.l.b16 %v483
    %v1660 = vunpack.c.h.b16 %v483
    %v1661 = vunpack.c.l.b16 %v484
    %v1662 = vunpack.c.h.b16 %v484
    %v1663 = vunpack.c.l.b16 %v485
    %v1664 = vunpack.c.h.b16 %v485
    %v1665 = vunpack.c.l.b16 %v486
    %v1666 = vunpack.c.h.b16 %v486
    %v1667 = vunpack.c.l.b16 %v487
    %v1668 = vunpack.c.h.b16 %v487
    %v1669 = vunpack.c.l.b16 %v488
    %v1670 = vunpack.c.h.b16 %v488
    %v1671 = vunpack.c.l.b16 %v489
    %v1672 = vunpack.c.h.b16 %v489
    %v1673 = vunpack.c.l.b16 %v490
    %v1674 = vunpack.c.h.b16 %v490
    %v1675 = vunpack.c.l.b16 %v491
    %v1676 = vunpack.c.h.b16 %v491
    %v1677 = vunpack.c.l.b16 %v492
    %v1678 = vunpack.c.h.b16 %v492
    %v1679 = vunpack.c.l.b16 %v493
    %v1680 = vunpack.c.h.b16 %v493
    %v1681 = vunpack.c.l.b16 %v494
    %v1682 = vunpack.c.h.b16 %v494
    %v1683 = vunpack.c.l.b16 %v495
    %v1684 = vunpack.c.h.b16 %v495
    %v1685 = vunpack.c.l.b16 %v496
    %v1686 = vunpack.c.h.b16 %v496
    %v1687 = vunpack.c.l.b16 %v497
    %v1688 = vunpack.c.h.b16 %v497
    %v1689 = vunpack.c.l.b16 %v498
    %v1690 = vunpack.c.h.b16 %v498
    %v1691 = vunpack.c.l.b16 %v499
    %v1692 = vunpack.c.h.b16 %v499
    %v1693 = vunpack.c.l.b16 %v500
    %v1694 = vunpack.c.h.b16 %v500
    %v1695 = vunpack.c.l.b16 %v501
    %v1696 = vunpack.c.h.b16 %v501
    %v1697 = vunpack.c.l.b16 %v502
    %v1698 = vunpack.c.h.b16 %v502
    %v1699 = vunpack.c.l.b16 %v503
    %v1700 = vunpack.c.h.b16 %v503
    %v1701 = vunpack.c.l.b16 %v504
    %v1702 = vunpack.c.h.b16 %v504
    %v1703 = vunpack.c.l.b16 %v505
    %v1704 = vunpack.c.h.b16 %v505
    %v1705 = vunpack.c.l.b16 %v506
    %v1706 = vunpack.c.h.b16 %v506
    %v1707 = vunpack.c.l.b16 %v507
    %v1708 = vunpack.c.h.b16 %v507
    %v1709 = vunpack.c.l.b16 %v508
    %v1710 = vunpack.c.h.b16 %v508
    %v1711 = vunpack.c.l.b16 %v509
    %v1712 = vunpack.c.h.b16 %v509
    %v1713 = vunpack.c.l.b16 %v510
    %v1714 = vunpack.c.h.b16 %v510
    %v1715 = vunpack.c.l.b16 %v511
    %v1716 = vunpack.c.h.b16 %v511
    %v1717 = vunpack.c.l.b16 %v512
    %v1718 = vunpack.c.h.b16 %v512
    %v1719 = vunpack.c.l.b16 %v513
    %v1720 = vunpack.c.h.b16 %v513
    %v1721 = vunpack.c.l.b16 %v514
    %v1722 = vunpack.c.h.b16 %v514
    %v1723 = vunpack.c.l.b16 %v515
    %v1724 = vunpack.c.h.b16 %v515
    %v1725 = vunpack.c.l.b16 %v516
    %v1726 = vunpack.c.h.b16 %v516
    %v1727 = vunpack.c.l.b16 %v517
    %v1728 = vunpack.c.h.b16 %v517
    %v1729 = vunpack.c.l.b16 %v518
    %v1730 = vunpack.c.h.b16 %v518
    %v1731 = vunpack.c.l.b16 %v519
    %v1732 = vunpack.c.h.b16 %v519
    %v1733 = vunpack.c.l.b16 %v520
    %v1734 = vunpack.c.h.b16 %v520
    %v1735 = vunpack.c.l.b16 %v521
    %v1736 = vunpack.c.h.b16 %v521
    %v1737 = vpack.c.b16 %v977, %v969
    %v1738 = vpack.c.b16 %v978, %v970
    %v1739 = vpack.c.b16 %v979, %v971
    %v1740 = vpack.c.b16 %v980, %v972
    %v1741 = vpack.c.b16 %v981, %v973
    %v1742 = vpack.c.b16 %v982, %v974
    %v1743 = vpack.c.b16 %v983, %v975
    %v1744 = vpack.c.b16 %v984, %v976
    %v1745 = vpack.c.b16 %v993, %v985
    %v1746 = vpack.c.b16 %v994, %v986
    %v1747 = vpack.c.b16 %v995, %v987
    %v1748 = vpack.c.b16 %v996, %v988
    %v1749 = vpack.c.b16 %v997, %v989
    %v1750 = vpack.c.b16 %v998, %v990
    %v1751 = vpack.c.b16 %v999, %v991
    %v1752 = vpack.c.b16 %v1000, %v992
    %v1753 = vpack.c.b16 %v1009, %v1001
    %v1754 = vpack.c.b16 %v1010, %v1002
    %v1755 = vpack.c.b16 %v1011, %v1003
    %v1756 = vpack.c.b16 %v1012, %v1004
    %v1757 = vpack.c.b16 %v1013, %v1005
    %v1758 = vpack.c.b16 %v1014, %v1006
    %v1759 = vpack.c.b16 %v1015, %v1007
    %v1760 = vpack.c.b16 %v1016, %v1008
    %v1761 = vpack.c.b16 %v1025, %v1017
    %v1762 = vpack.c.b16 %v1026, %v1018
    %v1763 = vpack.c.b16 %v1027, %v1019
    %v1764 = vpack.c.b16 %v1028, %v1020
    %v1765 = vpack.c.b16 %v1029, %v1021
    %v1766 = vpack.c.b16 %v1030, %v1022
    %v1767 = vpack.c.b16 %v1031, %v1023
    %v1768 = vpack.c.b16 %v1032, %v1024
    %v1769 = vpack.c.b16 %v1041, %v1033
    %v1770 = vpack.c.b16 %v1042, %v1034
    %v1771 = vpack.c.b16 %v1043, %v1035
    %v1772 = vpack.c.b16 %v1044, %v1036
    %v1773 = vpack.c.b16 %v1045, %v1037
    %v1774 = vpack.c.b16 %v1046, %v1038
    %v1775 = vpack.c.b16 %v1047, %v1039
    %v1776 = vpack.c.b16 %v1048, %v1040
    %v1777 = vpack.c.b16 %v1057, %v1049
    %v1778 = vpack.c.b16 %v1058, %v1050
    %v1779 = vpack.c.b16 %v1059, %v1051
    %v1780 = vpack.c.b16 %v1060, %v1052
    %v1781 = vpack.c.b16 %v1061, %v1053
    %v1782 = vpack.c.b16 %v1062, %v1054
    %v1783 = vpack.c.b16 %v1063, %v1055
    %v1784 = vpack.c.b16 %v1064, %v1056
    %v1785 = vpack.c.b16 %v1073, %v1065
    %v1786 = vpack.c.b16 %v1074, %v1066
    %v1787 = vpack.c.b16 %v1075, %v1067
    %v1788 = vpack.c.b16 %v1076, %v1068
    %v1789 = vpack.c.b16 %v1077, %v1069
    %v1790 = vpack.c.b16 %v1078, %v1070
    %v1791 = vpack.c.b16 %v1079, %v1071
    %v1792 = vpack.c.b16 %v1080, %v1072
    %v1793 = vpack.c.b16 %v1089, %v1081
    %v1794 = vpack.c.b16 %v1090, %v1082
    %v1795 = vpack.c.b16 %v1091, %v1083
    %v1796 = vpack.c.b16 %v1092, %v1084
    %v1797 = vpack.c.b16 %v1093, %v1085
    %v1798 = vpack.c.b16 %v1094, %v1086
    %v1799 = vpack.c.b16 %v1095, %v1087
    %v1800 = vpack.c.b16 %v1096, %v1088
    %v1801 = vpack.c.b16 %v1105, %v1097
    %v1802 = vpack.c.b16 %v1106, %v1098
    %v1803 = vpack.c.b16 %v1107, %v1099
    %v1804 = vpack.c.b16 %v1108, %v1100
    %v1805 = vpack.c.b16 %v1109, %v1101
    %v1806 = vpack.c.b16 %v1110, %v1102
    %v1807 = vpack.c.b16 %v1111, %v1103
    %v1808 = vpack.c.b16 %v1112, %v1104
    %v1809 = vpack.c.b16 %v1121, %v1113
    %v1810 = vpack.c.b16 %v1122, %v1114
    %v1811 = vpack.c.b16 %v1123, %v1115
    %v1812 = vpack.c.b16 %v1124, %v1116
    %v1813 = vpack.c.b16 %v1125, %v1117
    %v1814 = vpack.c.b16 %v1126, %v1118
    %v1815 = vpack.c.b16 %v1127, %v1119
    %v1816 = vpack.c.b16 %v1128, %v1120
    %v1817 = vpack.c.b16 %v1137, %v1129
    %v1818 = vpack.c.b16 %v1138, %v1130
    %v1819 = vpack.c.b16 %v1139, %v1131
    %v1820 = vpack.c.b16 %v1140, %v1132
    %v1821 = vpack.c.b16 %v1141, %v1133
    %v1822 = vpack.c.b16 %v1142, %v1134
    %v1823 = vpack.c.b16 %v1143, %v1135
    %v1824 = vpack.c.b16 %v1144, %v1136
    %v1825 = vpack.c.b16 %v1153, %v1145
    %v1826 = vpack.c.b16 %v1154, %v1146
    %v1827 = vpack.c.b16 %v1155, %v1147
    %v1828 = vpack.c.b16 %v1156, %v1148
    %v1829 = vpack.c.b16 %v1157, %v1149
    %v1830 = vpack.c.b16 %v1158, %v1150
    %v1831 = vpack.c.b16 %v1159, %v1151
    %v1832 = vpack.c.b16 %v1160, %v1152
    %v1833 = vpack.c.b16 %v1169, %v1161
    %v1834 = vpack.c.b16 %v1170, %v1162
    %v1835 = vpack.c.b16 %v1171, %v1163
    %v1836 = vpack.c.b16 %v1172, %v1164
    %v1837 = vpack.c.b16 %v1173, %v1165
    %v1838 = vpack.c.b16 %v1174, %v1166
    %v1839 = vpack.c.b16 %v1175, %v1167
    %v1840 = vpack.c.b16 %v1176, %v1168
    %v1841 = vpack.c.b16 %v1185, %v1177
    %v1842 = vpack.c.b16 %v1186, %v1178
    %v1843 = vpack.c.b16 %v1187, %v1179
    %v1844 = vpack.c.b16 %v1188, %v1180
    %v1845 = vpack.c.b16 %v1189, %v1181
    %v1846 = vpack.c.b16 %v1190, %v1182
    %v1847 = vpack.c.b16 %v1191, %v1183
    %v1848 = vpack.c.b16 %v1192, %v1184
    %v1849 = vpack.c.b16 %v1201, %v1193
    %v1850 = vpack.c.b16 %v1202, %v1194
    %v1851 = vpack.c.b16 %v1203, %v1195
    %v1852 = vpack.c.b16 %v1204, %v1196
    %v1853 = vpack.c.b16 %v1205, %v1197
    %v1854 = vpack.c.b16 %v1206, %v1198
    %v1855 = vpack.c.b16 %v1207, %v1199
    %v1856 = vpack.c.b16 %v1208, %v1200
    %v1857 = vpack.c.b16 %v1217, %v1209
    %v1858 = vpack.c.b16 %v1218, %v1210
    %v1859 = vpack.c.b16 %v1219, %v1211
    %v1860 = vpack.c.b16 %v1220, %v1212
    %v1861 = vpack.c.b16 %v1221, %v1213
    %v1862 = vpack.c.b16 %v1222, %v1214
    %v1863 = vpack.c.b16 %v1223, %v1215
    %v1864 = vpack.c.b16 %v1224, %v1216
    %v1865 = vpack.c.b16 %v1233, %v1225
    %v1866 = vpack.c.b16 %v1234, %v1226
    %v1867 = vpack.c.b16 %v1235, %v1227
    %v1868 = vpack.c.b16 %v1236, %v1228
    %v1869 = vpack.c.b16 %v1237, %v1229
    %v1870 = vpack.c.b16 %v1238, %v1230
    %v1871 = vpack.c.b16 %v1239, %v1231
    %v1872 = vpack.c.b16 %v1240, %v1232
    %v1873 = vpack.c.b16 %v1249, %v1241
    %v1874 = vpack.c.b16 %v1250, %v1242
    %v1875 = vpack.c.b16 %v1251, %v1243
    %v1876 = vpack.c.b16 %v1252, %v1244
    %v1877 = vpack.c.b16 %v1253, %v1245
    %v1878 = vpack.c.b16 %v1254, %v1246
    %v1879 = vpack.c.b16 %v1255, %v1247
    %v1880 = vpack.c.b16 %v1256, %v1248
    %v1881 = vpack.c.b16 %v1265, %v1257
    %v1882 = vpack.c.b16 %v1266, %v1258
    %v1883 = vpack.c.b16 %v1267, %v1259
    %v1884 = vpack.c.b16 %v1268, %v1260
    %v1885 = vpack.c.b16 %v1269, %v1261
    %v1886 = vpack.c.b16 %v1270, %v1262
    %v1887 = vpack.c.b16 %v1271, %v1263
    %v1888 = vpack.c.b16 %v1272, %v1264
    %v1889 = vpack.c.b16 %v1281, %v1273
    %v1890 = vpack.c.b16 %v1282, %v1274
    %v1891 = vpack.c.b16 %v1283, %v1275
    %v1892 = vpack.c.b16 %v1284, %v1276
    %v1893 = vpack.c.b16 %v1285, %v1277
    %v1894 = vpack.c.b16 %v1286, %v1278
    %v1895 = vpack.c.b16 %v1287, %v1279
    %v1896 = vpack.c.b16 %v1288, %v1280
    %v1897 = vpack.c.b16 %v1297, %v1289
    %v1898 = vpack.c.b16 %v1298, %v1290
    %v1899 = vpack.c.b16 %v1299, %v1291
    %v1900 = vpack.c.b16 %v1300, %v1292
    %v1901 = vpack.c.b16 %v1301, %v1293
    %v1902 = vpack.c.b16 %v1302, %v1294
    %v1903 = vpack.c.b16 %v1303, %v1295
    %v1904 = vpack.c.b16 %v1304, %v1296
    %v1905 = vpack.c.b16 %v1313, %v1305
    %v1906 = vpack.c.b16 %v1314, %v1306
    %v1907 = vpack.c.b16 %v1315, %v1307
    %v1908 = vpack.c.b16 %v1316, %v1308
    %v1909 = vpack.c.b16 %v1317, %v1309
    %v1910 = vpack.c.b16 %v1318, %v1310
    %v1911 = vpack.c.b16 %v1319, %v1311
    %v1912 = vpack.c.b16 %v1320, %v1312
    %v1913 = vpack.c.b16 %v1329, %v1321
    %v1914 = vpack.c.b16 %v1330, %v1322
    %v1915 = vpack.c.b16 %v1331, %v1323
    %v1916 = vpack.c.b16 %v1332, %v1324
    %v1917 = vpack.c.b16 %v1333, %v1325
    %v1918 = vpack.c.b16 %v1334, %v1326
    %v1919 = vpack.c.b16 %v1335, %v1327
    %v1920 = vpack.c.b16 %v1336, %v1328
    %v1921 = vpack.c.b16 %v1345, %v1337
    %v1922 = vpack.c.b16 %v1346, %v1338
    %v1923 = vpack.c.b16 %v1347, %v1339
    %v1924 = vpack.c.b16 %v1348, %v1340
    %v1925 = vpack.c.b16 %v1349, %v1341
    %v1926 = vpack.c.b16 %v1350, %v1342
    %v1927 = vpack.c.b16 %v1351, %v1343
    %v1928 = vpack.c.b16 %v1352, %v1344
    %v1929 = vpack.c.b16 %v1361, %v1353
    %v1930 = vpack.c.b16 %v1362, %v1354
    %v1931 = vpack.c.b16 %v1363, %v1355
    %v1932 = vpack.c.b16 %v1364, %v1356
    %v1933 = vpack.c.b16 %v1365, %v1357
    %v1934 = vpack.c.b16 %v1366, %v1358
    %v1935 = vpack.c.b16 %v1367, %v1359
    %v1936 = vpack.c.b16 %v1368, %v1360
    %v1937 = vpack.c.b16 %v1377, %v1369
    %v1938 = vpack.c.b16 %v1378, %v1370
    %v1939 = vpack.c.b16 %v1379, %v1371
    %v1940 = vpack.c.b16 %v1380, %v1372
    %v1941 = vpack.c.b16 %v1381, %v1373
    %v1942 = vpack.c.b16 %v1382, %v1374
    %v1943 = vpack.c.b16 %v1383, %v1375
    %v1944 = vpack.c.b16 %v1384, %v1376
    %v1945 = vpack.c.b16 %v1393, %v1385
    %v1946 = vpack.c.b16 %v1394, %v1386
    %v1947 = vpack.c.b16 %v1395, %v1387
    %v1948 = vpack.c.b16 %v1396, %v1388
    %v1949 = vpack.c.b16 %v1397, %v1389
    %v1950 = vpack.c.b16 %v1398, %v1390
    %v1951 = vpack.c.b16 %v1399, %v1391
    %v1952 = vpack.c.b16 %v1400, %v1392
    %v1953 = vpack.c.b16 %v1409, %v1401
    %v1954 = vpack.c.b16 %v1410, %v1402
    %v1955 = vpack.c.b16 %v1411, %v1403
    %v1956 = vpack.c.b16 %v1412, %v1404
    %v1957 = vpack.c.b16 %v1413, %v1405
    %v1958 = vpack.c.b16 %v1414, %v1406
    %v1959 = vpack.c.b16 %v1415, %v1407
    %v1960 = vpack.c.b16 %v1416, %v1408
    %v1961 = vpack.c.b16 %v1425, %v1417
    %v1962 = vpack.c.b16 %v1426, %v1418
    %v1963 = vpack.c.b16 %v1427, %v1419
    %v1964 = vpack.c.b16 %v1428, %v1420
    %v1965 = vpack.c.b16 %v1429, %v1421
    %v1966 = vpack.c.b16 %v1430, %v1422
    %v1967 = vpack.c.b16 %v1431, %v1423
    %v1968 = vpack.c.b16 %v1432, %v1424
    %v1969 = vpack.c.b16 %v1441, %v1433
    %v1970 = vpack.c.b16 %v1442, %v1434
    %v1971 = vpack.c.b16 %v1443, %v1435
    %v1972 = vpack.c.b16 %v1444, %v1436
    %v1973 = vpack.c.b16 %v1445, %v1437
    %v1974 = vpack.c.b16 %v1446, %v1438
    %v1975 = vpack.c.b16 %v1447, %v1439
    %v1976 = vpack.c.b16 %v1448, %v1440
    %v1977 = vpack.c.b16 %v1457, %v1449
    %v1978 = vpack.c.b16 %v1458, %v1450
    %v1979 = vpack.c.b16 %v1459, %v1451
    %v1980 = vpack.c.b16 %v1460, %v1452
    %v1981 = vpack.c.b16 %v1461, %v1453
    %v1982 = vpack.c.b16 %v1462, %v1454
    %v1983 = vpack.c.b16 %v1463, %v1455
    %v1984 = vpack.c.b16 %v1464, %v1456
    %v1985 = vpack.c.b16 %v1473, %v1465
    %v1986 = vpack.c.b16 %v1474, %v1466
    %v1987 = vpack.c.b16 %v1475, %v1467
    %v1988 = vpack.c.b16 %v1476, %v1468
    %v1989 = vpack.c.b16 %v1477, %v1469
    %v1990 = vpack.c.b16 %v1478, %v1470
    %v1991 = vpack.c.b16 %v1479, %v1471
    %v1992 = vpack.c.b16 %v1480, %v1472
    %v1993 = vpack.c.b16 %v1489, %v1481
    %v1994 = vpack.c.b16 %v1490, %v1482
    %v1995 = vpack.c.b16 %v1491, %v1483
    %v1996 = vpack.c.b16 %v1492, %v1484
    %v1997 = vpack.c.b16 %v1493, %v1485
    %v1998 = vpack.c.b16 %v1494, %v1486
    %v1999 = vpack.c.b16 %v1495, %v1487
    %v2000 = vpack.c.b16 %v1496, %v1488
    %v2001 = vpack.c.b16 %v1505, %v1497
    %v2002 = vpack.c.b16 %v1506, %v1498
    %v2003 = vpack.c.b16 %v1507, %v1499
    %v2004 = vpack.c.b16 %v1508, %v1500
    %v2005 = vpack.c.b16 %v1509, %v1501
    %v2006 = vpack.c.b16 %v1510, %v1502
    %v2007 = vpack.c.b16 %v1511, %v1503
    %v2008 = vpack.c.b16 %v1512, %v1504
    %v2009 = vpack.c.b16 %v1521, %v1513
    %v2010 = vpack.c.b16 %v1522, %v1514
    %v2011 = vpack.c.b16 %v1523, %v1515
    %v2012 = vpack.c.b16 %v1524, %v1516
    %v2013 = vpack.c.b16 %v1525, %v1517
    %v2014 = vpack.c.b16 %v1526, %v1518
    %v2015 = vpack.c.b16 %v1527, %v1519
    %v2016 = vpack.c.b16 %v1528, %v1520
    %v2017 = vpack.c.b16 %v1537, %v1529
    %v2018 = vpack.c.b16 %v1538, %v1530
    %v2019 = vpack.c.b16 %v1539, %v1531
    %v2020 = vpack.c.b16 %v1540, %v1532
    %v2021 = vpack.c.b16 %v1541, %v1533
    %v2022 = vpack.c.b16 %v1542, %v1534
    %v2023 = vpack.c.b16 %v1543, %v1535
    %v2024 = vpack.c.b16 %v1544, %v1536
    %v2025 = vpack.c.b16 %v1553, %v1545
    %v2026 = vpack.c.b16 %v1554, %v1546
    %v2027 = vpack.c.b16 %v1555, %v1547
    %v2028 = vpack.c.b16 %v1556, %v1548
    %v2029 = vpack.c.b16 %v1557, %v1549
    %v2030 = vpack.c.b16 %v1558, %v1550
    %v2031 = vpack.c.b16 %v1559, %v1551
    %v2032 = vpack.c.b16 %v1560, %v1552
    %v2033 = vpack.c.b16 %v1569, %v1561
    %v2034 = vpack.c.b16 %v1570, %v1562
    %v2035 = vpack.c.b16 %v1571, %v1563
    %v2036 = vpack.c.b16 %v1572, %v1564
    %v2037 = vpack.c.b16 %v1573, %v1565
    %v2038 = vpack.c.b16 %v1574, %v1566
    %v2039 = vpack.c.b16 %v1575, %v1567
    %v2040 = vpack.c.b16 %v1576, %v1568
    %v2041 = vpack.c.b16 %v1585, %v1577
    %v2042 = vpack.c.b16 %v1586, %v1578
    %v2043 = vpack.c.b16 %v1587, %v1579
    %v2044 = vpack.c.b16 %v1588, %v1580
    %v2045 = vpack.c.b16 %v1589, %v1581
    %v2046 = vpack.c.b16 %v1590, %v1582
    %v2047 = vpack.c.b16 %v1591, %v1583
    %v2048 = vpack.c.b16 %v1592, %v1584
    %v2049 = vpack.c.b16 %v1601, %v1593
    %v2050 = vpack.c.b16 %v1602, %v1594
    %v2051 = vpack.c.b16 %v1603, %v1595
    %v2052 = vpack.c.b16 %v1604, %v1596
    %v2053 = vpack.c.b16 %v1605, %v1597
    %v2054 = vpack.c.b16 %v1606, %v1598
    %v2055 = vpack.c.b16 %v1607, %v1599
    %v2056 = vpack.c.b16 %v1608, %v1600
    %v2057 = vpack.c.b16 %v1617, %v1609
    %v2058 = vpack.c.b16 %v1618, %v1610
    %v2059 = vpack.c.b16 %v1619, %v1611
    %v2060 = vpack.c.b16 %v1620, %v1612
    %v2061 = vpack.c.b16 %v1621, %v1613
    %v2062 = vpack.c.b16 %v1622, %v1614
    %v2063 = vpack.c.b16 %v1623, %v1615
    %v2064 = vpack.c.b16 %v1624, %v1616
    %v2065 = vpack.c.b16 %v1633, %v1625
    %v2066 = vpack.c.b16 %v1634, %v1626
    %v2067 = vpack.c.b16 %v1635, %v1627
    %v2068 = vpack.c.b16 %v1636, %v1628
    %v2069 = vpack.c.b16 %v1637, %v1629
    %v2070 = vpack.c.b16 %v1638, %v1630
    %v2071 = vpack.c.b16 %v1639, %v1631
    %v2072 = vpack.c.b16 %v1640, %v1632
    %v2073 = vpack.c.b16 %v1649, %v1641
    %v2074 = vpack.c.b16 %v1650, %v1642
    %v2075 = vpack.c.b16 %v1651, %v1643
    %v2076 = vpack.c.b16 %v1652, %v1644
    %v2077 = vpack.c.b16 %v1653, %v1645
    %v2078 = vpack.c.b16 %v1654, %v1646
    %v2079 = vpack.c.b16 %v1655, %v1647
    %v2080 = vpack.c.b16 %v1656, %v1648
    %v2081 = vpack.c.b16 %v1665, %v1657
    %v2082 = vpack.c.b16 %v1666, %v1658
    %v2083 = vpack.c.b16 %v1667, %v1659
    %v2084 = vpack.c.b16 %v1668, %v1660
    %v2085 = vpack.c.b16 %v1669, %v1661
    %v2086 = vpack.c.b16 %v1670, %v1662
    %v2087 = vpack.c.b16 %v1671, %v1663
    %v2088 = vpack.c.b16 %v1672, %v1664
    %v2089 = vpack.c.b16 %v1681, %v1673
    %v2090 = vpack.c.b16 %v1682, %v1674
    %v2091 = vpack.c.b16 %v1683, %v1675
    %v2092 = vpack.c.b16 %v1684, %v1676
    %v2093 = vpack.c.b16 %v1685, %v1677
    %v2094 = vpack.c.b16 %v1686, %v1678
    %v2095 = vpack.c.b16 %v1687, %v1679
    %v2096 = vpack.c.b16 %v1688, %v1680
    %v2097 = vpack.c.b16 %v1697, %v1689
    %v2098 = vpack.c.b16 %v1698, %v1690
    %v2099 = vpack.c.b16 %v1699, %v1691
    %v2100 = vpack.c.b16 %v1700, %v1692
    %v2101 = vpack.c.b16 %v1701, %v1693
    %v2102 = vpack.c.b16 %v1702, %v1694
    %v2103 = vpack.c.b16 %v1703, %v1695
    %v2104 = vpack.c.b16 %v1704, %v1696
    %v2105 = vpack.c.b16 %v1713, %v1705
    %v2106 = vpack.c.b16 %v1714, %v1706
    %v2107 = vpack.c.b16 %v1715, %v1707
    %v2108 = vpack.c.b16 %v1716, %v1708
    %v2109 = vpack.c.b16 %v1717, %v1709
    %v2110 = vpack.c.b16 %v1718, %v1710
    %v2111 = vpack.c.b16 %v1719, %v1711
    %v2112 = vpack.c.b16 %v1720, %v1712
    %v2113 = vpack.c.b16 %v1729, %v1721
    %v2114 = vpack.c.b16 %v1730, %v1722
    %v2115 = vpack.c.b16 %v1731, %v1723
    %v2116 = vpack.c.b16 %v1732, %v1724
    %v2117 = vpack.c.b16 %v1733, %v1725
    %v2118 = vpack.c.b16 %v1734, %v1726
    %v2119 = vpack.c.b16 %v1735, %v1727
    %v2120 = vpack.c.b16 %v1736, %v1728
    %2505 = vmatprep.subr.bf16.mxu0 %v1738
    %2506 = vmatpush1.bf16.msra.mxu0 %v1737
    %2507 = vmatprep.subr.bf16.mxu0 %v1746
    %2508 = vmatpush1.bf16.msra.mxu0 %v1745
    %2509 = vmatprep.subr.bf16.mxu0 %v1754
    %2510 = vmatpush1.bf16.msra.mxu0 %v1753
    %2511 = vmatprep.subr.bf16.mxu0 %v1762
    %2512 = vmatpush1.bf16.msra.mxu0 %v1761
    %2513 = vmatprep.subr.bf16.mxu0 %v1770
    %2514 = vmatpush1.bf16.msra.mxu0 %v1769
    %2515 = vmatprep.subr.bf16.mxu0 %v1778
    %2516 = vmatpush1.bf16.msra.mxu0 %v1777
    %2517 = vmatprep.subr.bf16.mxu0 %v1786
    %2518 = vmatpush1.bf16.msra.mxu0 %v1785
    %2519 = vmatprep.subr.bf16.mxu0 %v1794
    %2520 = vmatpush1.bf16.msra.mxu0 %v1793
    %2521 = vmatprep.subr.bf16.mxu0 %v1802
    %2522 = vmatpush1.bf16.msra.mxu0 %v1801
    %2523 = vmatprep.subr.bf16.mxu0 %v1810
    %2524 = vmatpush1.bf16.msra.mxu0 %v1809
    %2525 = vmatprep.subr.bf16.mxu0 %v1818
    %2526 = vmatpush1.bf16.msra.mxu0 %v1817
    %2527 = vmatprep.subr.bf16.mxu0 %v1826
    %2528 = vmatpush1.bf16.msra.mxu0 %v1825
    %2529 = vmatprep.subr.bf16.mxu0 %v1834
    %2530 = vmatpush1.bf16.msra.mxu0 %v1833
    %2531 = vmatprep.subr.bf16.mxu0 %v1842
    %2532 = vmatpush1.bf16.msra.mxu0 %v1841
    %2533 = vmatprep.subr.bf16.mxu0 %v1850
    %2534 = vmatpush1.bf16.msra.mxu0 %v1849
    %2535 = vmatprep.subr.bf16.mxu0 %v1858
    %2536 = vmatpush1.bf16.msra.mxu0 %v1857
    %2537 = vmatprep.mubr.bf16.mxu0 %v574
    %2538 = vmatmul.mubr.bf16.gmra.mrb[0].mxu0 %v573
    %v2539 = vpop.f32.mrb[0].mxu0
    %v2540 = vadd.f32 %v527, %v2539
    %v2541 = vpop.f32.mrb[0].mxu0
    %v2542 = vadd.f32 %v531, %v2541
    %v2543 = vpop.f32.mrb[0].mxu0
    %v2544 = vpop.f32.mrb[0].mxu0
    %2545 = vdwg.mxu0
    %2546 = vmatprep.subr.bf16.mxu0 %v1866
    %2547 = vmatpush1.bf16.msra.mxu0 %v1865
    %2548 = vmatprep.subr.bf16.mxu0 %v1874
    %2549 = vmatpush1.bf16.msra.mxu0 %v1873
    %2550 = vmatprep.subr.bf16.mxu0 %v1882
    %2551 = vmatpush1.bf16.msra.mxu0 %v1881
    %2552 = vmatprep.subr.bf16.mxu0 %v1890
    %2553 = vmatpush1.bf16.msra.mxu0 %v1889
    %2554 = vmatprep.subr.bf16.mxu0 %v1898
    %2555 = vmatpush1.bf16.msra.mxu0 %v1897
    %2556 = vmatprep.subr.bf16.mxu0 %v1906
    %2557 = vmatpush1.bf16.msra.mxu0 %v1905
    %2558 = vmatprep.subr.bf16.mxu0 %v1914
    %2559 = vmatpush1.bf16.msra.mxu0 %v1913
    %2560 = vmatprep.subr.bf16.mxu0 %v1922
    %2561 = vmatpush1.bf16.msra.mxu0 %v1921
    %2562 = vmatprep.subr.bf16.mxu0 %v1930
    %2563 = vmatpush1.bf16.msra.mxu0 %v1929
    %2564 = vmatprep.subr.bf16.mxu0 %v1938
    %2565 = vmatpush1.bf16.msra.mxu0 %v1937
    %2566 = vmatprep.subr.bf16.mxu0 %v1946
    %2567 = vmatpush1.bf16.msra.mxu0 %v1945
    %2568 = vmatprep.subr.bf16.mxu0 %v1954
    %2569 = vmatpush1.bf16.msra.mxu0 %v1953
    %2570 = vmatprep.subr.bf16.mxu0 %v1962
    %2571 = vmatpush1.bf16.msra.mxu0 %v1961
    %2572 = vmatprep.subr.bf16.mxu0 %v1970
    %2573 = vmatpush1.bf16.msra.mxu0 %v1969
    %2574 = vmatprep.subr.bf16.mxu0 %v1978
    %2575 = vmatpush1.bf16.msra.mxu0 %v1977
    %2576 = vmatprep.subr.bf16.mxu0 %v1986
    %2577 = vmatpush1.bf16.msra.mxu0 %v1985
    %2578 = vmatprep.mubr.bf16.mxu0 %v576
    %2579 = vmatmul.mubr.bf16.gmra.mrb[0].mxu0 %v575
    %v2580 = vpop.f32.mrb[0].mxu0
    %v2581 = vadd.f32 %v2540, %v2580
    %v2582 = vpop.f32.mrb[0].mxu0
    %v2583 = vadd.f32 %v2542, %v2582
    %v2584 = vpop.f32.mrb[0].mxu0
    %v2585 = vpop.f32.mrb[0].mxu0
    %2586 = vdwg.mxu0
    %2587 = vmatprep.subr.bf16.mxu0 %v1994
    %2588 = vmatpush1.bf16.msra.mxu0 %v1993
    %2589 = vmatprep.subr.bf16.mxu0 %v2002
    %2590 = vmatpush1.bf16.msra.mxu0 %v2001
    %2591 = vmatprep.subr.bf16.mxu0 %v2010
    %2592 = vmatpush1.bf16.msra.mxu0 %v2009
    %2593 = vmatprep.subr.bf16.mxu0 %v2018
    %2594 = vmatpush1.bf16.msra.mxu0 %v2017
    %2595 = vmatprep.subr.bf16.mxu0 %v2026
    %2596 = vmatpush1.bf16.msra.mxu0 %v2025
    %2597 = vmatprep.subr.bf16.mxu0 %v2034
    %2598 = vmatpush1.bf16.msra.mxu0 %v2033
    %2599 = vmatprep.subr.bf16.mxu0 %v2042
    %2600 = vmatpush1.bf16.msra.mxu0 %v2041
    %2601 = vmatprep.subr.bf16.mxu0 %v2050
    %2602 = vmatpush1.bf16.msra.mxu0 %v2049
    %2603 = vmatprep.subr.bf16.mxu0 %v2058
    %2604 = vmatpush1.bf16.msra.mxu0 %v2057
    %2605 = vmatprep.subr.bf16.mxu0 %v2066
    %2606 = vmatpush1.bf16.msra.mxu0 %v2065
    %2607 = vmatprep.subr.bf16.mxu0 %v2074
    %2608 = vmatpush1.bf16.msra.mxu0 %v2073
    %2609 = vmatprep.subr.bf16.mxu0 %v2082
    %2610 = vmatpush1.bf16.msra.mxu0 %v2081
    %2611 = vmatprep.subr.bf16.mxu0 %v2090
    %2612 = vmatpush1.bf16.msra.mxu0 %v2089
    %2613 = vmatprep.subr.bf16.mxu0 %v2098
    %2614 = vmatpush1.bf16.msra.mxu0 %v2097
    %2615 = vmatprep.subr.bf16.mxu0 %v2106
    %2616 = vmatpush1.bf16.msra.mxu0 %v2105
    %2617 = vmatprep.subr.bf16.mxu0 %v2114
    %2618 = vmatpush1.bf16.msra.mxu0 %v2113
    %2619 = vmatprep.mubr.bf16.mxu0 %v578
    %2620 = vmatmul.mubr.bf16.gmra.mrb[0].mxu0 %v577
    %v2621 = vpop.f32.mrb[0].mxu0
    %v2622 = vadd.f32 %v2581, %v2621
    %v2623 = vpop.f32.mrb[0].mxu0
    %v2624 = vadd.f32 %v2583, %v2623
    %v2625 = vpop.f32.mrb[0].mxu0
    %v2626 = vpop.f32.mrb[0].mxu0
    %2627 = vdwg.mxu0
    %2628 = vmatprep.subr.bf16.mxu0 %v1740
    %2629 = vmatpush1.bf16.msra.mxu0 %v1739
    %2630 = vmatprep.subr.bf16.mxu0 %v1748
    %2631 = vmatpush1.bf16.msra.mxu0 %v1747
    %2632 = vmatprep.subr.bf16.mxu0 %v1756
    %2633 = vmatpush1.bf16.msra.mxu0 %v1755
    %2634 = vmatprep.subr.bf16.mxu0 %v1764
    %2635 = vmatpush1.bf16.msra.mxu0 %v1763
    %2636 = vmatprep.subr.bf16.mxu0 %v1772
    %2637 = vmatpush1.bf16.msra.mxu0 %v1771
    %2638 = vmatprep.subr.bf16.mxu0 %v1780
    %2639 = vmatpush1.bf16.msra.mxu0 %v1779
    %2640 = vmatprep.subr.bf16.mxu0 %v1788
    %2641 = vmatpush1.bf16.msra.mxu0 %v1787
    %2642 = vmatprep.subr.bf16.mxu0 %v1796
    %2643 = vmatpush1.bf16.msra.mxu0 %v1795
    %2644 = vmatprep.subr.bf16.mxu0 %v1804
    %2645 = vmatpush1.bf16.msra.mxu0 %v1803
    %2646 = vmatprep.subr.bf16.mxu0 %v1812
    %2647 = vmatpush1.bf16.msra.mxu0 %v1811
    %2648 = vmatprep.subr.bf16.mxu0 %v1820
    %2649 = vmatpush1.bf16.msra.mxu0 %v1819
    %2650 = vmatprep.subr.bf16.mxu0 %v1828
    %2651 = vmatpush1.bf16.msra.mxu0 %v1827
    %2652 = vmatprep.subr.bf16.mxu0 %v1836
    %2653 = vmatpush1.bf16.msra.mxu0 %v1835
    %2654 = vmatprep.subr.bf16.mxu0 %v1844
    %2655 = vmatpush1.bf16.msra.mxu0 %v1843
    %2656 = vmatprep.subr.bf16.mxu0 %v1852
    %2657 = vmatpush1.bf16.msra.mxu0 %v1851
    %2658 = vmatprep.subr.bf16.mxu0 %v1860
    %2659 = vmatpush1.bf16.msra.mxu0 %v1859
    %2660 = vmatprep.mubr.bf16.mxu0 %v574
    %2661 = vmatmul.mubr.bf16.gmra.mrb[0].mxu0 %v573
    %v2662 = vpop.f32.mrb[0].mxu0
    %v2663 = vadd.f32 %v535, %v2662
    %v2664 = vpop.f32.mrb[0].mxu0
    %v2665 = vadd.f32 %v539, %v2664
    %v2666 = vpop.f32.mrb[0].mxu0
    %v2667 = vpop.f32.mrb[0].mxu0
    %2668 = vdwg.mxu0
    %2669 = vmatprep.subr.bf16.mxu0 %v1868
    %2670 = vmatpush1.bf16.msra.mxu0 %v1867
    %2671 = vmatprep.subr.bf16.mxu0 %v1876
    %2672 = vmatpush1.bf16.msra.mxu0 %v1875
    %2673 = vmatprep.subr.bf16.mxu0 %v1884
    %2674 = vmatpush1.bf16.msra.mxu0 %v1883
    %2675 = vmatprep.subr.bf16.mxu0 %v1892
    %2676 = vmatpush1.bf16.msra.mxu0 %v1891
    %2677 = vmatprep.subr.bf16.mxu0 %v1900
    %2678 = vmatpush1.bf16.msra.mxu0 %v1899
    %2679 = vmatprep.subr.bf16.mxu0 %v1908
    %2680 = vmatpush1.bf16.msra.mxu0 %v1907
    %2681 = vmatprep.subr.bf16.mxu0 %v1916
    %2682 = vmatpush1.bf16.msra.mxu0 %v1915
    %2683 = vmatprep.subr.bf16.mxu0 %v1924
    %2684 = vmatpush1.bf16.msra.mxu0 %v1923
    %2685 = vmatprep.subr.bf16.mxu0 %v1932
    %2686 = vmatpush1.bf16.msra.mxu0 %v1931
    %2687 = vmatprep.subr.bf16.mxu0 %v1940
    %2688 = vmatpush1.bf16.msra.mxu0 %v1939
    %2689 = vmatprep.subr.bf16.mxu0 %v1948
    %2690 = vmatpush1.bf16.msra.mxu0 %v1947
    %2691 = vmatprep.subr.bf16.mxu0 %v1956
    %2692 = vmatpush1.bf16.msra.mxu0 %v1955
    %2693 = vmatprep.subr.bf16.mxu0 %v1964
    %2694 = vmatpush1.bf16.msra.mxu0 %v1963
    %2695 = vmatprep.subr.bf16.mxu0 %v1972
    %2696 = vmatpush1.bf16.msra.mxu0 %v1971
    %2697 = vmatprep.subr.bf16.mxu0 %v1980
    %2698 = vmatpush1.bf16.msra.mxu0 %v1979
    %2699 = vmatprep.subr.bf16.mxu0 %v1988
    %2700 = vmatpush1.bf16.msra.mxu0 %v1987
    %2701 = vmatprep.mubr.bf16.mxu0 %v576
    %2702 = vmatmul.mubr.bf16.gmra.mrb[0].mxu0 %v575
    %v2703 = vpop.f32.mrb[0].mxu0
    %v2704 = vadd.f32 %v2663, %v2703
    %v2705 = vpop.f32.mrb[0].mxu0
    %v2706 = vadd.f32 %v2665, %v2705
    %v2707 = vpop.f32.mrb[0].mxu0
    %v2708 = vpop.f32.mrb[0].mxu0
    %2709 = vdwg.mxu0
    %2710 = vmatprep.subr.bf16.mxu0 %v1996
    %2711 = vmatpush1.bf16.msra.mxu0 %v1995
    %2712 = vmatprep.subr.bf16.mxu0 %v2004
    %2713 = vmatpush1.bf16.msra.mxu0 %v2003
    %2714 = vmatprep.subr.bf16.mxu0 %v2012
    %2715 = vmatpush1.bf16.msra.mxu0 %v2011
    %2716 = vmatprep.subr.bf16.mxu0 %v2020
    %2717 = vmatpush1.bf16.msra.mxu0 %v2019
    %2718 = vmatprep.subr.bf16.mxu0 %v2028
    %2719 = vmatpush1.bf16.msra.mxu0 %v2027
    %2720 = vmatprep.subr.bf16.mxu0 %v2036
    %2721 = vmatpush1.bf16.msra.mxu0 %v2035
    %2722 = vmatprep.subr.bf16.mxu0 %v2044
    %2723 = vmatpush1.bf16.msra.mxu0 %v2043
    %2724 = vmatprep.subr.bf16.mxu0 %v2052
    %2725 = vmatpush1.bf16.msra.mxu0 %v2051
    %2726 = vmatprep.subr.bf16.mxu0 %v2060
    %2727 = vmatpush1.bf16.msra.mxu0 %v2059
    %2728 = vmatprep.subr.bf16.mxu0 %v2068
    %2729 = vmatpush1.bf16.msra.mxu0 %v2067
    %2730 = vmatprep.subr.bf16.mxu0 %v2076
    %2731 = vmatpush1.bf16.msra.mxu0 %v2075
    %2732 = vmatprep.subr.bf16.mxu0 %v2084
    %2733 = vmatpush1.bf16.msra.mxu0 %v2083
    %2734 = vmatprep.subr.bf16.mxu0 %v2092
    %2735 = vmatpush1.bf16.msra.mxu0 %v2091
    %2736 = vmatprep.subr.bf16.mxu0 %v2100
    %2737 = vmatpush1.bf16.msra.mxu0 %v2099
    %2738 = vmatprep.subr.bf16.mxu0 %v2108
    %2739 = vmatpush1.bf16.msra.mxu0 %v2107
    %2740 = vmatprep.subr.bf16.mxu0 %v2116
    %2741 = vmatpush1.bf16.msra.mxu0 %v2115
    %2742 = vmatprep.mubr.bf16.mxu0 %v578
    %2743 = vmatmul.mubr.bf16.gmra.mrb[0].mxu0 %v577
    %v2744 = vpop.f32.mrb[0].mxu0
    %v2745 = vadd.f32 %v2704, %v2744
    %v2746 = vpop.f32.mrb[0].mxu0
    %v2747 = vadd.f32 %v2706, %v2746
    %v2748 = vpop.f32.mrb[0].mxu0
    %v2749 = vpop.f32.mrb[0].mxu0
    %2750 = vdwg.mxu0
    %2751 = vmatprep.subr.bf16.mxu0 %v1742
    %2752 = vmatpush1.bf16.msra.mxu0 %v1741
    %2753 = vmatprep.subr.bf16.mxu0 %v1750
    %2754 = vmatpush1.bf16.msra.mxu0 %v1749
    %2755 = vmatprep.subr.bf16.mxu0 %v1758
    %2756 = vmatpush1.bf16.msra.mxu0 %v1757
    %2757 = vmatprep.subr.bf16.mxu0 %v1766
    %2758 = vmatpush1.bf16.msra.mxu0 %v1765
    %2759 = vmatprep.subr.bf16.mxu0 %v1774
    %2760 = vmatpush1.bf16.msra.mxu0 %v1773
    %2761 = vmatprep.subr.bf16.mxu0 %v1782
    %2762 = vmatpush1.bf16.msra.mxu0 %v1781
    %2763 = vmatprep.subr.bf16.mxu0 %v1790
    %2764 = vmatpush1.bf16.msra.mxu0 %v1789
    %2765 = vmatprep.subr.bf16.mxu0 %v1798
    %2766 = vmatpush1.bf16.msra.mxu0 %v1797
    %2767 = vmatprep.subr.bf16.mxu0 %v1806
    %2768 = vmatpush1.bf16.msra.mxu0 %v1805
    %2769 = vmatprep.subr.bf16.mxu0 %v1814
    %2770 = vmatpush1.bf16.msra.mxu0 %v1813
    %2771 = vmatprep.subr.bf16.mxu0 %v1822
    %2772 = vmatpush1.bf16.msra.mxu0 %v1821
    %2773 = vmatprep.subr.bf16.mxu0 %v1830
    %2774 = vmatpush1.bf16.msra.mxu0 %v1829
    %2775 = vmatprep.subr.bf16.mxu0 %v1838
    %2776 = vmatpush1.bf16.msra.mxu0 %v1837
    %2777 = vmatprep.subr.bf16.mxu0 %v1846
    %2778 = vmatpush1.bf16.msra.mxu0 %v1845
    %2779 = vmatprep.subr.bf16.mxu0 %v1854
    %2780 = vmatpush1.bf16.msra.mxu0 %v1853
    %2781 = vmatprep.subr.bf16.mxu0 %v1862
    %2782 = vmatpush1.bf16.msra.mxu0 %v1861
    %2783 = vmatprep.mubr.bf16.mxu0 %v574
    %2784 = vmatmul.mubr.bf16.gmra.mrb[0].mxu0 %v573
    %v2785 = vpop.f32.mrb[0].mxu0
    %v2786 = vadd.f32 %v543, %v2785
    %v2787 = vpop.f32.mrb[0].mxu0
    %v2788 = vadd.f32 %v547, %v2787
    %v2789 = vpop.f32.mrb[0].mxu0
    %v2790 = vpop.f32.mrb[0].mxu0
    %2791 = vdwg.mxu0
    %2792 = vmatprep.subr.bf16.mxu0 %v1870
    %2793 = vmatpush1.bf16.msra.mxu0 %v1869
    %2794 = vmatprep.subr.bf16.mxu0 %v1878
    %2795 = vmatpush1.bf16.msra.mxu0 %v1877
    %2796 = vmatprep.subr.bf16.mxu0 %v1886
    %2797 = vmatpush1.bf16.msra.mxu0 %v1885
    %2798 = vmatprep.subr.bf16.mxu0 %v1894
    %2799 = vmatpush1.bf16.msra.mxu0 %v1893
    %2800 = vmatprep.subr.bf16.mxu0 %v1902
    %2801 = vmatpush1.bf16.msra.mxu0 %v1901
    %2802 = vmatprep.subr.bf16.mxu0 %v1910
    %2803 = vmatpush1.bf16.msra.mxu0 %v1909
    %2804 = vmatprep.subr.bf16.mxu0 %v1918
    %2805 = vmatpush1.bf16.msra.mxu0 %v1917
    %2806 = vmatprep.subr.bf16.mxu0 %v1926
    %2807 = vmatpush1.bf16.msra.mxu0 %v1925
    %2808 = vmatprep.subr.bf16.mxu0 %v1934
    %2809 = vmatpush1.bf16.msra.mxu0 %v1933
    %2810 = vmatprep.subr.bf16.mxu0 %v1942
    %2811 = vmatpush1.bf16.msra.mxu0 %v1941
    %2812 = vmatprep.subr.bf16.mxu0 %v1950
    %2813 = vmatpush1.bf16.msra.mxu0 %v1949
    %2814 = vmatprep.subr.bf16.mxu0 %v1958
    %2815 = vmatpush1.bf16.msra.mxu0 %v1957
    %2816 = vmatprep.subr.bf16.mxu0 %v1966
    %2817 = vmatpush1.bf16.msra.mxu0 %v1965
    %2818 = vmatprep.subr.bf16.mxu0 %v1974
    %2819 = vmatpush1.bf16.msra.mxu0 %v1973
    %2820 = vmatprep.subr.bf16.mxu0 %v1982
    %2821 = vmatpush1.bf16.msra.mxu0 %v1981
    %2822 = vmatprep.subr.bf16.mxu0 %v1990
    %2823 = vmatpush1.bf16.msra.mxu0 %v1989
    %2824 = vmatprep.mubr.bf16.mxu0 %v576
    %2825 = vmatmul.mubr.bf16.gmra.mrb[0].mxu0 %v575
    %v2826 = vpop.f32.mrb[0].mxu0
    %v2827 = vadd.f32 %v2786, %v2826
    %v2828 = vpop.f32.mrb[0].mxu0
    %v2829 = vadd.f32 %v2788, %v2828
    %v2830 = vpop.f32.mrb[0].mxu0
    %v2831 = vpop.f32.mrb[0].mxu0
    %2832 = vdwg.mxu0
    %2833 = vmatprep.subr.bf16.mxu0 %v1998
    %2834 = vmatpush1.bf16.msra.mxu0 %v1997
    %2835 = vmatprep.subr.bf16.mxu0 %v2006
    %2836 = vmatpush1.bf16.msra.mxu0 %v2005
    %2837 = vmatprep.subr.bf16.mxu0 %v2014
    %2838 = vmatpush1.bf16.msra.mxu0 %v2013
    %2839 = vmatprep.subr.bf16.mxu0 %v2022
    %2840 = vmatpush1.bf16.msra.mxu0 %v2021
    %2841 = vmatprep.subr.bf16.mxu0 %v2030
    %2842 = vmatpush1.bf16.msra.mxu0 %v2029
    %2843 = vmatprep.subr.bf16.mxu0 %v2038
    %2844 = vmatpush1.bf16.msra.mxu0 %v2037
    %2845 = vmatprep.subr.bf16.mxu0 %v2046
    %2846 = vmatpush1.bf16.msra.mxu0 %v2045
    %2847 = vmatprep.subr.bf16.mxu0 %v2054
    %2848 = vmatpush1.bf16.msra.mxu0 %v2053
    %2849 = vmatprep.subr.bf16.mxu0 %v2062
    %2850 = vmatpush1.bf16.msra.mxu0 %v2061
    %2851 = vmatprep.subr.bf16.mxu0 %v2070
    %2852 = vmatpush1.bf16.msra.mxu0 %v2069
    %2853 = vmatprep.subr.bf16.mxu0 %v2078
    %2854 = vmatpush1.bf16.msra.mxu0 %v2077
    %2855 = vmatprep.subr.bf16.mxu0 %v2086
    %2856 = vmatpush1.bf16.msra.mxu0 %v2085
    %2857 = vmatprep.subr.bf16.mxu0 %v2094
    %2858 = vmatpush1.bf16.msra.mxu0 %v2093
    %2859 = vmatprep.subr.bf16.mxu0 %v2102
    %2860 = vmatpush1.bf16.msra.mxu0 %v2101
    %2861 = vmatprep.subr.bf16.mxu0 %v2110
    %2862 = vmatpush1.bf16.msra.mxu0 %v2109
    %2863 = vmatprep.subr.bf16.mxu0 %v2118
    %2864 = vmatpush1.bf16.msra.mxu0 %v2117
    %2865 = vmatprep.mubr.bf16.mxu0 %v578
    %2866 = vmatmul.mubr.bf16.gmra.mrb[0].mxu0 %v577
    %v2867 = vpop.f32.mrb[0].mxu0
    %v2868 = vadd.f32 %v2827, %v2867
    %v2869 = vpop.f32.mrb[0].mxu0
    %v2870 = vadd.f32 %v2829, %v2869
    %v2871 = vpop.f32.mrb[0].mxu0
    %v2872 = vpop.f32.mrb[0].mxu0
    %2873 = vdwg.mxu0
    %2874 = vmatprep.subr.bf16.mxu0 %v1744
    %2875 = vmatpush1.bf16.msra.mxu0 %v1743
    %2876 = vmatprep.subr.bf16.mxu0 %v1752
    %2877 = vmatpush1.bf16.msra.mxu0 %v1751
    %2878 = vmatprep.subr.bf16.mxu0 %v1760
    %2879 = vmatpush1.bf16.msra.mxu0 %v1759
    %2880 = vmatprep.subr.bf16.mxu0 %v1768
    %2881 = vmatpush1.bf16.msra.mxu0 %v1767
    %2882 = vmatprep.subr.bf16.mxu0 %v1776
    %2883 = vmatpush1.bf16.msra.mxu0 %v1775
    %2884 = vmatprep.subr.bf16.mxu0 %v1784
    %2885 = vmatpush1.bf16.msra.mxu0 %v1783
    %2886 = vmatprep.subr.bf16.mxu0 %v1792
    %2887 = vmatpush1.bf16.msra.mxu0 %v1791
    %2888 = vmatprep.subr.bf16.mxu0 %v1800
    %2889 = vmatpush1.bf16.msra.mxu0 %v1799
    %2890 = vmatprep.subr.bf16.mxu0 %v1808
    %2891 = vmatpush1.bf16.msra.mxu0 %v1807
    %2892 = vmatprep.subr.bf16.mxu0 %v1816
    %2893 = vmatpush1.bf16.msra.mxu0 %v1815
    %2894 = vmatprep.subr.bf16.mxu0 %v1824
    %2895 = vmatpush1.bf16.msra.mxu0 %v1823
    %2896 = vmatprep.subr.bf16.mxu0 %v1832
    %2897 = vmatpush1.bf16.msra.mxu0 %v1831
    %2898 = vmatprep.subr.bf16.mxu0 %v1840
    %2899 = vmatpush1.bf16.msra.mxu0 %v1839
    %2900 = vmatprep.subr.bf16.mxu0 %v1848
    %2901 = vmatpush1.bf16.msra.mxu0 %v1847
    %2902 = vmatprep.subr.bf16.mxu0 %v1856
    %2903 = vmatpush1.bf16.msra.mxu0 %v1855
    %2904 = vmatprep.subr.bf16.mxu0 %v1864
    %2905 = vmatpush1.bf16.msra.mxu0 %v1863
    %2906 = vmatprep.mubr.bf16.mxu0 %v574
    %2907 = vmatmul.mubr.bf16.gmra.mrb[0].mxu0 %v573
    %v2908 = vpop.f32.mrb[0].mxu0
    %v2909 = vadd.f32 %v551, %v2908
    %v2910 = vpop.f32.mrb[0].mxu0
    %v2911 = vadd.f32 %v555, %v2910
    %v2912 = vpop.f32.mrb[0].mxu0
    %v2913 = vpop.f32.mrb[0].mxu0
    %2914 = vdwg.mxu0
    %2915 = vmatprep.subr.bf16.mxu0 %v1872
    %2916 = vmatpush1.bf16.msra.mxu0 %v1871
    %2917 = vmatprep.subr.bf16.mxu0 %v1880
    %2918 = vmatpush1.bf16.msra.mxu0 %v1879
    %2919 = vmatprep.subr.bf16.mxu0 %v1888
    %2920 = vmatpush1.bf16.msra.mxu0 %v1887
    %2921 = vmatprep.subr.bf16.mxu0 %v1896
    %2922 = vmatpush1.bf16.msra.mxu0 %v1895
    %2923 = vmatprep.subr.bf16.mxu0 %v1904
    %2924 = vmatpush1.bf16.msra.mxu0 %v1903
    %2925 = vmatprep.subr.bf16.mxu0 %v1912
    %2926 = vmatpush1.bf16.msra.mxu0 %v1911
    %2927 = vmatprep.subr.bf16.mxu0 %v1920
    %2928 = vmatpush1.bf16.msra.mxu0 %v1919
    %2929 = vmatprep.subr.bf16.mxu0 %v1928
    %2930 = vmatpush1.bf16.msra.mxu0 %v1927
    %2931 = vmatprep.subr.bf16.mxu0 %v1936
    %2932 = vmatpush1.bf16.msra.mxu0 %v1935
    %2933 = vmatprep.subr.bf16.mxu0 %v1944
    %2934 = vmatpush1.bf16.msra.mxu0 %v1943
    %2935 = vmatprep.subr.bf16.mxu0 %v1952
    %2936 = vmatpush1.bf16.msra.mxu0 %v1951
    %2937 = vmatprep.subr.bf16.mxu0 %v1960
    %2938 = vmatpush1.bf16.msra.mxu0 %v1959
    %2939 = vmatprep.subr.bf16.mxu0 %v1968
    %2940 = vmatpush1.bf16.msra.mxu0 %v1967
    %2941 = vmatprep.subr.bf16.mxu0 %v1976
    %2942 = vmatpush1.bf16.msra.mxu0 %v1975
    %2943 = vmatprep.subr.bf16.mxu0 %v1984
    %2944 = vmatpush1.bf16.msra.mxu0 %v1983
    %2945 = vmatprep.subr.bf16.mxu0 %v1992
    %2946 = vmatpush1.bf16.msra.mxu0 %v1991
    %2947 = vmatprep.mubr.bf16.mxu0 %v576
    %2948 = vmatmul.mubr.bf16.gmra.mrb[0].mxu0 %v575
    %v2949 = vpop.f32.mrb[0].mxu0
    %v2950 = vadd.f32 %v2909, %v2949
    %v2951 = vpop.f32.mrb[0].mxu0
    %v2952 = vadd.f32 %v2911, %v2951
    %v2953 = vpop.f32.mrb[0].mxu0
    %v2954 = vpop.f32.mrb[0].mxu0
    %2955 = vdwg.mxu0
    %2956 = vmatprep.subr.bf16.mxu0 %v2000
    %2957 = vmatpush1.bf16.msra.mxu0 %v1999
    %2958 = vmatprep.subr.bf16.mxu0 %v2008
    %2959 = vmatpush1.bf16.msra.mxu0 %v2007
    %2960 = vmatprep.subr.bf16.mxu0 %v2016
    %2961 = vmatpush1.bf16.msra.mxu0 %v2015
    %2962 = vmatprep.subr.bf16.mxu0 %v2024
    %2963 = vmatpush1.bf16.msra.mxu0 %v2023
    %2964 = vmatprep.subr.bf16.mxu0 %v2032
    %2965 = vmatpush1.bf16.msra.mxu0 %v2031
    %2966 = vmatprep.subr.bf16.mxu0 %v2040
    %2967 = vmatpush1.bf16.msra.mxu0 %v2039
    %2968 = vmatprep.subr.bf16.mxu0 %v2048
    %2969 = vmatpush1.bf16.msra.mxu0 %v2047
    %2970 = vmatprep.subr.bf16.mxu0 %v2056
    %2971 = vmatpush1.bf16.msra.mxu0 %v2055
    %2972 = vmatprep.subr.bf16.mxu0 %v2064
    %2973 = vmatpush1.bf16.msra.mxu0 %v2063
    %2974 = vmatprep.subr.bf16.mxu0 %v2072
    %2975 = vmatpush1.bf16.msra.mxu0 %v2071
    %2976 = vmatprep.subr.bf16.mxu0 %v2080
    %2977 = vmatpush1.bf16.msra.mxu0 %v2079
    %2978 = vmatprep.subr.bf16.mxu0 %v2088
    %2979 = vmatpush1.bf16.msra.mxu0 %v2087
    %2980 = vmatprep.subr.bf16.mxu0 %v2096
    %2981 = vmatpush1.bf16.msra.mxu0 %v2095
    %2982 = vmatprep.subr.bf16.mxu0 %v2104
    %2983 = vmatpush1.bf16.msra.mxu0 %v2103
    %2984 = vmatprep.subr.bf16.mxu0 %v2112
    %2985 = vmatpush1.bf16.msra.mxu0 %v2111
    %2986 = vmatprep.subr.bf16.mxu0 %v2120
    %2987 = vmatpush1.bf16.msra.mxu0 %v2119
    %2988 = vmatprep.mubr.bf16.mxu0 %v578
    %2989 = vmatmul.mubr.bf16.gmra.mrb[0].mxu0 %v577
    %v2990 = vpop.f32.mrb[0].mxu0
    %v2991 = vadd.f32 %v2950, %v2990
    %v2992 = vpop.f32.mrb[0].mxu0
    %v2993 = vadd.f32 %v2952, %v2992
    %v2994 = vpop.f32.mrb[0].mxu0
    %v2995 = vpop.f32.mrb[0].mxu0
    %2996 = vdwg.mxu0
    %v2997 = vpack.c.bf16 %v2622, %v2622
    %v2998 = vpack.c.bf16 %v2624, %v2624
    %v2999 = vpack.c.bf16 %v2745, %v2745
    %v3000 = vpack.c.bf16 %v2747, %v2747
    %v3001 = vpack.c.bf16 %v2868, %v2868
    %v3002 = vpack.c.bf16 %v2870, %v2870
    %v3003 = vpack.c.bf16 %v2991, %v2991
    %v3004 = vpack.c.bf16 %v2993, %v2993
    %v3005 = vld [vmem:[#allocation9] sm:$0xff]
    %v3006 = vld [vmem:[#allocation9 + $0x8] sm:$0xff]
    %v3007 = vld [vmem:[#allocation9 + $0x10] sm:$0xff]
    %v3008 = vld [vmem:[#allocation9 + $0x18] sm:$0xff]
    %v3009 = vld [vmem:[#allocation9 + $0x20] sm:$0xff]
    %v3010 = vld [vmem:[#allocation9 + $0x28] sm:$0xff]
    %v3011 = vld [vmem:[#allocation9 + $0x30] sm:$0xff]
    %v3012 = vld [vmem:[#allocation9 + $0x38] sm:$0xff]
    %v3013 = vld [vmem:[#allocation9 + $0x40] sm:$0xff]
    %v3014 = vld [vmem:[#allocation9 + $0x48] sm:$0xff]
    %v3015 = vld [vmem:[#allocation9 + $0x50] sm:$0xff]
    %v3016 = vld [vmem:[#allocation9 + $0x58] sm:$0xff]
    %v3017 = vld [vmem:[#allocation9 + $0x60] sm:$0xff]
    %v3018 = vld [vmem:[#allocation9 + $0x68] sm:$0xff]
    %v3019 = vld [vmem:[#allocation9 + $0x70] sm:$0xff]
    %v3020 = vld [vmem:[#allocation9 + $0x78] sm:$0xff]
    %v3021 = vld [vmem:[#allocation9 + $0x80] sm:$0xff]
    %v3022 = vld [vmem:[#allocation9 + $0x88] sm:$0xff]
    %v3023 = vld [vmem:[#allocation9 + $0x90] sm:$0xff]
    %v3024 = vld [vmem:[#allocation9 + $0x98] sm:$0xff]
    %v3025 = vld [vmem:[#allocation9 + $0xa0] sm:$0xff]
    %v3026 = vld [vmem:[#allocation9 + $0xa8] sm:$0xff]
    %v3027 = vld [vmem:[#allocation9 + $0xb0] sm:$0xff]
    %v3028 = vld [vmem:[#allocation9 + $0xb8] sm:$0xff]
    %v3029 = vld [vmem:[#allocation9 + $0xc0] sm:$0xff]
    %v3030 = vld [vmem:[#allocation9 + $0xc8] sm:$0xff]
    %v3031 = vld [vmem:[#allocation9 + $0xd0] sm:$0xff]
    %v3032 = vld [vmem:[#allocation9 + $0xd8] sm:$0xff]
    %v3033 = vld [vmem:[#allocation9 + $0xe0] sm:$0xff]
    %v3034 = vld [vmem:[#allocation9 + $0xe8] sm:$0xff]
    %v3035 = vld [vmem:[#allocation9 + $0xf0] sm:$0xff]
    %v3036 = vld [vmem:[#allocation9 + $0xf8] sm:$0xff]
    %v3037 = vld [vmem:[#allocation9 + $0x100] sm:$0xff]
    %v3038 = vld [vmem:[#allocation9 + $0x108] sm:$0xff]
    %v3039 = vld [vmem:[#allocation9 + $0x110] sm:$0xff]
    %v3040 = vld [vmem:[#allocation9 + $0x118] sm:$0xff]
    %v3041 = vld [vmem:[#allocation9 + $0x120] sm:$0xff]
    %v3042 = vld [vmem:[#allocation9 + $0x128] sm:$0xff]
    %v3043 = vld [vmem:[#allocation9 + $0x130] sm:$0xff]
    %v3044 = vld [vmem:[#allocation9 + $0x138] sm:$0xff]
    %v3045 = vld [vmem:[#allocation9 + $0x140] sm:$0xff]
    %v3046 = vld [vmem:[#allocation9 + $0x148] sm:$0xff]
    %v3047 = vld [vmem:[#allocation9 + $0x150] sm:$0xff]
    %v3048 = vld [vmem:[#allocation9 + $0x158] sm:$0xff]
    %v3049 = vld [vmem:[#allocation9 + $0x160] sm:$0xff]
    %v3050 = vld [vmem:[#allocation9 + $0x168] sm:$0xff]
    %v3051 = vld [vmem:[#allocation9 + $0x170] sm:$0xff]
    %v3052 = vld [vmem:[#allocation9 + $0x178] sm:$0xff]
    %v3053 = vld [vmem:[#allocation9 + $0x180] sm:$0xff]
    %v3054 = vld [vmem:[#allocation9 + $0x188] sm:$0xff]
    %v3055 = vld [vmem:[#allocation9 + $0x190] sm:$0xff]
    %v3056 = vld [vmem:[#allocation9 + $0x198] sm:$0xff]
    %v3057 = vld [vmem:[#allocation9 + $0x1a0] sm:$0xff]
    %v3058 = vld [vmem:[#allocation9 + $0x1a8] sm:$0xff]
    %v3059 = vld [vmem:[#allocation9 + $0x1b0] sm:$0xff]
    %v3060 = vld [vmem:[#allocation9 + $0x1b8] sm:$0xff]
    %v3061 = vld [vmem:[#allocation9 + $0x1c0] sm:$0xff]
    %v3062 = vld [vmem:[#allocation9 + $0x1c8] sm:$0xff]
    %v3063 = vld [vmem:[#allocation9 + $0x1d0] sm:$0xff]
    %v3064 = vld [vmem:[#allocation9 + $0x1d8] sm:$0xff]
    %v3065 = vld [vmem:[#allocation9 + $0x1e0] sm:$0xff]
    %v3066 = vld [vmem:[#allocation9 + $0x1e8] sm:$0xff]
    %v3067 = vld [vmem:[#allocation9 + $0x1f0] sm:$0xff]
    %v3068 = vld [vmem:[#allocation9 + $0x1f8] sm:$0xff]
    %v3069 = vld [vmem:[#allocation9 + $0x200] sm:$0xff]
    %v3070 = vld [vmem:[#allocation9 + $0x208] sm:$0xff]
    %v3071 = vld [vmem:[#allocation9 + $0x210] sm:$0xff]
    %v3072 = vld [vmem:[#allocation9 + $0x218] sm:$0xff]
    %v3073 = vld [vmem:[#allocation9 + $0x220] sm:$0xff]
    %v3074 = vld [vmem:[#allocation9 + $0x228] sm:$0xff]
    %v3075 = vld [vmem:[#allocation9 + $0x230] sm:$0xff]
    %v3076 = vld [vmem:[#allocation9 + $0x238] sm:$0xff]
    %v3077 = vld [vmem:[#allocation9 + $0x240] sm:$0xff]
    %v3078 = vld [vmem:[#allocation9 + $0x248] sm:$0xff]
    %v3079 = vld [vmem:[#allocation9 + $0x250] sm:$0xff]
    %v3080 = vld [vmem:[#allocation9 + $0x258] sm:$0xff]
    %v3081 = vld [vmem:[#allocation9 + $0x260] sm:$0xff]
    %v3082 = vld [vmem:[#allocation9 + $0x268] sm:$0xff]
    %v3083 = vld [vmem:[#allocation9 + $0x270] sm:$0xff]
    %v3084 = vld [vmem:[#allocation9 + $0x278] sm:$0xff]
    %v3085 = vld [vmem:[#allocation9 + $0x280] sm:$0xff]
    %v3086 = vld [vmem:[#allocation9 + $0x288] sm:$0xff]
    %v3087 = vld [vmem:[#allocation9 + $0x290] sm:$0xff]
    %v3088 = vld [vmem:[#allocation9 + $0x298] sm:$0xff]
    %v3089 = vld [vmem:[#allocation9 + $0x2a0] sm:$0xff]
    %v3090 = vld [vmem:[#allocation9 + $0x2a8] sm:$0xff]
    %v3091 = vld [vmem:[#allocation9 + $0x2b0] sm:$0xff]
    %v3092 = vld [vmem:[#allocation9 + $0x2b8] sm:$0xff]
    %v3093 = vld [vmem:[#allocation9 + $0x2c0] sm:$0xff]
    %v3094 = vld [vmem:[#allocation9 + $0x2c8] sm:$0xff]
    %v3095 = vld [vmem:[#allocation9 + $0x2d0] sm:$0xff]
    %v3096 = vld [vmem:[#allocation9 + $0x2d8] sm:$0xff]
    %v3097 = vld [vmem:[#allocation9 + $0x2e0] sm:$0xff]
    %v3098 = vld [vmem:[#allocation9 + $0x2e8] sm:$0xff]
    %v3099 = vld [vmem:[#allocation9 + $0x2f0] sm:$0xff]
    %v3100 = vld [vmem:[#allocation9 + $0x2f8] sm:$0xff]
    %v3101 = vld [vmem:[#allocation9 + $0x300] sm:$0xff]
    %v3102 = vld [vmem:[#allocation9 + $0x308] sm:$0xff]
    %v3103 = vld [vmem:[#allocation9 + $0x310] sm:$0xff]
    %v3104 = vld [vmem:[#allocation9 + $0x318] sm:$0xff]
    %v3105 = vld [vmem:[#allocation9 + $0x320] sm:$0xff]
    %v3106 = vld [vmem:[#allocation9 + $0x328] sm:$0xff]
    %v3107 = vld [vmem:[#allocation9 + $0x330] sm:$0xff]
    %v3108 = vld [vmem:[#allocation9 + $0x338] sm:$0xff]
    %v3109 = vld [vmem:[#allocation9 + $0x340] sm:$0xff]
    %v3110 = vld [vmem:[#allocation9 + $0x348] sm:$0xff]
    %v3111 = vld [vmem:[#allocation9 + $0x350] sm:$0xff]
    %v3112 = vld [vmem:[#allocation9 + $0x358] sm:$0xff]
    %v3113 = vld [vmem:[#allocation9 + $0x360] sm:$0xff]
    %v3114 = vld [vmem:[#allocation9 + $0x368] sm:$0xff]
    %v3115 = vld [vmem:[#allocation9 + $0x370] sm:$0xff]
    %v3116 = vld [vmem:[#allocation9 + $0x378] sm:$0xff]
    %v3117 = vld [vmem:[#allocation9 + $0x380] sm:$0xff]
    %v3118 = vld [vmem:[#allocation9 + $0x388] sm:$0xff]
    %v3119 = vld [vmem:[#allocation9 + $0x390] sm:$0xff]
    %v3120 = vld [vmem:[#allocation9 + $0x398] sm:$0xff]
    %v3121 = vld [vmem:[#allocation9 + $0x3a0] sm:$0xff]
    %v3122 = vld [vmem:[#allocation9 + $0x3a8] sm:$0xff]
    %v3123 = vld [vmem:[#allocation9 + $0x3b0] sm:$0xff]
    %v3124 = vld [vmem:[#allocation9 + $0x3b8] sm:$0xff]
    %v3125 = vld [vmem:[#allocation9 + $0x3c0] sm:$0xff]
    %v3126 = vld [vmem:[#allocation9 + $0x3c8] sm:$0xff]
    %v3127 = vld [vmem:[#allocation9 + $0x3d0] sm:$0xff]
    %v3128 = vld [vmem:[#allocation9 + $0x3d8] sm:$0xff]
    %v3129 = vld [vmem:[#allocation9 + $0x3e0] sm:$0xff]
    %v3130 = vld [vmem:[#allocation9 + $0x3e8] sm:$0xff]
    %v3131 = vld [vmem:[#allocation9 + $0x3f0] sm:$0xff]
    %v3132 = vld [vmem:[#allocation9 + $0x3f8] sm:$0xff]
    %v3133 = vld [vmem:[#allocation11] sm:$0x3]
    %v3135 = vlaneseq
    %v3136 = vshrl.u32 %v3135, 7
    %v3137 = vsub.s32 0, %v3136
    %v3138 = vrot.slane %v3133, %v3137
    %v3139 = vlaneseq
    %v3140 = vshrl.u32 %v3139, 7
    %v3141 = vsub.s32 1, %v3140
    %v3142 = vrot.slane %v3133, %v3141
    %v3273 = vunpack.c.l.b16 %v3005
    %v3274 = vunpack.c.h.b16 %v3005
    %v3275 = vunpack.c.l.b16 %v3006
    %v3276 = vunpack.c.h.b16 %v3006
    %v3277 = vunpack.c.l.b16 %v3007
    %v3278 = vunpack.c.h.b16 %v3007
    %v3279 = vunpack.c.l.b16 %v3008
    %v3280 = vunpack.c.h.b16 %v3008
    %v3281 = vunpack.c.l.b16 %v3009
    %v3282 = vunpack.c.h.b16 %v3009
    %v3283 = vunpack.c.l.b16 %v3010
    %v3284 = vunpack.c.h.b16 %v3010
    %v3285 = vunpack.c.l.b16 %v3011
    %v3286 = vunpack.c.h.b16 %v3011
    %v3287 = vunpack.c.l.b16 %v3012
    %v3288 = vunpack.c.h.b16 %v3012
    %v3289 = vunpack.c.l.b16 %v3013
    %v3290 = vunpack.c.h.b16 %v3013
    %v3291 = vunpack.c.l.b16 %v3014
    %v3292 = vunpack.c.h.b16 %v3014
    %v3293 = vunpack.c.l.b16 %v3015
    %v3294 = vunpack.c.h.b16 %v3015
    %v3295 = vunpack.c.l.b16 %v3016
    %v3296 = vunpack.c.h.b16 %v3016
    %v3297 = vunpack.c.l.b16 %v3017
    %v3298 = vunpack.c.h.b16 %v3017
    %v3299 = vunpack.c.l.b16 %v3018
    %v3300 = vunpack.c.h.b16 %v3018
    %v3301 = vunpack.c.l.b16 %v3019
    %v3302 = vunpack.c.h.b16 %v3019
    %v3303 = vunpack.c.l.b16 %v3020
    %v3304 = vunpack.c.h.b16 %v3020
    %v3305 = vunpack.c.l.b16 %v3021
    %v3306 = vunpack.c.h.b16 %v3021
    %v3307 = vunpack.c.l.b16 %v3022
    %v3308 = vunpack.c.h.b16 %v3022
    %v3309 = vunpack.c.l.b16 %v3023
    %v3310 = vunpack.c.h.b16 %v3023
    %v3311 = vunpack.c.l.b16 %v3024
    %v3312 = vunpack.c.h.b16 %v3024
    %v3313 = vunpack.c.l.b16 %v3025
    %v3314 = vunpack.c.h.b16 %v3025
    %v3315 = vunpack.c.l.b16 %v3026
    %v3316 = vunpack.c.h.b16 %v3026
    %v3317 = vunpack.c.l.b16 %v3027
    %v3318 = vunpack.c.h.b16 %v3027
    %v3319 = vunpack.c.l.b16 %v3028
    %v3320 = vunpack.c.h.b16 %v3028
    %v3321 = vunpack.c.l.b16 %v3029
    %v3322 = vunpack.c.h.b16 %v3029
    %v3323 = vunpack.c.l.b16 %v3030
    %v3324 = vunpack.c.h.b16 %v3030
    %v3325 = vunpack.c.l.b16 %v3031
    %v3326 = vunpack.c.h.b16 %v3031
    %v3327 = vunpack.c.l.b16 %v3032
    %v3328 = vunpack.c.h.b16 %v3032
    %v3329 = vunpack.c.l.b16 %v3033
    %v3330 = vunpack.c.h.b16 %v3033
    %v3331 = vunpack.c.l.b16 %v3034
    %v3332 = vunpack.c.h.b16 %v3034
    %v3333 = vunpack.c.l.b16 %v3035
    %v3334 = vunpack.c.h.b16 %v3035
    %v3335 = vunpack.c.l.b16 %v3036
    %v3336 = vunpack.c.h.b16 %v3036
    %v3337 = vunpack.c.l.b16 %v3037
    %v3338 = vunpack.c.h.b16 %v3037
    %v3339 = vunpack.c.l.b16 %v3038
    %v3340 = vunpack.c.h.b16 %v3038
    %v3341 = vunpack.c.l.b16 %v3039
    %v3342 = vunpack.c.h.b16 %v3039
    %v3343 = vunpack.c.l.b16 %v3040
    %v3344 = vunpack.c.h.b16 %v3040
    %v3345 = vunpack.c.l.b16 %v3041
    %v3346 = vunpack.c.h.b16 %v3041
    %v3347 = vunpack.c.l.b16 %v3042
    %v3348 = vunpack.c.h.b16 %v3042
    %v3349 = vunpack.c.l.b16 %v3043
    %v3350 = vunpack.c.h.b16 %v3043
    %v3351 = vunpack.c.l.b16 %v3044
    %v3352 = vunpack.c.h.b16 %v3044
    %v3353 = vunpack.c.l.b16 %v3045
    %v3354 = vunpack.c.h.b16 %v3045
    %v3355 = vunpack.c.l.b16 %v3046
    %v3356 = vunpack.c.h.b16 %v3046
    %v3357 = vunpack.c.l.b16 %v3047
    %v3358 = vunpack.c.h.b16 %v3047
    %v3359 = vunpack.c.l.b16 %v3048
    %v3360 = vunpack.c.h.b16 %v3048
    %v3361 = vunpack.c.l.b16 %v3049
    %v3362 = vunpack.c.h.b16 %v3049
    %v3363 = vunpack.c.l.b16 %v3050
    %v3364 = vunpack.c.h.b16 %v3050
    %v3365 = vunpack.c.l.b16 %v3051
    %v3366 = vunpack.c.h.b16 %v3051
    %v3367 = vunpack.c.l.b16 %v3052
    %v3368 = vunpack.c.h.b16 %v3052
    %v3369 = vunpack.c.l.b16 %v3053
    %v3370 = vunpack.c.h.b16 %v3053
    %v3371 = vunpack.c.l.b16 %v3054
    %v3372 = vunpack.c.h.b16 %v3054
    %v3373 = vunpack.c.l.b16 %v3055
    %v3374 = vunpack.c.h.b16 %v3055
    %v3375 = vunpack.c.l.b16 %v3056
    %v3376 = vunpack.c.h.b16 %v3056
    %v3377 = vunpack.c.l.b16 %v3057
    %v3378 = vunpack.c.h.b16 %v3057
    %v3379 = vunpack.c.l.b16 %v3058
    %v3380 = vunpack.c.h.b16 %v3058
    %v3381 = vunpack.c.l.b16 %v3059
    %v3382 = vunpack.c.h.b16 %v3059
    %v3383 = vunpack.c.l.b16 %v3060
    %v3384 = vunpack.c.h.b16 %v3060
    %v3385 = vunpack.c.l.b16 %v3061
    %v3386 = vunpack.c.h.b16 %v3061
    %v3387 = vunpack.c.l.b16 %v3062
    %v3388 = vunpack.c.h.b16 %v3062
    %v3389 = vunpack.c.l.b16 %v3063
    %v3390 = vunpack.c.h.b16 %v3063
    %v3391 = vunpack.c.l.b16 %v3064
    %v3392 = vunpack.c.h.b16 %v3064
    %v3393 = vunpack.c.l.b16 %v3065
    %v3394 = vunpack.c.h.b16 %v3065
    %v3395 = vunpack.c.l.b16 %v3066
    %v3396 = vunpack.c.h.b16 %v3066
    %v3397 = vunpack.c.l.b16 %v3067
    %v3398 = vunpack.c.h.b16 %v3067
    %v3399 = vunpack.c.l.b16 %v3068
    %v3400 = vunpack.c.h.b16 %v3068
    %v3401 = vunpack.c.l.b16 %v3069
    %v3402 = vunpack.c.h.b16 %v3069
    %v3403 = vunpack.c.l.b16 %v3070
    %v3404 = vunpack.c.h.b16 %v3070
    %v3405 = vunpack.c.l.b16 %v3071
    %v3406 = vunpack.c.h.b16 %v3071
    %v3407 = vunpack.c.l.b16 %v3072
    %v3408 = vunpack.c.h.b16 %v3072
    %v3409 = vunpack.c.l.b16 %v3073
    %v3410 = vunpack.c.h.b16 %v3073
    %v3411 = vunpack.c.l.b16 %v3074
    %v3412 = vunpack.c.h.b16 %v3074
    %v3413 = vunpack.c.l.b16 %v3075
    %v3414 = vunpack.c.h.b16 %v3075
    %v3415 = vunpack.c.l.b16 %v3076
    %v3416 = vunpack.c.h.b16 %v3076
    %v3417 = vunpack.c.l.b16 %v3077
    %v3418 = vunpack.c.h.b16 %v3077
    %v3419 = vunpack.c.l.b16 %v3078
    %v3420 = vunpack.c.h.b16 %v3078
    %v3421 = vunpack.c.l.b16 %v3079
    %v3422 = vunpack.c.h.b16 %v3079
    %v3423 = vunpack.c.l.b16 %v3080
    %v3424 = vunpack.c.h.b16 %v3080
    %v3425 = vunpack.c.l.b16 %v3081
    %v3426 = vunpack.c.h.b16 %v3081
    %v3427 = vunpack.c.l.b16 %v3082
    %v3428 = vunpack.c.h.b16 %v3082
    %v3429 = vunpack.c.l.b16 %v3083
    %v3430 = vunpack.c.h.b16 %v3083
    %v3431 = vunpack.c.l.b16 %v3084
    %v3432 = vunpack.c.h.b16 %v3084
    %v3433 = vunpack.c.l.b16 %v3085
    %v3434 = vunpack.c.h.b16 %v3085
    %v3435 = vunpack.c.l.b16 %v3086
    %v3436 = vunpack.c.h.b16 %v3086
    %v3437 = vunpack.c.l.b16 %v3087
    %v3438 = vunpack.c.h.b16 %v3087
    %v3439 = vunpack.c.l.b16 %v3088
    %v3440 = vunpack.c.h.b16 %v3088
    %v3441 = vunpack.c.l.b16 %v3089
    %v3442 = vunpack.c.h.b16 %v3089
    %v3443 = vunpack.c.l.b16 %v3090
    %v3444 = vunpack.c.h.b16 %v3090
    %v3445 = vunpack.c.l.b16 %v3091
    %v3446 = vunpack.c.h.b16 %v3091
    %v3447 = vunpack.c.l.b16 %v3092
    %v3448 = vunpack.c.h.b16 %v3092
    %v3449 = vunpack.c.l.b16 %v3093
    %v3450 = vunpack.c.h.b16 %v3093
    %v3451 = vunpack.c.l.b16 %v3094
    %v3452 = vunpack.c.h.b16 %v3094
    %v3453 = vunpack.c.l.b16 %v3095
    %v3454 = vunpack.c.h.b16 %v3095
    %v3455 = vunpack.c.l.b16 %v3096
    %v3456 = vunpack.c.h.b16 %v3096
    %v3457 = vunpack.c.l.b16 %v3097
    %v3458 = vunpack.c.h.b16 %v3097
    %v3459 = vunpack.c.l.b16 %v3098
    %v3460 = vunpack.c.h.b16 %v3098
    %v3461 = vunpack.c.l.b16 %v3099
    %v3462 = vunpack.c.h.b16 %v3099
    %v3463 = vunpack.c.l.b16 %v3100
    %v3464 = vunpack.c.h.b16 %v3100
    %v3465 = vunpack.c.l.b16 %v3101
    %v3466 = vunpack.c.h.b16 %v3101
    %v3467 = vunpack.c.l.b16 %v3102
    %v3468 = vunpack.c.h.b16 %v3102
    %v3469 = vunpack.c.l.b16 %v3103
    %v3470 = vunpack.c.h.b16 %v3103
    %v3471 = vunpack.c.l.b16 %v3104
    %v3472 = vunpack.c.h.b16 %v3104
    %v3473 = vunpack.c.l.b16 %v3105
    %v3474 = vunpack.c.h.b16 %v3105
    %v3475 = vunpack.c.l.b16 %v3106
    %v3476 = vunpack.c.h.b16 %v3106
    %v3477 = vunpack.c.l.b16 %v3107
    %v3478 = vunpack.c.h.b16 %v3107
    %v3479 = vunpack.c.l.b16 %v3108
    %v3480 = vunpack.c.h.b16 %v3108
    %v3481 = vunpack.c.l.b16 %v3109
    %v3482 = vunpack.c.h.b16 %v3109
    %v3483 = vunpack.c.l.b16 %v3110
    %v3484 = vunpack.c.h.b16 %v3110
    %v3485 = vunpack.c.l.b16 %v3111
    %v3486 = vunpack.c.h.b16 %v3111
    %v3487 = vunpack.c.l.b16 %v3112
    %v3488 = vunpack.c.h.b16 %v3112
    %v3489 = vunpack.c.l.b16 %v3113
    %v3490 = vunpack.c.h.b16 %v3113
    %v3491 = vunpack.c.l.b16 %v3114
    %v3492 = vunpack.c.h.b16 %v3114
    %v3493 = vunpack.c.l.b16 %v3115
    %v3494 = vunpack.c.h.b16 %v3115
    %v3495 = vunpack.c.l.b16 %v3116
    %v3496 = vunpack.c.h.b16 %v3116
    %v3497 = vunpack.c.l.b16 %v3117
    %v3498 = vunpack.c.h.b16 %v3117
    %v3499 = vunpack.c.l.b16 %v3118
    %v3500 = vunpack.c.h.b16 %v3118
    %v3501 = vunpack.c.l.b16 %v3119
    %v3502 = vunpack.c.h.b16 %v3119
    %v3503 = vunpack.c.l.b16 %v3120
    %v3504 = vunpack.c.h.b16 %v3120
    %v3505 = vunpack.c.l.b16 %v3121
    %v3506 = vunpack.c.h.b16 %v3121
    %v3507 = vunpack.c.l.b16 %v3122
    %v3508 = vunpack.c.h.b16 %v3122
    %v3509 = vunpack.c.l.b16 %v3123
    %v3510 = vunpack.c.h.b16 %v3123
    %v3511 = vunpack.c.l.b16 %v3124
    %v3512 = vunpack.c.h.b16 %v3124
    %v3513 = vunpack.c.l.b16 %v3125
    %v3514 = vunpack.c.h.b16 %v3125
    %v3515 = vunpack.c.l.b16 %v3126
    %v3516 = vunpack.c.h.b16 %v3126
    %v3517 = vunpack.c.l.b16 %v3127
    %v3518 = vunpack.c.h.b16 %v3127
    %v3519 = vunpack.c.l.b16 %v3128
    %v3520 = vunpack.c.h.b16 %v3128
    %v3521 = vunpack.c.l.b16 %v3129
    %v3522 = vunpack.c.h.b16 %v3129
    %v3523 = vunpack.c.l.b16 %v3130
    %v3524 = vunpack.c.h.b16 %v3130
    %v3525 = vunpack.c.l.b16 %v3131
    %v3526 = vunpack.c.h.b16 %v3131
    %v3527 = vunpack.c.l.b16 %v3132
    %v3528 = vunpack.c.h.b16 %v3132
    %v3529 = vpack.c.b16 %v3275, %v3273
    %v3530 = vpack.c.b16 %v3276, %v3274
    %v3531 = vpack.c.b16 %v3279, %v3277
    %v3532 = vpack.c.b16 %v3280, %v3278
    %v3533 = vpack.c.b16 %v3283, %v3281
    %v3534 = vpack.c.b16 %v3284, %v3282
    %v3535 = vpack.c.b16 %v3287, %v3285
    %v3536 = vpack.c.b16 %v3288, %v3286
    %v3537 = vpack.c.b16 %v3291, %v3289
    %v3538 = vpack.c.b16 %v3292, %v3290
    %v3539 = vpack.c.b16 %v3295, %v3293
    %v3540 = vpack.c.b16 %v3296, %v3294
    %v3541 = vpack.c.b16 %v3299, %v3297
    %v3542 = vpack.c.b16 %v3300, %v3298
    %v3543 = vpack.c.b16 %v3303, %v3301
    %v3544 = vpack.c.b16 %v3304, %v3302
    %v3545 = vpack.c.b16 %v3307, %v3305
    %v3546 = vpack.c.b16 %v3308, %v3306
    %v3547 = vpack.c.b16 %v3311, %v3309
    %v3548 = vpack.c.b16 %v3312, %v3310
    %v3549 = vpack.c.b16 %v3315, %v3313
    %v3550 = vpack.c.b16 %v3316, %v3314
    %v3551 = vpack.c.b16 %v3319, %v3317
    %v3552 = vpack.c.b16 %v3320, %v3318
    %v3553 = vpack.c.b16 %v3323, %v3321
    %v3554 = vpack.c.b16 %v3324, %v3322
    %v3555 = vpack.c.b16 %v3327, %v3325
    %v3556 = vpack.c.b16 %v3328, %v3326
    %v3557 = vpack.c.b16 %v3331, %v3329
    %v3558 = vpack.c.b16 %v3332, %v3330
    %v3559 = vpack.c.b16 %v3335, %v3333
    %v3560 = vpack.c.b16 %v3336, %v3334
    %v3561 = vpack.c.b16 %v3339, %v3337
    %v3562 = vpack.c.b16 %v3340, %v3338
    %v3563 = vpack.c.b16 %v3343, %v3341
    %v3564 = vpack.c.b16 %v3344, %v3342
    %v3565 = vpack.c.b16 %v3347, %v3345
    %v3566 = vpack.c.b16 %v3348, %v3346
    %v3567 = vpack.c.b16 %v3351, %v3349
    %v3568 = vpack.c.b16 %v3352, %v3350
    %v3569 = vpack.c.b16 %v3355, %v3353
    %v3570 = vpack.c.b16 %v3356, %v3354
    %v3571 = vpack.c.b16 %v3359, %v3357
    %v3572 = vpack.c.b16 %v3360, %v3358
    %v3573 = vpack.c.b16 %v3363, %v3361
    %v3574 = vpack.c.b16 %v3364, %v3362
    %v3575 = vpack.c.b16 %v3367, %v3365
    %v3576 = vpack.c.b16 %v3368, %v3366
    %v3577 = vpack.c.b16 %v3371, %v3369
    %v3578 = vpack.c.b16 %v3372, %v3370
    %v3579 = vpack.c.b16 %v3375, %v3373
    %v3580 = vpack.c.b16 %v3376, %v3374
    %v3581 = vpack.c.b16 %v3379, %v3377
    %v3582 = vpack.c.b16 %v3380, %v3378
    %v3583 = vpack.c.b16 %v3383, %v3381
    %v3584 = vpack.c.b16 %v3384, %v3382
    %v3585 = vpack.c.b16 %v3387, %v3385
    %v3586 = vpack.c.b16 %v3388, %v3386
    %v3587 = vpack.c.b16 %v3391, %v3389
    %v3588 = vpack.c.b16 %v3392, %v3390
    %v3589 = vpack.c.b16 %v3395, %v3393
    %v3590 = vpack.c.b16 %v3396, %v3394
    %v3591 = vpack.c.b16 %v3399, %v3397
    %v3592 = vpack.c.b16 %v3400, %v3398
    %v3593 = vpack.c.b16 %v3403, %v3401
    %v3594 = vpack.c.b16 %v3404, %v3402
    %v3595 = vpack.c.b16 %v3407, %v3405
    %v3596 = vpack.c.b16 %v3408, %v3406
    %v3597 = vpack.c.b16 %v3411, %v3409
    %v3598 = vpack.c.b16 %v3412, %v3410
    %v3599 = vpack.c.b16 %v3415, %v3413
    %v3600 = vpack.c.b16 %v3416, %v3414
    %v3601 = vpack.c.b16 %v3419, %v3417
    %v3602 = vpack.c.b16 %v3420, %v3418
    %v3603 = vpack.c.b16 %v3423, %v3421
    %v3604 = vpack.c.b16 %v3424, %v3422
    %v3605 = vpack.c.b16 %v3427, %v3425
    %v3606 = vpack.c.b16 %v3428, %v3426
    %v3607 = vpack.c.b16 %v3431, %v3429
    %v3608 = vpack.c.b16 %v3432, %v3430
    %v3609 = vpack.c.b16 %v3435, %v3433
    %v3610 = vpack.c.b16 %v3436, %v3434
    %v3611 = vpack.c.b16 %v3439, %v3437
    %v3612 = vpack.c.b16 %v3440, %v3438
    %v3613 = vpack.c.b16 %v3443, %v3441
    %v3614 = vpack.c.b16 %v3444, %v3442
    %v3615 = vpack.c.b16 %v3447, %v3445
    %v3616 = vpack.c.b16 %v3448, %v3446
    %v3617 = vpack.c.b16 %v3451, %v3449
    %v3618 = vpack.c.b16 %v3452, %v3450
    %v3619 = vpack.c.b16 %v3455, %v3453
    %v3620 = vpack.c.b16 %v3456, %v3454
    %v3621 = vpack.c.b16 %v3459, %v3457
    %v3622 = vpack.c.b16 %v3460, %v3458
    %v3623 = vpack.c.b16 %v3463, %v3461
    %v3624 = vpack.c.b16 %v3464, %v3462
    %v3625 = vpack.c.b16 %v3467, %v3465
    %v3626 = vpack.c.b16 %v3468, %v3466
    %v3627 = vpack.c.b16 %v3471, %v3469
    %v3628 = vpack.c.b16 %v3472, %v3470
    %v3629 = vpack.c.b16 %v3475, %v3473
    %v3630 = vpack.c.b16 %v3476, %v3474
    %v3631 = vpack.c.b16 %v3479, %v3477
    %v3632 = vpack.c.b16 %v3480, %v3478
    %v3633 = vpack.c.b16 %v3483, %v3481
    %v3634 = vpack.c.b16 %v3484, %v3482
    %v3635 = vpack.c.b16 %v3487, %v3485
    %v3636 = vpack.c.b16 %v3488, %v3486
    %v3637 = vpack.c.b16 %v3491, %v3489
    %v3638 = vpack.c.b16 %v3492, %v3490
    %v3639 = vpack.c.b16 %v3495, %v3493
    %v3640 = vpack.c.b16 %v3496, %v3494
    %v3641 = vpack.c.b16 %v3499, %v3497
    %v3642 = vpack.c.b16 %v3500, %v3498
    %v3643 = vpack.c.b16 %v3503, %v3501
    %v3644 = vpack.c.b16 %v3504, %v3502
    %v3645 = vpack.c.b16 %v3507, %v3505
    %v3646 = vpack.c.b16 %v3508, %v3506
    %v3647 = vpack.c.b16 %v3511, %v3509
    %v3648 = vpack.c.b16 %v3512, %v3510
    %v3649 = vpack.c.b16 %v3515, %v3513
    %v3650 = vpack.c.b16 %v3516, %v3514
    %v3651 = vpack.c.b16 %v3519, %v3517
    %v3652 = vpack.c.b16 %v3520, %v3518
    %v3653 = vpack.c.b16 %v3523, %v3521
    %v3654 = vpack.c.b16 %v3524, %v3522
    %v3655 = vpack.c.b16 %v3527, %v3525
    %v3656 = vpack.c.b16 %v3528, %v3526
    %3785 = vmatprep.subr.bf16.mxu0 %v3530
    %3786 = vmatpush1.bf16.msra.mxu0 %v3529
    %3787 = vmatprep.subr.bf16.mxu0 %v3532
    %3788 = vmatpush1.bf16.msra.mxu0 %v3531
    %3789 = vmatprep.subr.bf16.mxu0 %v3534
    %3790 = vmatpush1.bf16.msra.mxu0 %v3533
    %3791 = vmatprep.subr.bf16.mxu0 %v3536
    %3792 = vmatpush1.bf16.msra.mxu0 %v3535
    %3793 = vmatprep.subr.bf16.mxu0 %v3538
    %3794 = vmatpush1.bf16.msra.mxu0 %v3537
    %3795 = vmatprep.subr.bf16.mxu0 %v3540
    %3796 = vmatpush1.bf16.msra.mxu0 %v3539
    %3797 = vmatprep.subr.bf16.mxu0 %v3542
    %3798 = vmatpush1.bf16.msra.mxu0 %v3541
    %3799 = vmatprep.subr.bf16.mxu0 %v3544
    %3800 = vmatpush1.bf16.msra.mxu0 %v3543
    %3801 = vmatprep.subr.bf16.mxu0 %v3546
    %3802 = vmatpush1.bf16.msra.mxu0 %v3545
    %3803 = vmatprep.subr.bf16.mxu0 %v3548
    %3804 = vmatpush1.bf16.msra.mxu0 %v3547
    %3805 = vmatprep.subr.bf16.mxu0 %v3550
    %3806 = vmatpush1.bf16.msra.mxu0 %v3549
    %3807 = vmatprep.subr.bf16.mxu0 %v3552
    %3808 = vmatpush1.bf16.msra.mxu0 %v3551
    %3809 = vmatprep.subr.bf16.mxu0 %v3554
    %3810 = vmatpush1.bf16.msra.mxu0 %v3553
    %3811 = vmatprep.subr.bf16.mxu0 %v3556
    %3812 = vmatpush1.bf16.msra.mxu0 %v3555
    %3813 = vmatprep.subr.bf16.mxu0 %v3558
    %3814 = vmatpush1.bf16.msra.mxu0 %v3557
    %3815 = vmatprep.subr.bf16.mxu0 %v3560
    %3816 = vmatpush1.bf16.msra.mxu0 %v3559
    %3817 = vmatprep.mubr.bf16.mxu0 %v2998
    %3818 = vmatmul.mubr.bf16.gmra.mrb[0].mxu0 %v2997
    %v3819 = vpop.f32.mrb[0].mxu0
    %v3820 = vadd.f32 %v3138, %v3819
    %v3821 = vpop.f32.mrb[0].mxu0
    %v3822 = vadd.f32 %v3142, %v3821
    %v3823 = vpop.f32.mrb[0].mxu0
    %v3824 = vpop.f32.mrb[0].mxu0
    %3825 = vdwg.mxu0
    %3826 = vmatprep.subr.bf16.mxu0 %v3562
    %3827 = vmatpush1.bf16.msra.mxu0 %v3561
    %3828 = vmatprep.subr.bf16.mxu0 %v3564
    %3829 = vmatpush1.bf16.msra.mxu0 %v3563
    %3830 = vmatprep.subr.bf16.mxu0 %v3566
    %3831 = vmatpush1.bf16.msra.mxu0 %v3565
    %3832 = vmatprep.subr.bf16.mxu0 %v3568
    %3833 = vmatpush1.bf16.msra.mxu0 %v3567
    %3834 = vmatprep.subr.bf16.mxu0 %v3570
    %3835 = vmatpush1.bf16.msra.mxu0 %v3569
    %3836 = vmatprep.subr.bf16.mxu0 %v3572
    %3837 = vmatpush1.bf16.msra.mxu0 %v3571
    %3838 = vmatprep.subr.bf16.mxu0 %v3574
    %3839 = vmatpush1.bf16.msra.mxu0 %v3573
    %3840 = vmatprep.subr.bf16.mxu0 %v3576
    %3841 = vmatpush1.bf16.msra.mxu0 %v3575
    %3842 = vmatprep.subr.bf16.mxu0 %v3578
    %3843 = vmatpush1.bf16.msra.mxu0 %v3577
    %3844 = vmatprep.subr.bf16.mxu0 %v3580
    %3845 = vmatpush1.bf16.msra.mxu0 %v3579
    %3846 = vmatprep.subr.bf16.mxu0 %v3582
    %3847 = vmatpush1.bf16.msra.mxu0 %v3581
    %3848 = vmatprep.subr.bf16.mxu0 %v3584
    %3849 = vmatpush1.bf16.msra.mxu0 %v3583
    %3850 = vmatprep.subr.bf16.mxu0 %v3586
    %3851 = vmatpush1.bf16.msra.mxu0 %v3585
    %3852 = vmatprep.subr.bf16.mxu0 %v3588
    %3853 = vmatpush1.bf16.msra.mxu0 %v3587
    %3854 = vmatprep.subr.bf16.mxu0 %v3590
    %3855 = vmatpush1.bf16.msra.mxu0 %v3589
    %3856 = vmatprep.subr.bf16.mxu0 %v3592
    %3857 = vmatpush1.bf16.msra.mxu0 %v3591
    %3858 = vmatprep.mubr.bf16.mxu0 %v3000
    %3859 = vmatmul.mubr.bf16.gmra.mrb[0].mxu0 %v2999
    %v3860 = vpop.f32.mrb[0].mxu0
    %v3861 = vadd.f32 %v3820, %v3860
    %v3862 = vpop.f32.mrb[0].mxu0
    %v3863 = vadd.f32 %v3822, %v3862
    %v3864 = vpop.f32.mrb[0].mxu0
    %v3865 = vpop.f32.mrb[0].mxu0
    %3866 = vdwg.mxu0
    %3867 = vmatprep.subr.bf16.mxu0 %v3594
    %3868 = vmatpush1.bf16.msra.mxu0 %v3593
    %3869 = vmatprep.subr.bf16.mxu0 %v3596
    %3870 = vmatpush1.bf16.msra.mxu0 %v3595
    %3871 = vmatprep.subr.bf16.mxu0 %v3598
    %3872 = vmatpush1.bf16.msra.mxu0 %v3597
    %3873 = vmatprep.subr.bf16.mxu0 %v3600
    %3874 = vmatpush1.bf16.msra.mxu0 %v3599
    %3875 = vmatprep.subr.bf16.mxu0 %v3602
    %3876 = vmatpush1.bf16.msra.mxu0 %v3601
    %3877 = vmatprep.subr.bf16.mxu0 %v3604
    %3878 = vmatpush1.bf16.msra.mxu0 %v3603
    %3879 = vmatprep.subr.bf16.mxu0 %v3606
    %3880 = vmatpush1.bf16.msra.mxu0 %v3605
    %3881 = vmatprep.subr.bf16.mxu0 %v3608
    %3882 = vmatpush1.bf16.msra.mxu0 %v3607
    %3883 = vmatprep.subr.bf16.mxu0 %v3610
    %3884 = vmatpush1.bf16.msra.mxu0 %v3609
    %3885 = vmatprep.subr.bf16.mxu0 %v3612
    %3886 = vmatpush1.bf16.msra.mxu0 %v3611
    %3887 = vmatprep.subr.bf16.mxu0 %v3614
    %3888 = vmatpush1.bf16.msra.mxu0 %v3613
    %3889 = vmatprep.subr.bf16.mxu0 %v3616
    %3890 = vmatpush1.bf16.msra.mxu0 %v3615
    %3891 = vmatprep.subr.bf16.mxu0 %v3618
    %3892 = vmatpush1.bf16.msra.mxu0 %v3617
    %3893 = vmatprep.subr.bf16.mxu0 %v3620
    %3894 = vmatpush1.bf16.msra.mxu0 %v3619
    %3895 = vmatprep.subr.bf16.mxu0 %v3622
    %3896 = vmatpush1.bf16.msra.mxu0 %v3621
    %3897 = vmatprep.subr.bf16.mxu0 %v3624
    %3898 = vmatpush1.bf16.msra.mxu0 %v3623
    %3899 = vmatprep.mubr.bf16.mxu0 %v3002
    %3900 = vmatmul.mubr.bf16.gmra.mrb[0].mxu0 %v3001
    %v3901 = vpop.f32.mrb[0].mxu0
    %v3902 = vadd.f32 %v3861, %v3901
    %v3903 = vpop.f32.mrb[0].mxu0
    %v3904 = vadd.f32 %v3863, %v3903
    %v3905 = vpop.f32.mrb[0].mxu0
    %v3906 = vpop.f32.mrb[0].mxu0
    %3907 = vdwg.mxu0
    %3908 = vmatprep.subr.bf16.mxu0 %v3626
    %3909 = vmatpush1.bf16.msra.mxu0 %v3625
    %3910 = vmatprep.subr.bf16.mxu0 %v3628
    %3911 = vmatpush1.bf16.msra.mxu0 %v3627
    %3912 = vmatprep.subr.bf16.mxu0 %v3630
    %3913 = vmatpush1.bf16.msra.mxu0 %v3629
    %3914 = vmatprep.subr.bf16.mxu0 %v3632
    %3915 = vmatpush1.bf16.msra.mxu0 %v3631
    %3916 = vmatprep.subr.bf16.mxu0 %v3634
    %3917 = vmatpush1.bf16.msra.mxu0 %v3633
    %3918 = vmatprep.subr.bf16.mxu0 %v3636
    %3919 = vmatpush1.bf16.msra.mxu0 %v3635
    %3920 = vmatprep.subr.bf16.mxu0 %v3638
    %3921 = vmatpush1.bf16.msra.mxu0 %v3637
    %3922 = vmatprep.subr.bf16.mxu0 %v3640
    %3923 = vmatpush1.bf16.msra.mxu0 %v3639
    %3924 = vmatprep.subr.bf16.mxu0 %v3642
    %3925 = vmatpush1.bf16.msra.mxu0 %v3641
    %3926 = vmatprep.subr.bf16.mxu0 %v3644
    %3927 = vmatpush1.bf16.msra.mxu0 %v3643
    %3928 = vmatprep.subr.bf16.mxu0 %v3646
    %3929 = vmatpush1.bf16.msra.mxu0 %v3645
    %3930 = vmatprep.subr.bf16.mxu0 %v3648
    %3931 = vmatpush1.bf16.msra.mxu0 %v3647
    %3932 = vmatprep.subr.bf16.mxu0 %v3650
    %3933 = vmatpush1.bf16.msra.mxu0 %v3649
    %3934 = vmatprep.subr.bf16.mxu0 %v3652
    %3935 = vmatpush1.bf16.msra.mxu0 %v3651
    %3936 = vmatprep.subr.bf16.mxu0 %v3654
    %3937 = vmatpush1.bf16.msra.mxu0 %v3653
    %3938 = vmatprep.subr.bf16.mxu0 %v3656
    %3939 = vmatpush1.bf16.msra.mxu0 %v3655
    %3940 = vmatprep.mubr.bf16.mxu0 %v3004
    %3941 = vmatmul.mubr.bf16.gmra.mrb[0].mxu0 %v3003
    %v3942 = vpop.f32.mrb[0].mxu0
    %v3943 = vadd.f32 %v3902, %v3942
    %v3944 = vpop.f32.mrb[0].mxu0
    %v3945 = vadd.f32 %v3904, %v3944
    %v3946 = vpop.f32.mrb[0].mxu0
    %v3947 = vpop.f32.mrb[0].mxu0
    %3948 = vdwg.mxu0
    %v3949 = vtanh.pop %v3943
    %v3950 = vxor.u32 %v3945, 2147483648
    %v3951 = vmul.f32 %v3950, 1.442695
    %v3952 = vpow.pop %v3951
    %v3953 = vadd.f32 %v3952, 1.0
    %v3954 = vrcp.pop %v3953
    %v3955 = vmul.f32 1.0, %v3954
    %v3956 = vmul.f32 %v3949, %v3955
    %v3957 = vld [vmem:[#allocation12] sm:$0x1]
    %v3959 = vlaneseq
    %v3960 = vshrl.u32 %v3959, 7
    %v3961 = vsub.s32 0, %v3960
    %v3962 = vrot.slane %v3957, %v3961
    %v3964 = vmul.f32 %v3956, %v3962
    %3965 = vadd.xlane.f32.xlu0 %v3964
    %v3966 = vpop.xlane.xlu0 %3965
    %v3967 = vld [vmem:[#allocation2] sm:$0x1]
    %v3969 = vlaneseq
    %v3970 = vshrl.u32 %v3969, 7
    %v3971 = vsub.s32 0, %v3970
    %v3972 = vrot.slane %v3967, %v3971
    %v3974 = vadd.f32 %v3966, %v3972
    %vm3975 = vcmask 7168
    %v3976 = vsel %vm3975, %v3974, -inf
    %v3977 = vrot.slane %v3976, 4
    %v3978 = vmax.f32 %v3976, %v3977
    %v3979 = vrot.slane %v3978, 2
    %v3980 = vmax.f32 %v3978, %v3979
    %v3981 = vrot.slane %v3980, 1
    %v3982 = vmax.f32 %v3980, %v3981
    %v3983 = vsub.f32 %v3974, %v3982
    %v3984 = vmul.f32 %v3983, 1.442695
    %v3985 = vpow.pop %v3984
    %v3986 = vsel %vm3975, %v3985, 0.0
    %v3987 = vrot.slane %v3986, 4
    %v3988 = vadd.f32 %v3986, %v3987
    %v3989 = vrot.slane %v3988, 2
    %v3990 = vadd.f32 %v3988, %v3989
    %v3991 = vrot.slane %v3990, 1
    %v3992 = vadd.f32 %v3990, %v3991
    %v3993 = vrcp.pop %v3992
    %v3994 = vmul.f32 %v3985, %v3993
    %3996 = vset.pattern.permute.xlu0 0
    %3997 = vperm.xlu0 %3996, %v3994
    %v3998 = vpop.permute.xlu0 %3997
    %v4000 = vmul.f32 %v3998, %v2622
    %v4001 = vmul.f32 %v3998, %v2624
    %v4002 = vmul.f32 %v3998, %v2745
    %v4003 = vmul.f32 %v3998, %v2747
    %v4004 = vmul.f32 %v3998, %v2868
    %v4005 = vmul.f32 %v3998, %v2870
    %v4006 = vmul.f32 %v3998, %v2991
    %v4007 = vmul.f32 %v3998, %v2993
    %v4008 = vrot.slane %v4000, 4
    %v4009 = vadd.f32 %v4000, %v4008
    %v4010 = vrot.slane %v4009, 2
    %v4011 = vadd.f32 %v4009, %v4010
    %v4012 = vrot.slane %v4011, 1
    %v4013 = vadd.f32 %v4011, %v4012
    %v4014 = vrot.slane %v4001, 4
    %v4015 = vadd.f32 %v4001, %v4014
    %v4016 = vrot.slane %v4015, 2
    %v4017 = vadd.f32 %v4015, %v4016
    %v4018 = vrot.slane %v4017, 1
    %v4019 = vadd.f32 %v4017, %v4018
    %v4020 = vrot.slane %v4002, 4
    %v4021 = vadd.f32 %v4002, %v4020
    %v4022 = vrot.slane %v4021, 2
    %v4023 = vadd.f32 %v4021, %v4022
    %v4024 = vrot.slane %v4023, 1
    %v4025 = vadd.f32 %v4023, %v4024
    %v4026 = vrot.slane %v4003, 4
    %v4027 = vadd.f32 %v4003, %v4026
    %v4028 = vrot.slane %v4027, 2
    %v4029 = vadd.f32 %v4027, %v4028
    %v4030 = vrot.slane %v4029, 1
    %v4031 = vadd.f32 %v4029, %v4030
    %v4032 = vrot.slane %v4004, 4
    %v4033 = vadd.f32 %v4004, %v4032
    %v4034 = vrot.slane %v4033, 2
    %v4035 = vadd.f32 %v4033, %v4034
    %v4036 = vrot.slane %v4035, 1
    %v4037 = vadd.f32 %v4035, %v4036
    %v4038 = vrot.slane %v4005, 4
    %v4039 = vadd.f32 %v4005, %v4038
    %v4040 = vrot.slane %v4039, 2
    %v4041 = vadd.f32 %v4039, %v4040
    %v4042 = vrot.slane %v4041, 1
    %v4043 = vadd.f32 %v4041, %v4042
    %v4044 = vrot.slane %v4006, 4
    %v4045 = vadd.f32 %v4006, %v4044
    %v4046 = vrot.slane %v4045, 2
    %v4047 = vadd.f32 %v4045, %v4046
    %v4048 = vrot.slane %v4047, 1
    %v4049 = vadd.f32 %v4047, %v4048
    %v4050 = vrot.slane %v4007, 4
    %v4051 = vadd.f32 %v4007, %v4050
    %v4052 = vrot.slane %v4051, 2
    %v4053 = vadd.f32 %v4051, %v4052
    %v4054 = vrot.slane %v4053, 1
    %v4055 = vadd.f32 %v4053, %v4054
    %v4056 = vpack.c.bf16 %v4013, %v4013
    %v4057 = vpack.c.bf16 %v4019, %v4019
    %v4058 = vpack.c.bf16 %v4025, %v4025
    %v4059 = vpack.c.bf16 %v4031, %v4031
    %v4060 = vpack.c.bf16 %v4037, %v4037
    %v4061 = vpack.c.bf16 %v4043, %v4043
    %v4062 = vpack.c.bf16 %v4049, %v4049
    %v4063 = vpack.c.bf16 %v4055, %v4055
    %v4064 = vld [vmem:[#allocation14] sm:$0xf]
    %v4065 = vld [vmem:[#allocation14 + $0x4] sm:$0xf]
    %v4066 = vld [vmem:[#allocation14 + $0x8] sm:$0xf]
    %v4067 = vld [vmem:[#allocation14 + $0xc] sm:$0xf]
    %v4068 = vld [vmem:[#allocation14 + $0x10] sm:$0xf]
    %v4069 = vld [vmem:[#allocation14 + $0x14] sm:$0xf]
    %v4070 = vld [vmem:[#allocation14 + $0x18] sm:$0xf]
    %v4071 = vld [vmem:[#allocation14 + $0x1c] sm:$0xf]
    %v4072 = vld [vmem:[#allocation14 + $0x20] sm:$0xf]
    %v4073 = vld [vmem:[#allocation14 + $0x24] sm:$0xf]
    %v4074 = vld [vmem:[#allocation14 + $0x28] sm:$0xf]
    %v4075 = vld [vmem:[#allocation14 + $0x2c] sm:$0xf]
    %v4076 = vld [vmem:[#allocation14 + $0x30] sm:$0xf]
    %v4077 = vld [vmem:[#allocation14 + $0x34] sm:$0xf]
    %v4078 = vld [vmem:[#allocation14 + $0x38] sm:$0xf]
    %v4079 = vld [vmem:[#allocation14 + $0x3c] sm:$0xf]
    %v4080 = vld [vmem:[#allocation14 + $0x40] sm:$0xf]
    %v4081 = vld [vmem:[#allocation14 + $0x44] sm:$0xf]
    %v4082 = vld [vmem:[#allocation14 + $0x48] sm:$0xf]
    %v4083 = vld [vmem:[#allocation14 + $0x4c] sm:$0xf]
    %v4084 = vld [vmem:[#allocation14 + $0x50] sm:$0xf]
    %v4085 = vld [vmem:[#allocation14 + $0x54] sm:$0xf]
    %v4086 = vld [vmem:[#allocation14 + $0x58] sm:$0xf]
    %v4087 = vld [vmem:[#allocation14 + $0x5c] sm:$0xf]
    %v4088 = vld [vmem:[#allocation14 + $0x60] sm:$0xf]
    %v4089 = vld [vmem:[#allocation14 + $0x64] sm:$0xf]
    %v4090 = vld [vmem:[#allocation14 + $0x68] sm:$0xf]
    %v4091 = vld [vmem:[#allocation14 + $0x6c] sm:$0xf]
    %v4092 = vld [vmem:[#allocation14 + $0x70] sm:$0xf]
    %v4093 = vld [vmem:[#allocation14 + $0x74] sm:$0xf]
    %v4094 = vld [vmem:[#allocation14 + $0x78] sm:$0xf]
    %v4095 = vld [vmem:[#allocation14 + $0x7c] sm:$0xf]
    %v4096 = vld [vmem:[#allocation14 + $0x80] sm:$0xf]
    %v4097 = vld [vmem:[#allocation14 + $0x84] sm:$0xf]
    %v4098 = vld [vmem:[#allocation14 + $0x88] sm:$0xf]
    %v4099 = vld [vmem:[#allocation14 + $0x8c] sm:$0xf]
    %v4100 = vld [vmem:[#allocation14 + $0x90] sm:$0xf]
    %v4101 = vld [vmem:[#allocation14 + $0x94] sm:$0xf]
    %v4102 = vld [vmem:[#allocation14 + $0x98] sm:$0xf]
    %v4103 = vld [vmem:[#allocation14 + $0x9c] sm:$0xf]
    %v4104 = vld [vmem:[#allocation14 + $0xa0] sm:$0xf]
    %v4105 = vld [vmem:[#allocation14 + $0xa4] sm:$0xf]
    %v4106 = vld [vmem:[#allocation14 + $0xa8] sm:$0xf]
    %v4107 = vld [vmem:[#allocation14 + $0xac] sm:$0xf]
    %v4108 = vld [vmem:[#allocation14 + $0xb0] sm:$0xf]
    %v4109 = vld [vmem:[#allocation14 + $0xb4] sm:$0xf]
    %v4110 = vld [vmem:[#allocation14 + $0xb8] sm:$0xf]
    %v4111 = vld [vmem:[#allocation14 + $0xbc] sm:$0xf]
    %v4112 = vld [vmem:[#allocation14 + $0xc0] sm:$0xf]
    %v4113 = vld [vmem:[#allocation14 + $0xc4] sm:$0xf]
    %v4114 = vld [vmem:[#allocation14 + $0xc8] sm:$0xf]
    %v4115 = vld [vmem:[#allocation14 + $0xcc] sm:$0xf]
    %v4116 = vld [vmem:[#allocation14 + $0xd0] sm:$0xf]
    %v4117 = vld [vmem:[#allocation14 + $0xd4] sm:$0xf]
    %v4118 = vld [vmem:[#allocation14 + $0xd8] sm:$0xf]
    %v4119 = vld [vmem:[#allocation14 + $0xdc] sm:$0xf]
    %v4120 = vld [vmem:[#allocation14 + $0xe0] sm:$0xf]
    %v4121 = vld [vmem:[#allocation14 + $0xe4] sm:$0xf]
    %v4122 = vld [vmem:[#allocation14 + $0xe8] sm:$0xf]
    %v4123 = vld [vmem:[#allocation14 + $0xec] sm:$0xf]
    %v4124 = vld [vmem:[#allocation14 + $0xf0] sm:$0xf]
    %v4125 = vld [vmem:[#allocation14 + $0xf4] sm:$0xf]
    %v4126 = vld [vmem:[#allocation14 + $0xf8] sm:$0xf]
    %v4127 = vld [vmem:[#allocation14 + $0xfc] sm:$0xf]
    %v4128 = vld [vmem:[#allocation14 + $0x100] sm:$0xf]
    %v4129 = vld [vmem:[#allocation14 + $0x104] sm:$0xf]
    %v4130 = vld [vmem:[#allocation14 + $0x108] sm:$0xf]
    %v4131 = vld [vmem:[#allocation14 + $0x10c] sm:$0xf]
    %v4132 = vld [vmem:[#allocation14 + $0x110] sm:$0xf]
    %v4133 = vld [vmem:[#allocation14 + $0x114] sm:$0xf]
    %v4134 = vld [vmem:[#allocation14 + $0x118] sm:$0xf]
    %v4135 = vld [vmem:[#allocation14 + $0x11c] sm:$0xf]
    %v4136 = vld [vmem:[#allocation14 + $0x120] sm:$0xf]
    %v4137 = vld [vmem:[#allocation14 + $0x124] sm:$0xf]
    %v4138 = vld [vmem:[#allocation14 + $0x128] sm:$0xf]
    %v4139 = vld [vmem:[#allocation14 + $0x12c] sm:$0xf]
    %v4140 = vld [vmem:[#allocation14 + $0x130] sm:$0xf]
    %v4141 = vld [vmem:[#allocation14 + $0x134] sm:$0xf]
    %v4142 = vld [vmem:[#allocation14 + $0x138] sm:$0xf]
    %v4143 = vld [vmem:[#allocation14 + $0x13c] sm:$0xf]
    %v4144 = vld [vmem:[#allocation14 + $0x140] sm:$0xf]
    %v4145 = vld [vmem:[#allocation14 + $0x144] sm:$0xf]
    %v4146 = vld [vmem:[#allocation14 + $0x148] sm:$0xf]
    %v4147 = vld [vmem:[#allocation14 + $0x14c] sm:$0xf]
    %v4148 = vld [vmem:[#allocation14 + $0x150] sm:$0xf]
    %v4149 = vld [vmem:[#allocation14 + $0x154] sm:$0xf]
    %v4150 = vld [vmem:[#allocation14 + $0x158] sm:$0xf]
    %v4151 = vld [vmem:[#allocation14 + $0x15c] sm:$0xf]
    %v4152 = vld [vmem:[#allocation14 + $0x160] sm:$0xf]
    %v4153 = vld [vmem:[#allocation14 + $0x164] sm:$0xf]
    %v4154 = vld [vmem:[#allocation14 + $0x168] sm:$0xf]
    %v4155 = vld [vmem:[#allocation14 + $0x16c] sm:$0xf]
    %v4156 = vld [vmem:[#allocation14 + $0x170] sm:$0xf]
    %v4157 = vld [vmem:[#allocation14 + $0x174] sm:$0xf]
    %v4158 = vld [vmem:[#allocation14 + $0x178] sm:$0xf]
    %v4159 = vld [vmem:[#allocation14 + $0x17c] sm:$0xf]
    %v4160 = vld [vmem:[#allocation14 + $0x180] sm:$0xf]
    %v4161 = vld [vmem:[#allocation14 + $0x184] sm:$0xf]
    %v4162 = vld [vmem:[#allocation14 + $0x188] sm:$0xf]
    %v4163 = vld [vmem:[#allocation14 + $0x18c] sm:$0xf]
    %v4164 = vld [vmem:[#allocation14 + $0x190] sm:$0xf]
    %v4165 = vld [vmem:[#allocation14 + $0x194] sm:$0xf]
    %v4166 = vld [vmem:[#allocation14 + $0x198] sm:$0xf]
    %v4167 = vld [vmem:[#allocation14 + $0x19c] sm:$0xf]
    %v4168 = vld [vmem:[#allocation14 + $0x1a0] sm:$0xf]
    %v4169 = vld [vmem:[#allocation14 + $0x1a4] sm:$0xf]
    %v4170 = vld [vmem:[#allocation14 + $0x1a8] sm:$0xf]
    %v4171 = vld [vmem:[#allocation14 + $0x1ac] sm:$0xf]
    %v4172 = vld [vmem:[#allocation14 + $0x1b0] sm:$0xf]
    %v4173 = vld [vmem:[#allocation14 + $0x1b4] sm:$0xf]
    %v4174 = vld [vmem:[#allocation14 + $0x1b8] sm:$0xf]
    %v4175 = vld [vmem:[#allocation14 + $0x1bc] sm:$0xf]
    %v4176 = vld [vmem:[#allocation14 + $0x1c0] sm:$0xf]
    %v4177 = vld [vmem:[#allocation14 + $0x1c4] sm:$0xf]
    %v4178 = vld [vmem:[#allocation14 + $0x1c8] sm:$0xf]
    %v4179 = vld [vmem:[#allocation14 + $0x1cc] sm:$0xf]
    %v4180 = vld [vmem:[#allocation14 + $0x1d0] sm:$0xf]
    %v4181 = vld [vmem:[#allocation14 + $0x1d4] sm:$0xf]
    %v4182 = vld [vmem:[#allocation14 + $0x1d8] sm:$0xf]
    %v4183 = vld [vmem:[#allocation14 + $0x1dc] sm:$0xf]
    %v4184 = vld [vmem:[#allocation14 + $0x1e0] sm:$0xf]
    %v4185 = vld [vmem:[#allocation14 + $0x1e4] sm:$0xf]
    %v4186 = vld [vmem:[#allocation14 + $0x1e8] sm:$0xf]
    %v4187 = vld [vmem:[#allocation14 + $0x1ec] sm:$0xf]
    %v4188 = vld [vmem:[#allocation14 + $0x1f0] sm:$0xf]
    %v4189 = vld [vmem:[#allocation14 + $0x1f4] sm:$0xf]
    %v4190 = vld [vmem:[#allocation14 + $0x1f8] sm:$0xf]
    %v4191 = vld [vmem:[#allocation14 + $0x1fc] sm:$0xf]
    %v4192 = vld [vmem:[#allocation15] sm:$0x1]
    %v4321 = vunpack.c.l.b16 %v4064
    %v4322 = vunpack.c.l.b16 %v4065
    %v4323 = vunpack.c.l.b16 %v4066
    %v4324 = vunpack.c.l.b16 %v4067
    %v4325 = vunpack.c.l.b16 %v4068
    %v4326 = vunpack.c.l.b16 %v4069
    %v4327 = vunpack.c.l.b16 %v4070
    %v4328 = vunpack.c.l.b16 %v4071
    %v4329 = vunpack.c.l.b16 %v4072
    %v4330 = vunpack.c.l.b16 %v4073
    %v4331 = vunpack.c.l.b16 %v4074
    %v4332 = vunpack.c.l.b16 %v4075
    %v4333 = vunpack.c.l.b16 %v4076
    %v4334 = vunpack.c.l.b16 %v4077
    %v4335 = vunpack.c.l.b16 %v4078
    %v4336 = vunpack.c.l.b16 %v4079
    %v4337 = vunpack.c.l.b16 %v4080
    %v4338 = vunpack.c.l.b16 %v4081
    %v4339 = vunpack.c.l.b16 %v4082
    %v4340 = vunpack.c.l.b16 %v4083
    %v4341 = vunpack.c.l.b16 %v4084
    %v4342 = vunpack.c.l.b16 %v4085
    %v4343 = vunpack.c.l.b16 %v4086
    %v4344 = vunpack.c.l.b16 %v4087
    %v4345 = vunpack.c.l.b16 %v4088
    %v4346 = vunpack.c.l.b16 %v4089
    %v4347 = vunpack.c.l.b16 %v4090
    %v4348 = vunpack.c.l.b16 %v4091
    %v4349 = vunpack.c.l.b16 %v4092
    %v4350 = vunpack.c.l.b16 %v4093
    %v4351 = vunpack.c.l.b16 %v4094
    %v4352 = vunpack.c.l.b16 %v4095
    %v4353 = vunpack.c.l.b16 %v4096
    %v4354 = vunpack.c.l.b16 %v4097
    %v4355 = vunpack.c.l.b16 %v4098
    %v4356 = vunpack.c.l.b16 %v4099
    %v4357 = vunpack.c.l.b16 %v4100
    %v4358 = vunpack.c.l.b16 %v4101
    %v4359 = vunpack.c.l.b16 %v4102
    %v4360 = vunpack.c.l.b16 %v4103
    %v4361 = vunpack.c.l.b16 %v4104
    %v4362 = vunpack.c.l.b16 %v4105
    %v4363 = vunpack.c.l.b16 %v4106
    %v4364 = vunpack.c.l.b16 %v4107
    %v4365 = vunpack.c.l.b16 %v4108
    %v4366 = vunpack.c.l.b16 %v4109
    %v4367 = vunpack.c.l.b16 %v4110
    %v4368 = vunpack.c.l.b16 %v4111
    %v4369 = vunpack.c.l.b16 %v4112
    %v4370 = vunpack.c.l.b16 %v4113
    %v4371 = vunpack.c.l.b16 %v4114
    %v4372 = vunpack.c.l.b16 %v4115
    %v4373 = vunpack.c.l.b16 %v4116
    %v4374 = vunpack.c.l.b16 %v4117
    %v4375 = vunpack.c.l.b16 %v4118
    %v4376 = vunpack.c.l.b16 %v4119
    %v4377 = vunpack.c.l.b16 %v4120
    %v4378 = vunpack.c.l.b16 %v4121
    %v4379 = vunpack.c.l.b16 %v4122
    %v4380 = vunpack.c.l.b16 %v4123
    %v4381 = vunpack.c.l.b16 %v4124
    %v4382 = vunpack.c.l.b16 %v4125
    %v4383 = vunpack.c.l.b16 %v4126
    %v4384 = vunpack.c.l.b16 %v4127
    %v4385 = vunpack.c.l.b16 %v4128
    %v4386 = vunpack.c.l.b16 %v4129
    %v4387 = vunpack.c.l.b16 %v4130
    %v4388 = vunpack.c.l.b16 %v4131
    %v4389 = vunpack.c.l.b16 %v4132
    %v4390 = vunpack.c.l.b16 %v4133
    %v4391 = vunpack.c.l.b16 %v4134
    %v4392 = vunpack.c.l.b16 %v4135
    %v4393 = vunpack.c.l.b16 %v4136
    %v4394 = vunpack.c.l.b16 %v4137
    %v4395 = vunpack.c.l.b16 %v4138
    %v4396 = vunpack.c.l.b16 %v4139
    %v4397 = vunpack.c.l.b16 %v4140
    %v4398 = vunpack.c.l.b16 %v4141
    %v4399 = vunpack.c.l.b16 %v4142
    %v4400 = vunpack.c.l.b16 %v4143
    %v4401 = vunpack.c.l.b16 %v4144
    %v4402 = vunpack.c.l.b16 %v4145
    %v4403 = vunpack.c.l.b16 %v4146
    %v4404 = vunpack.c.l.b16 %v4147
    %v4405 = vunpack.c.l.b16 %v4148
    %v4406 = vunpack.c.l.b16 %v4149
    %v4407 = vunpack.c.l.b16 %v4150
    %v4408 = vunpack.c.l.b16 %v4151
    %v4409 = vunpack.c.l.b16 %v4152
    %v4410 = vunpack.c.l.b16 %v4153
    %v4411 = vunpack.c.l.b16 %v4154
    %v4412 = vunpack.c.l.b16 %v4155
    %v4413 = vunpack.c.l.b16 %v4156
    %v4414 = vunpack.c.l.b16 %v4157
    %v4415 = vunpack.c.l.b16 %v4158
    %v4416 = vunpack.c.l.b16 %v4159
    %v4417 = vunpack.c.l.b16 %v4160
    %v4418 = vunpack.c.l.b16 %v4161
    %v4419 = vunpack.c.l.b16 %v4162
    %v4420 = vunpack.c.l.b16 %v4163
    %v4421 = vunpack.c.l.b16 %v4164
    %v4422 = vunpack.c.l.b16 %v4165
    %v4423 = vunpack.c.l.b16 %v4166
    %v4424 = vunpack.c.l.b16 %v4167
    %v4425 = vunpack.c.l.b16 %v4168
    %v4426 = vunpack.c.l.b16 %v4169
    %v4427 = vunpack.c.l.b16 %v4170
    %v4428 = vunpack.c.l.b16 %v4171
    %v4429 = vunpack.c.l.b16 %v4172
    %v4430 = vunpack.c.l.b16 %v4173
    %v4431 = vunpack.c.l.b16 %v4174
    %v4432 = vunpack.c.l.b16 %v4175
    %v4433 = vunpack.c.l.b16 %v4176
    %v4434 = vunpack.c.l.b16 %v4177
    %v4435 = vunpack.c.l.b16 %v4178
    %v4436 = vunpack.c.l.b16 %v4179
    %v4437 = vunpack.c.l.b16 %v4180
    %v4438 = vunpack.c.l.b16 %v4181
    %v4439 = vunpack.c.l.b16 %v4182
    %v4440 = vunpack.c.l.b16 %v4183
    %v4441 = vunpack.c.l.b16 %v4184
    %v4442 = vunpack.c.l.b16 %v4185
    %v4443 = vunpack.c.l.b16 %v4186
    %v4444 = vunpack.c.l.b16 %v4187
    %v4445 = vunpack.c.l.b16 %v4188
    %v4446 = vunpack.c.l.b16 %v4189
    %v4447 = vunpack.c.l.b16 %v4190
    %v4448 = vunpack.c.l.b16 %v4191
    %v4449 = vpack.c.b16 %v4322, %v4321
    %v4450 = vpack.c.b16 %v4324, %v4323
    %v4451 = vpack.c.b16 %v4326, %v4325
    %v4452 = vpack.c.b16 %v4328, %v4327
    %v4453 = vpack.c.b16 %v4330, %v4329
    %v4454 = vpack.c.b16 %v4332, %v4331
    %v4455 = vpack.c.b16 %v4334, %v4333
    %v4456 = vpack.c.b16 %v4336, %v4335
    %v4457 = vpack.c.b16 %v4338, %v4337
    %v4458 = vpack.c.b16 %v4340, %v4339
    %v4459 = vpack.c.b16 %v4342, %v4341
    %v4460 = vpack.c.b16 %v4344, %v4343
    %v4461 = vpack.c.b16 %v4346, %v4345
    %v4462 = vpack.c.b16 %v4348, %v4347
    %v4463 = vpack.c.b16 %v4350, %v4349
    %v4464 = vpack.c.b16 %v4352, %v4351
    %v4465 = vpack.c.b16 %v4354, %v4353
    %v4466 = vpack.c.b16 %v4356, %v4355
    %v4467 = vpack.c.b16 %v4358, %v4357
    %v4468 = vpack.c.b16 %v4360, %v4359
    %v4469 = vpack.c.b16 %v4362, %v4361
    %v4470 = vpack.c.b16 %v4364, %v4363
    %v4471 = vpack.c.b16 %v4366, %v4365
    %v4472 = vpack.c.b16 %v4368, %v4367
    %v4473 = vpack.c.b16 %v4370, %v4369
    %v4474 = vpack.c.b16 %v4372, %v4371
    %v4475 = vpack.c.b16 %v4374, %v4373
    %v4476 = vpack.c.b16 %v4376, %v4375
    %v4477 = vpack.c.b16 %v4378, %v4377
    %v4478 = vpack.c.b16 %v4380, %v4379
    %v4479 = vpack.c.b16 %v4382, %v4381
    %v4480 = vpack.c.b16 %v4384, %v4383
    %v4481 = vpack.c.b16 %v4386, %v4385
    %v4482 = vpack.c.b16 %v4388, %v4387
    %v4483 = vpack.c.b16 %v4390, %v4389
    %v4484 = vpack.c.b16 %v4392, %v4391
    %v4485 = vpack.c.b16 %v4394, %v4393
    %v4486 = vpack.c.b16 %v4396, %v4395
    %v4487 = vpack.c.b16 %v4398, %v4397
    %v4488 = vpack.c.b16 %v4400, %v4399
    %v4489 = vpack.c.b16 %v4402, %v4401
    %v4490 = vpack.c.b16 %v4404, %v4403
    %v4491 = vpack.c.b16 %v4406, %v4405
    %v4492 = vpack.c.b16 %v4408, %v4407
    %v4493 = vpack.c.b16 %v4410, %v4409
    %v4494 = vpack.c.b16 %v4412, %v4411
    %v4495 = vpack.c.b16 %v4414, %v4413
    %v4496 = vpack.c.b16 %v4416, %v4415
    %v4497 = vpack.c.b16 %v4418, %v4417
    %v4498 = vpack.c.b16 %v4420, %v4419
    %v4499 = vpack.c.b16 %v4422, %v4421
    %v4500 = vpack.c.b16 %v4424, %v4423
    %v4501 = vpack.c.b16 %v4426, %v4425
    %v4502 = vpack.c.b16 %v4428, %v4427
    %v4503 = vpack.c.b16 %v4430, %v4429
    %v4504 = vpack.c.b16 %v4432, %v4431
    %v4505 = vpack.c.b16 %v4434, %v4433
    %v4506 = vpack.c.b16 %v4436, %v4435
    %v4507 = vpack.c.b16 %v4438, %v4437
    %v4508 = vpack.c.b16 %v4440, %v4439
    %v4509 = vpack.c.b16 %v4442, %v4441
    %v4510 = vpack.c.b16 %v4444, %v4443
    %v4511 = vpack.c.b16 %v4446, %v4445
    %v4512 = vpack.c.b16 %v4448, %v4447
    %4577 = vmatprep.subr.bf16.mxu0 0
    %4578 = vmatpush1.bf16.msra.mxu0 %v4449
    %4579 = vmatprep.subr.bf16.mxu0 0
    %4580 = vmatpush1.bf16.msra.mxu0 %v4450
    %4581 = vmatprep.subr.bf16.mxu0 0
    %4582 = vmatpush1.bf16.msra.mxu0 %v4451
    %4583 = vmatprep.subr.bf16.mxu0 0
    %4584 = vmatpush1.bf16.msra.mxu0 %v4452
    %4585 = vmatprep.subr.bf16.mxu0 0
    %4586 = vmatpush1.bf16.msra.mxu0 %v4453
    %4587 = vmatprep.subr.bf16.mxu0 0
    %4588 = vmatpush1.bf16.msra.mxu0 %v4454
    %4589 = vmatprep.subr.bf16.mxu0 0
    %4590 = vmatpush1.bf16.msra.mxu0 %v4455
    %4591 = vmatprep.subr.bf16.mxu0 0
    %4592 = vmatpush1.bf16.msra.mxu0 %v4456
    %4593 = vmatprep.subr.bf16.mxu0 0
    %4594 = vmatpush1.bf16.msra.mxu0 %v4457
    %4595 = vmatprep.subr.bf16.mxu0 0
    %4596 = vmatpush1.bf16.msra.mxu0 %v4458
    %4597 = vmatprep.subr.bf16.mxu0 0
    %4598 = vmatpush1.bf16.msra.mxu0 %v4459
    %4599 = vmatprep.subr.bf16.mxu0 0
    %4600 = vmatpush1.bf16.msra.mxu0 %v4460
    %4601 = vmatprep.subr.bf16.mxu0 0
    %4602 = vmatpush1.bf16.msra.mxu0 %v4461
    %4603 = vmatprep.subr.bf16.mxu0 0
    %4604 = vmatpush1.bf16.msra.mxu0 %v4462
    %4605 = vmatprep.subr.bf16.mxu0 0
    %4606 = vmatpush1.bf16.msra.mxu0 %v4463
    %4607 = vmatprep.subr.bf16.mxu0 0
    %4608 = vmatpush1.bf16.msra.mxu0 %v4464
    %4609 = vmatprep.mubr.bf16.mxu0 %v4057
    %4610 = vmatmul.mubr.bf16.gmra.mrb[0].mxu0 %v4056
    %v4611 = vpop.f32.mrb[0].mxu0
    %v4612 = vadd.f32 %v4192, %v4611
    %v4613 = vpop.f32.mrb[0].mxu0
    %v4614 = vpop.f32.mrb[0].mxu0
    %v4615 = vpop.f32.mrb[0].mxu0
    %4616 = vdwg.mxu0
    %4617 = vmatprep.subr.bf16.mxu0 0
    %4618 = vmatpush1.bf16.msra.mxu0 %v4465
    %4619 = vmatprep.subr.bf16.mxu0 0
    %4620 = vmatpush1.bf16.msra.mxu0 %v4466
    %4621 = vmatprep.subr.bf16.mxu0 0
    %4622 = vmatpush1.bf16.msra.mxu0 %v4467
    %4623 = vmatprep.subr.bf16.mxu0 0
    %4624 = vmatpush1.bf16.msra.mxu0 %v4468
    %4625 = vmatprep.subr.bf16.mxu0 0
    %4626 = vmatpush1.bf16.msra.mxu0 %v4469
    %4627 = vmatprep.subr.bf16.mxu0 0
    %4628 = vmatpush1.bf16.msra.mxu0 %v4470
    %4629 = vmatprep.subr.bf16.mxu0 0
    %4630 = vmatpush1.bf16.msra.mxu0 %v4471
    %4631 = vmatprep.subr.bf16.mxu0 0
    %4632 = vmatpush1.bf16.msra.mxu0 %v4472
    %4633 = vmatprep.subr.bf16.mxu0 0
    %4634 = vmatpush1.bf16.msra.mxu0 %v4473
    %4635 = vmatprep.subr.bf16.mxu0 0
    %4636 = vmatpush1.bf16.msra.mxu0 %v4474
    %4637 = vmatprep.subr.bf16.mxu0 0
    %4638 = vmatpush1.bf16.msra.mxu0 %v4475
    %4639 = vmatprep.subr.bf16.mxu0 0
    %4640 = vmatpush1.bf16.msra.mxu0 %v4476
    %4641 = vmatprep.subr.bf16.mxu0 0
    %4642 = vmatpush1.bf16.msra.mxu0 %v4477
    %4643 = vmatprep.subr.bf16.mxu0 0
    %4644 = vmatpush1.bf16.msra.mxu0 %v4478
    %4645 = vmatprep.subr.bf16.mxu0 0
    %4646 = vmatpush1.bf16.msra.mxu0 %v4479
    %4647 = vmatprep.subr.bf16.mxu0 0
    %4648 = vmatpush1.bf16.msra.mxu0 %v4480
    %4649 = vmatprep.mubr.bf16.mxu0 %v4059
    %4650 = vmatmul.mubr.bf16.gmra.mrb[0].mxu0 %v4058
    %v4651 = vpop.f32.mrb[0].mxu0
    %v4652 = vadd.f32 %v4612, %v4651
    %v4653 = vpop.f32.mrb[0].mxu0
    %v4654 = vpop.f32.mrb[0].mxu0
    %v4655 = vpop.f32.mrb[0].mxu0
    %4656 = vdwg.mxu0
    %4657 = vmatprep.subr.bf16.mxu0 0
    %4658 = vmatpush1.bf16.msra.mxu0 %v4481
    %4659 = vmatprep.subr.bf16.mxu0 0
    %4660 = vmatpush1.bf16.msra.mxu0 %v4482
    %4661 = vmatprep.subr.bf16.mxu0 0
    %4662 = vmatpush1.bf16.msra.mxu0 %v4483
    %4663 = vmatprep.subr.bf16.mxu0 0
    %4664 = vmatpush1.bf16.msra.mxu0 %v4484
    %4665 = vmatprep.subr.bf16.mxu0 0
    %4666 = vmatpush1.bf16.msra.mxu0 %v4485
    %4667 = vmatprep.subr.bf16.mxu0 0
    %4668 = vmatpush1.bf16.msra.mxu0 %v4486
    %4669 = vmatprep.subr.bf16.mxu0 0
    %4670 = vmatpush1.bf16.msra.mxu0 %v4487
    %4671 = vmatprep.subr.bf16.mxu0 0
    %4672 = vmatpush1.bf16.msra.mxu0 %v4488
    %4673 = vmatprep.subr.bf16.mxu0 0
    %4674 = vmatpush1.bf16.msra.mxu0 %v4489
    %4675 = vmatprep.subr.bf16.mxu0 0
    %4676 = vmatpush1.bf16.msra.mxu0 %v4490
    %4677 = vmatprep.subr.bf16.mxu0 0
    %4678 = vmatpush1.bf16.msra.mxu0 %v4491
    %4679 = vmatprep.subr.bf16.mxu0 0
    %4680 = vmatpush1.bf16.msra.mxu0 %v4492
    %4681 = vmatprep.subr.bf16.mxu0 0
    %4682 = vmatpush1.bf16.msra.mxu0 %v4493
    %4683 = vmatprep.subr.bf16.mxu0 0
    %4684 = vmatpush1.bf16.msra.mxu0 %v4494
    %4685 = vmatprep.subr.bf16.mxu0 0
    %4686 = vmatpush1.bf16.msra.mxu0 %v4495
    %4687 = vmatprep.subr.bf16.mxu0 0
    %4688 = vmatpush1.bf16.msra.mxu0 %v4496
    %4689 = vmatprep.mubr.bf16.mxu0 %v4061
    %4690 = vmatmul.mubr.bf16.gmra.mrb[0].mxu0 %v4060
    %v4691 = vpop.f32.mrb[0].mxu0
    %v4692 = vadd.f32 %v4652, %v4691
    %v4693 = vpop.f32.mrb[0].mxu0
    %v4694 = vpop.f32.mrb[0].mxu0
    %v4695 = vpop.f32.mrb[0].mxu0
    %4696 = vdwg.mxu0
    %4697 = vmatprep.subr.bf16.mxu0 0
    %4698 = vmatpush1.bf16.msra.mxu0 %v4497
    %4699 = vmatprep.subr.bf16.mxu0 0
    %4700 = vmatpush1.bf16.msra.mxu0 %v4498
    %4701 = vmatprep.subr.bf16.mxu0 0
    %4702 = vmatpush1.bf16.msra.mxu0 %v4499
    %4703 = vmatprep.subr.bf16.mxu0 0
    %4704 = vmatpush1.bf16.msra.mxu0 %v4500
    %4705 = vmatprep.subr.bf16.mxu0 0
    %4706 = vmatpush1.bf16.msra.mxu0 %v4501
    %4707 = vmatprep.subr.bf16.mxu0 0
    %4708 = vmatpush1.bf16.msra.mxu0 %v4502
    %4709 = vmatprep.subr.bf16.mxu0 0
    %4710 = vmatpush1.bf16.msra.mxu0 %v4503
    %4711 = vmatprep.subr.bf16.mxu0 0
    %4712 = vmatpush1.bf16.msra.mxu0 %v4504
    %4713 = vmatprep.subr.bf16.mxu0 0
    %4714 = vmatpush1.bf16.msra.mxu0 %v4505
    %4715 = vmatprep.subr.bf16.mxu0 0
    %4716 = vmatpush1.bf16.msra.mxu0 %v4506
    %4717 = vmatprep.subr.bf16.mxu0 0
    %4718 = vmatpush1.bf16.msra.mxu0 %v4507
    %4719 = vmatprep.subr.bf16.mxu0 0
    %4720 = vmatpush1.bf16.msra.mxu0 %v4508
    %4721 = vmatprep.subr.bf16.mxu0 0
    %4722 = vmatpush1.bf16.msra.mxu0 %v4509
    %4723 = vmatprep.subr.bf16.mxu0 0
    %4724 = vmatpush1.bf16.msra.mxu0 %v4510
    %4725 = vmatprep.subr.bf16.mxu0 0
    %4726 = vmatpush1.bf16.msra.mxu0 %v4511
    %4727 = vmatprep.subr.bf16.mxu0 0
    %4728 = vmatpush1.bf16.msra.mxu0 %v4512
    %4729 = vmatprep.mubr.bf16.mxu0 %v4063
    %4730 = vmatmul.mubr.bf16.gmra.mrb[0].mxu0 %v4062
    %v4731 = vpop.f32.mrb[0].mxu0
    %v4732 = vadd.f32 %v4692, %v4731
    %v4733 = vpop.f32.mrb[0].mxu0
    %v4734 = vpop.f32.mrb[0].mxu0
    %v4735 = vpop.f32.mrb[0].mxu0
    %4736 = vdwg.mxu0
    %vm4737 = vcmask 1040384
    %v4738 = vsel %vm4737, %v4732, -inf
    %4739 = vmax.xlane.f32.xlu0 %v4738
    %v4740 = vpop.xlane.xlu0 %4739
    %v4741 = vsub.f32 %v4732, %v4740
    %v4742 = vmul.f32 %v4741, 1.442695
    %v4743 = vpow.pop %v4742
    %v4744 = vsel %vm4737, %v4743, 0.0
    %4745 = vadd.xlane.f32.xlu0 %v4744
    %v4746 = vpop.xlane.xlu0 %4745
    %v4747 = vrcp.pop %v4746
    %v4748 = vmul.f32 %v4743, %v4747
    %4749 = vst [vmem:[#allocation17] sm:$0x1] %v4748
    // Predicated region
    $region70: #{tpu_custom_call.1} parent=1 // pred_check
      _
    $region71: #{tpu_custom_call.1} parent=1 // pred_check_branch
      %4751 = sbr.rel (0) target = $region73
    $region72: #{tpu_custom_call.1} parent=1 // pred_region
      %s4753 = ssub.s32 16, 16
      %4754 = vsyncadd [#allocation5], %s4753
      %s4756 = sshll.u32 [#allocation17], 4
      %s4757 = int_to_ptr.vmem [resolvable:$true] %s4756
      %4759 = dma.vmem_to_hbm [thread:$0]  %s4757, 16, %s9, [#allocation5]
    $region73: #{tpu_custom_call.1} parent=1 // pred_fallthru
      _
    // Predicated region
    $region74: #{tpu_custom_call.1} parent=1 // pred_check
      _
    $region75: #{tpu_custom_call.1} parent=1 // pred_check_branch
      %4761 = sbr.rel (0) target = $region77
    $region76: #{tpu_custom_call.1} parent=1 // pred_region
      %4762 = dma.done [#allocation5], 16
    $region77: #{tpu_custom_call.1} parent=1 // pred_fallthru
      _
    %4763 = vsyncpa [#allocation4], 1
    %4764 = vsyncpa [#allocation7], 1
    %4765 = vsyncpa [#allocation10], 1
    %4766 = vsyncpa [#allocation13], 1
    %4767 = vsyncpa [#allocation16], 1
    %4768 = vsyncpa [#allocation5], 1

</llo_original>
